<compile_context>
chip_gen: v7x
topology: tpu7x:2x2x1
jax: 0.10.0
libtpu: 0.0.40
codegen_flags: <defaults>
</compile_context>

<pallas_src>
import functools

import numpy as np
import jax
import jax.numpy as jnp
from jax.experimental import pallas as pl
from jax.experimental.pallas import tpu as pltpu


# Head packing: the four head outputs live in one lane-dense (B, 128) slab at
# these lane offsets (classifier / grade / ordinal / domain).  Offsets are 32
# lanes apart, so num_classes must stay <= 28 to keep the heads disjoint; that
# assert lives in init_params, co-located with these constants.
_HEAD_DIMS = (1024, 512, 256, 256)    # first-layer widths per head
_OUT_OFFSETS = (0, 32, 64, 96)
_MAX_CLASSES = 28


def _gelu(x):
    # TODO(synk): PyTorch nn.GELU() defaults to the exact erf formulation; Mosaic
    # has no erf lowering, so the tanh approximation is used (max abs dev ~3e-3).
    return jax.nn.gelu(x, approximate=True)


def _relu(x):
    return jnp.maximum(x, 0.0)


# ---------------------------------------------------------------------------
# Fused Pallas kernel: attention + spatial-mean pooling + all four MLP heads
# ---------------------------------------------------------------------------
def _fused_forward_kernel(write_att, inv_hw,
                          x_ref, fc1w_ref, fc1b_ref, fc2w_ref, fc2b_ref,
                          ka_ref, kb_ref, convb_ref,
                          w1_ref, b1_ref, wc2_ref, bc2_ref, wg2_ref, bg2_ref,
                          wd2_ref, bd2_ref, w3_ref, b3_ref, *out_refs):
    """One batch tile: x_ref is (tb, C, HW) bf16 (channels on sublanes)."""
    x = x_ref[...].astype(jnp.float32)                     # element-wise math in f32
    tb = x.shape[0]

    # --- channel attention: Adaptive{Avg,Max}Pool2d(1) -> fc1 -> relu -> fc2 ---
    # Stacking the avg/max pools runs the (biased) MLP once; exactly equal to
    # fc2(relu(fc1(avg))) + fc2(relu(fc1(max))) since fc1/fc2 bias both branches.
    avg_c = jnp.mean(x, axis=-1)                           # (tb, C)
    max_c = jnp.max(x, axis=-1)                            # (tb, C)
    pooled = jnp.concatenate([avg_c, max_c], axis=0)       # (2tb, C)
    mid = _relu(jnp.dot(pooled, fc1w_ref[...],
                        preferred_element_type=jnp.float32) + fc1b_ref[...])
    ch = jnp.dot(mid, fc2w_ref[...],
                 preferred_element_type=jnp.float32) + fc2b_ref[...]
    ch_att = jax.nn.sigmoid(ch[:tb] + ch[tb:])             # (tb, C)
    x_ch = x * ch_att[:, :, None]                          # (tb, C, HW)

    # --- spatial attention: 7x7 conv on [mean_c, max_c] as two (HW, HW) matmuls ---
    avg_sp = jnp.mean(x_ch, axis=1)                        # (tb, HW)
    max_sp = jnp.max(x_ch, axis=1)                         # (tb, HW)
    sp_logit = (jnp.dot(avg_sp, ka_ref[...], preferred_element_type=jnp.float32)
                + jnp.dot(max_sp, kb_ref[...], preferred_element_type=jnp.float32)
                + convb_ref[0, 0])                         # scalar conv bias from SMEM
    sp_att = jax.nn.sigmoid(sp_logit)                      # (tb, HW)

    # --- h = spatial mean of (x_ch * sp_att): MXU contraction over HW (flash-style
    #     batched dot), so the attended map is never materialized on the common path.
    h = jnp.einsum('bqh,bch->bqc', sp_att[:, None, :], x_ch,
                   preferred_element_type=jnp.float32)[:, 0, :] * inv_hw   # (tb, C)

    if write_att:
        o_ref, h_ref, att_ref = out_refs
        att_ref[...] = (x_ch * sp_att[:, None, :]).astype(att_ref.dtype)   # bf16 writeback
        h_ref[...] = h
    else:
        (o_ref,) = out_refs

    # --- classifier + grade_predictor + ordinal_encoder + domain_classifier ---
    d_c, d_g, d_o, d_d = _HEAD_DIMS
    s1, s2, s3, s4 = d_c, d_c + d_g, d_c + d_g + d_o, d_c + d_g + d_o + d_d

    hb = h.astype(jnp.bfloat16)
    a1 = jnp.dot(hb, w1_ref[...], preferred_element_type=jnp.float32) + b1_ref[...]

    c1 = _gelu(a1[:, :s1])                                 # classifier layer 1
    g1 = _gelu(a1[:, s1:s2])                               # grade layer 1
    o1 = _gelu(a1[:, s2:s3])                               # ordinal layer 1
    d1 = _relu(a1[:, s3:s4])                               # domain layer 1

    c2 = _gelu(jnp.dot(c1.astype(jnp.bfloat16), wc2_ref[...],
                       preferred_element_type=jnp.float32) + bc2_ref[...])   # (tb, 512)
    g2 = _gelu(jnp.dot(g1.astype(jnp.bfloat16), wg2_ref[...],
                       preferred_element_type=jnp.float32) + bg2_ref[...])   # (tb, 256)
    d2 = _relu(jnp.dot(d1.astype(jnp.bfloat16), wd2_ref[...],
                       preferred_element_type=jnp.float32) + bd2_ref[...])   # (tb, 128)

    # Final layers as one block-diagonal matmul -> single lane-dense (tb, 128) store.
    z = jnp.concatenate([c2, g2, o1, d2], axis=1)          # (tb, 1152)
    o_ref[...] = (jnp.dot(z.astype(jnp.bfloat16), w3_ref[...],
                          preferred_element_type=jnp.float32) + b3_ref[...])


# ---------------------------------------------------------------------------
# Wrapper around pallas_call
# ---------------------------------------------------------------------------
def _fused_forward(x, params, *, get_attention):
    """x: (B, C, HW) bf16 -> (B,128) slab [, h (B,C) f32, att (B,C,HW) bf16]."""
    B, C, HW = x.shape
    fc1w, fc1b, fc2w, fc2b, ka_t, kb_t, convb = params['attn']
    heads = params['heads']
    Cmid = fc1w.shape[1]

    tb = B if B <= 8 else 8
    assert B % tb == 0, "batch must be a multiple of the batch tile"
    grid = (B // tb,)

    def resident(a):
        # Whole-array block with a constant index_map: loaded once, stays
        # VMEM-resident across the batch grid (no per-step re-DMA).
        return pl.BlockSpec(a.shape, lambda b: (0,) * a.ndim)

    in_specs = ([pl.BlockSpec((tb, C, HW), lambda b: (b, 0, 0)),          # x tile
                 resident(fc1w), resident(fc1b), resident(fc2w), resident(fc2b),
                 resident(ka_t), resident(kb_t),
                 pl.BlockSpec((1, 1), lambda b: (0, 0),
                              memory_space=pltpu.MemorySpace.SMEM)]        # conv bias
                + [resident(a) for a in heads])

    o_shape = jax.ShapeDtypeStruct((B, 128), jnp.float32)
    o_spec = pl.BlockSpec((tb, 128), lambda b: (b, 0))
    if get_attention:
        out_shape = (o_shape,
                     jax.ShapeDtypeStruct((B, C), jnp.float32),
                     jax.ShapeDtypeStruct((B, C, HW), jnp.bfloat16))
        out_specs = (o_spec,
                     pl.BlockSpec((tb, C), lambda b: (b, 0)),
                     pl.BlockSpec((tb, C, HW), lambda b: (b, 0, 0)))
    else:
        out_shape = o_shape
        out_specs = o_spec

    # VMEM budget: double-buffered tiles + resident weights + f32 temporary slack.
    weight_arrays = (fc1w, fc1b, fc2w, fc2b, ka_t, kb_t, convb) + tuple(heads)
    weight_bytes = sum(int(np.prod(a.shape)) * np.dtype(a.dtype).itemsize
                       for a in weight_arrays)
    io_block_bytes = tb * C * HW * 2 + tb * 128 * 4
    if get_attention:
        io_block_bytes += tb * C * HW * 2 + tb * C * 4
    vmem_limit = int(min(64 << 20,
                         max(2 * io_block_bytes + 2 * weight_bytes
                             + 8 * tb * C * HW * 4 + (4 << 20), 16 << 20)))

    head_mm = C * 2048 + 1024 * 512 + 512 * 256 + 256 * 128 + 1152 * 128
    cost = pl.CostEstimate(
        flops=int(8 * B * C * Cmid + 4 * B * HW * HW + 2 * B * C * HW
                  + 2 * B * head_mm + 8 * B * C * HW),
        transcendentals=int(B * (2 * C + HW + 2048 + 512 + 256 + 128)),
        bytes_accessed=int(B * C * HW * 2 + weight_bytes + B * 128 * 4
                           + ((B * C * HW * 2 + B * C * 4) if get_attention else 0)))

    kern = functools.partial(_fused_forward_kernel, get_attention, 1.0 / HW)
    return pl.pallas_call(
        kern,
        grid=grid,
        in_specs=in_specs,
        out_specs=out_specs,
        out_shape=out_shape,
        compiler_params=pltpu.CompilerParams(
            dimension_semantics=("parallel",),     # v7x: shard the batch over 2 TCs
            vmem_limit_bytes=vmem_limit),
        cost_estimate=cost,
    )(x, fc1w, fc1b, fc2w, fc2b, ka_t, kb_t, convb, *heads)


# ---------------------------------------------------------------------------
# Deterministic parameter construction (glue, plain JAX / numpy)
# ---------------------------------------------------------------------------
def _linear(key, fan_in, fan_out):
    # kaiming_normal_(mode='fan_out', nonlinearity='relu') -> std = sqrt(2 / fan_out)
    std = float(np.sqrt(2.0 / fan_out))
    w = std * jax.random.normal(key, (fan_in, fan_out), jnp.float32)
    b = jnp.zeros((1, fan_out), jnp.float32)
    return w, b


def _fold_bn(w, b, num_feats, eps=1e-5):
    # eval-mode BatchNorm1d with freshly-initialized stats/affine folded into the Linear.
    gamma = jnp.ones((num_feats,), jnp.float32)
    beta = jnp.zeros((num_feats,), jnp.float32)
    mean = jnp.zeros((num_feats,), jnp.float32)
    var = jnp.ones((num_feats,), jnp.float32)
    s = gamma / jnp.sqrt(var + eps)
    return w * s[None, :], (b - mean[None, :]) * s[None, :] + beta[None, :]


def _conv7x7_as_matrices(w, H, W):
    """Express the 2->1 channel 7x7 conv (padding=3) as two (HW, HW) matrices."""
    # TODO(synk): at production HW (>=196) replace this dense O(HW^2) form with 49
    # pltpu.roll shifted accumulations, and keep the matrices in HBM on v7x.
    HW = H * W
    Ka = np.zeros((HW, HW), np.float32)
    Kb = np.zeros((HW, HW), np.float32)
    for i in range(H):
        for j in range(W):
            for ki in range(7):
                for kj in range(7):
                    ii, jj = i + ki - 3, j + kj - 3
                    if 0 <= ii < H and 0 <= jj < W:
                        Ka[i * W + j, ii * W + jj] = w[0, ki, kj]
                        Kb[i * W + j, ii * W + jj] = w[1, ki, kj]
    return Ka, Kb


def init_params(key, feature_dim, num_classes, H, W):
    assert feature_dim % 8 == 0
    # Heads are packed 32 lanes apart at _OUT_OFFSETS; keep this assert here so a
    # future class-count change cannot silently alias head outputs.
    assert num_classes <= _MAX_CLASSES
    keys = jax.random.split(key, 17)
    C = feature_dim
    C8 = C // 8
    Cmid = ((max(C8, 128) + 127) // 128) * 128   # channel-MLP hidden padded lane-dense
    nc = num_classes
    bf16 = jnp.bfloat16

    # --- EnhancedLesionAttentionModule (kept f32: tiny, off the bandwidth path) ---
    fc1w = jnp.zeros((C, Cmid), jnp.float32).at[:, :C8].set(
        0.1 * jax.random.normal(keys[0], (C, C8), jnp.float32))
    fc1b = jnp.zeros((1, Cmid), jnp.float32).at[:, :C8].set(
        0.1 * jax.random.normal(keys[1], (1, C8), jnp.float32))
    fc2w = jnp.zeros((Cmid, C), jnp.float32).at[:C8, :].set(
        0.1 * jax.random.normal(keys[2], (C8, C), jnp.float32))
    fc2b = 0.1 * jax.random.normal(keys[3], (1, C), jnp.float32)
    w_spatial = np.asarray(0.1 * jax.random.normal(keys[4], (2, 7, 7), jnp.float32))
    conv_bias = 0.1 * jax.random.normal(keys[5], (1, 1), jnp.float32)
    ka, kb = _conv7x7_as_matrices(w_spatial, H, W)
    # sp_logit[b,:] = avg_sp[b,:] @ Ka.T + max_sp[b,:] @ Kb.T + bias
    attn = (fc1w, fc1b, fc2w, fc2b,
            jnp.asarray(ka.T, jnp.float32), jnp.asarray(kb.T, jnp.float32), conv_bias)

    # --- heads (eval-mode BN folded, Dropout = identity) ---
    wc1, bc1 = _fold_bn(*_linear(keys[6], C, 1024), 1024)
    wc2, bc2 = _fold_bn(*_linear(keys[7], 1024, 512), 512)
    wc3, bc3 = _linear(keys[8], 512, nc)

    wg1, bg1 = _fold_bn(*_linear(keys[9], C, 512), 512)
    wg2, bg2 = _fold_bn(*_linear(keys[10], 512, 256), 256)
    wg3, bg3 = _linear(keys[11], 256, nc)

    wo1, bo1 = _linear(keys[12], C, 256)
    wo2, bo2 = _linear(keys[13], 256, nc - 1)

    wd1, bd1 = _linear(keys[14], C, 256)
    wd2, bd2 = _linear(keys[15], 256, 128)
    wd3, bd3 = _linear(keys[16], 128, 5)

    # Fused first layer: (C, 1024+512+256+256) = (C, 2048), lane-dense.
    w1 = jnp.concatenate([wc1, wg1, wo1, wd1], axis=1).astype(bf16)
    b1 = jnp.concatenate([bc1, bg1, bo1, bd1], axis=1)

    # Fused final layer: block-diagonal (1152, 128), packed at _OUT_OFFSETS.
    K3 = 512 + 256 + 256 + 128
    w3 = np.zeros((K3, 128), np.float32)
    b3 = np.zeros((1, 128), np.float32)
    oc, og, oo, od = _OUT_OFFSETS
    w3[0:512, oc:oc + nc] = np.asarray(wc3);        b3[0, oc:oc + nc] = np.asarray(bc3)[0]
    w3[512:768, og:og + nc] = np.asarray(wg3);      b3[0, og:og + nc] = np.asarray(bg3)[0]
    w3[768:1024, oo:oo + nc - 1] = np.asarray(wo2); b3[0, oo:oo + nc - 1] = np.asarray(bo2)[0]
    w3[1024:1152, od:od + 5] = np.asarray(wd3);     b3[0, od:od + 5] = np.asarray(bd3)[0]

    heads = (w1, b1,
             wc2.astype(bf16), bc2,
             wg2.astype(bf16), bg2,
             wd2.astype(bf16), bd2,
             jnp.asarray(w3, bf16), jnp.asarray(b3))

    return dict(attn=attn, heads=heads, num_classes=nc)


# ---------------------------------------------------------------------------
# Full forward pass (post-backbone)
# ---------------------------------------------------------------------------
def enhanced_dr_classifier_forward(features, params, alpha=0.0, get_attention=False):
    """features: backbone feature map, PyTorch NCHW (B, feature_dim, H, W)."""
    # TODO(synk): the timm/MoCo backbone (`self.backbone.forward_features`) is
    # checkpoint-loaded and cannot be reproduced here; kernels cover everything
    # downstream of it.
    B, C, H, W = features.shape
    nc = params['num_classes']
    # Free reshape (layout stays NC,HW); bf16 halves the kernel's HBM read of x
    # (under jit the cast fuses into the producing backbone op).
    x = features.reshape(B, C, H * W).astype(jnp.bfloat16)

    if get_attention:
        out, h, att = _fused_forward(x, params, get_attention=True)
    else:
        out = _fused_forward(x, params, get_attention=False)
        h, att = None, None

    oc, og, oo, od = _OUT_OFFSETS
    logits = out[:, oc:oc + nc]
    grade_logits = out[:, og:og + nc]
    ordinal_thresholds = out[:, oo:oo + nc - 1]
    grade_outputs = (grade_logits, ordinal_thresholds)
    # GradientReversal is identity in the forward pass; the domain head is part of
    # the fused block-diagonal matmul and only surfaced when alpha > 0.
    domain_logits = out[:, od:od + 5] if alpha > 0 else None
    # TODO(synk): `update_prototypes` (in-place EMA of class prototypes) is a
    # training-time buffer side effect; omitted from this inference kernel.

    if get_attention:
        # TODO(synk): attended map returned in bf16 (halves HBM writeback); cast
        # to f32 downstream if exact dtype parity with the PyTorch module matters.
        return logits, grade_outputs, domain_logits, h, att.reshape(B, C, H, W)
    return logits, grade_outputs, domain_logits


# ---------------------------------------------------------------------------
if __name__ == "__main__":
    B, C, H, W = 2, 64, 8, 8          # feature_dim=64, 8x8 backbone feature map
    num_classes = 5

    key = jax.random.PRNGKey(0)
    k_feat, k_params = jax.random.split(key)
    features = jax.random.normal(k_feat, (B, C, H, W), jnp.float32)
    params = init_params(k_params, C, num_classes, H, W)

    # Path 1: attention map requested, domain head active.
    logits, (grade_logits, ordinal), domain_logits, h, att = \
        enhanced_dr_classifier_forward(features, params, alpha=1.0, get_attention=True)
    jax.block_until_ready((logits, grade_logits, ordinal, domain_logits, h, att))

    assert logits.shape == (B, num_classes)
    assert grade_logits.shape == (B, num_classes)
    assert ordinal.shape == (B, num_classes - 1)
    assert domain_logits.shape == (B, 5)
    assert h.shape == (B, C)
    assert att.shape == (B, C, H, W)

    # Path 2: common inference path (no attention writeback, no domain head).
    logits2, (grade2, ord2), dom2 = \
        enhanced_dr_classifier_forward(features, params, alpha=0.0, get_attention=False)
    jax.block_until_ready((logits2, grade2, ord2))
    assert logits2.shape == (B, num_classes)
    assert grade2.shape == (B, num_classes)
    assert ord2.shape == (B, num_classes - 1)
    assert dom2 is None

    print("KERNEL_OK")
</pallas_src>

<mosaic_0001>
module attributes {stable_mosaic.version = 11 : i64} {
  func.func @_fused_forward_kernel(%arg0: i32, %arg1: memref<2x64x64xbf16, #tpu.memory_space<vmem>>, %arg2: memref<64x128xf32, #tpu.memory_space<vmem>>, %arg3: memref<1x128xf32, #tpu.memory_space<vmem>>, %arg4: memref<128x64xf32, #tpu.memory_space<vmem>>, %arg5: memref<1x64xf32, #tpu.memory_space<vmem>>, %arg6: memref<64x64xf32, #tpu.memory_space<vmem>>, %arg7: memref<64x64xf32, #tpu.memory_space<vmem>>, %arg8: memref<1x1xf32, #tpu.memory_space<smem>>, %arg9: memref<64x2048xbf16, #tpu.memory_space<vmem>>, %arg10: memref<1x2048xf32, #tpu.memory_space<vmem>>, %arg11: memref<1024x512xbf16, #tpu.memory_space<vmem>>, %arg12: memref<1x512xf32, #tpu.memory_space<vmem>>, %arg13: memref<512x256xbf16, #tpu.memory_space<vmem>>, %arg14: memref<1x256xf32, #tpu.memory_space<vmem>>, %arg15: memref<256x128xbf16, #tpu.memory_space<vmem>>, %arg16: memref<1x128xf32, #tpu.memory_space<vmem>>, %arg17: memref<1152x128xbf16, #tpu.memory_space<vmem>>, %arg18: memref<1x128xf32, #tpu.memory_space<vmem>>, %arg19: memref<2x128xf32, #tpu.memory_space<vmem>>, %arg20: memref<2x64xf32, #tpu.memory_space<vmem>>, %arg21: memref<2x64x64xbf16, #tpu.memory_space<vmem>>) attributes {dimension_semantics = [#tpu.dimension_semantics<parallel>], iteration_bounds = array<i64: 1>, scalar_prefetch = 0 : i64, scratch_operands = 0 : i64, tpu.core_type = #tpu.core_type<tc>, window_params = [{transform_indices = @transform_0, window_bounds = array<i64: 2, 64, 64>}, {pipeline_mode = #tpu.pipeline_mode<synchronous>, transform_indices = @transform_1, window_bounds = array<i64: 64, 128>}, {pipeline_mode = #tpu.pipeline_mode<synchronous>, transform_indices = @transform_2, window_bounds = array<i64: 1, 128>}, {pipeline_mode = #tpu.pipeline_mode<synchronous>, transform_indices = @transform_3, window_bounds = array<i64: 128, 64>}, {pipeline_mode = #tpu.pipeline_mode<synchronous>, transform_indices = @transform_4, window_bounds = array<i64: 1, 64>}, {pipeline_mode = #tpu.pipeline_mode<synchronous>, transform_indices = @transform_5, window_bounds = array<i64: 64, 64>}, {pipeline_mode = #tpu.pipeline_mode<synchronous>, transform_indices = @transform_6, window_bounds = array<i64: 64, 64>}, {transform_indices = @transform_7, window_bounds = array<i64: 1, 1>}, {pipeline_mode = #tpu.pipeline_mode<synchronous>, transform_indices = @transform_8, window_bounds = array<i64: 64, 2048>}, {pipeline_mode = #tpu.pipeline_mode<synchronous>, transform_indices = @transform_9, window_bounds = array<i64: 1, 2048>}, {pipeline_mode = #tpu.pipeline_mode<synchronous>, transform_indices = @transform_10, window_bounds = array<i64: 1024, 512>}, {pipeline_mode = #tpu.pipeline_mode<synchronous>, transform_indices = @transform_11, window_bounds = array<i64: 1, 512>}, {pipeline_mode = #tpu.pipeline_mode<synchronous>, transform_indices = @transform_12, window_bounds = array<i64: 512, 256>}, {pipeline_mode = #tpu.pipeline_mode<synchronous>, transform_indices = @transform_13, window_bounds = array<i64: 1, 256>}, {pipeline_mode = #tpu.pipeline_mode<synchronous>, transform_indices = @transform_14, window_bounds = array<i64: 256, 128>}, {pipeline_mode = #tpu.pipeline_mode<synchronous>, transform_indices = @transform_15, window_bounds = array<i64: 1, 128>}, {pipeline_mode = #tpu.pipeline_mode<synchronous>, transform_indices = @transform_16, window_bounds = array<i64: 1152, 128>}, {pipeline_mode = #tpu.pipeline_mode<synchronous>, transform_indices = @transform_17, window_bounds = array<i64: 1, 128>}, {transform_indices = @transform_18, window_bounds = array<i64: 2, 128>}, {transform_indices = @transform_19, window_bounds = array<i64: 2, 64>}, {transform_indices = @transform_20, window_bounds = array<i64: 2, 64, 64>}]} {
    %c0 = arith.constant 0 : index
    %c0_0 = arith.constant 0 : index
    %c0_1 = arith.constant 0 : index
    %0 = vector.load %arg1[%c0, %c0_0, %c0_1] : memref<2x64x64xbf16, #tpu.memory_space<vmem>>, vector<2x64x64xbf16>
    %1 = arith.extf %0 : vector<2x64x64xbf16> to vector<2x64x64xf32>
    %cst = arith.constant dense<0.000000e+00> : vector<2x64xf32>
    %2 = vector.multi_reduction <add>, %1, %cst [2] : vector<2x64x64xf32> to vector<2x64xf32>
    %cst_2 = arith.constant 6.400000e+01 : f32
    %3 = vector.broadcast %cst_2 : f32 to vector<2x64xf32>
    %4 = arith.divf %2, %3 : vector<2x64xf32>
    %cst_3 = arith.constant dense<0xFF800000> : vector<2x64xf32>
    %5 = vector.multi_reduction <maximumf>, %1, %cst_3 [2] : vector<2x64x64xf32> to vector<2x64xf32>
    %6 = tpu.concatenate %4, %5 in 0 : vector<2x64xf32>, vector<2x64xf32> -> vector<4x64xf32>
    %c0_4 = arith.constant 0 : index
    %c0_5 = arith.constant 0 : index
    %7 = vector.load %arg2[%c0_4, %c0_5] : memref<64x128xf32, #tpu.memory_space<vmem>>, vector<64x128xf32>
    %cst_6 = arith.constant dense<0.000000e+00> : vector<4x128xf32>
    %8 = tpu.matmul %6, %7, %cst_6 {dimension_numbers = #tpu.dot_dimension_numbers<[1], [0], [0], [1], [0, 0, 1, 1], [], []>} : vector<4x64xf32>, vector<64x128xf32>, vector<4x128xf32> -> vector<4x128xf32>
    %c0_7 = arith.constant 0 : index
    %c0_8 = arith.constant 0 : index
    %9 = vector.load %arg3[%c0_7, %c0_8] : memref<1x128xf32, #tpu.memory_space<vmem>>, vector<1x128xf32>
    %10 = vector.broadcast %9 : vector<1x128xf32> to vector<4x128xf32>
    %11 = arith.addf %8, %10 : vector<4x128xf32>
    %cst_9 = arith.constant 0.000000e+00 : f32
    %12 = vector.broadcast %cst_9 : f32 to vector<4x128xf32>
    %13 = arith.maximumf %11, %12 : vector<4x128xf32>
    %c0_10 = arith.constant 0 : index
    %c0_11 = arith.constant 0 : index
    %14 = vector.load %arg4[%c0_10, %c0_11] : memref<128x64xf32, #tpu.memory_space<vmem>>, vector<128x64xf32>
    %cst_12 = arith.constant dense<0.000000e+00> : vector<4x64xf32>
    %15 = tpu.matmul %13, %14, %cst_12 {dimension_numbers = #tpu.dot_dimension_numbers<[1], [0], [0], [1], [0, 0, 1, 1], [], []>} : vector<4x128xf32>, vector<128x64xf32>, vector<4x64xf32> -> vector<4x64xf32>
    %c0_13 = arith.constant 0 : index
    %c0_14 = arith.constant 0 : index
    %16 = vector.load %arg5[%c0_13, %c0_14] : memref<1x64xf32, #tpu.memory_space<vmem>>, vector<1x64xf32>
    %17 = vector.broadcast %16 : vector<1x64xf32> to vector<4x64xf32>
    %18 = arith.addf %15, %17 : vector<4x64xf32>
    %19 = vector.extract_strided_slice %18 {offsets = [0, 0], sizes = [2, 64], strides = [1, 1]} : vector<4x64xf32> to vector<2x64xf32>
    %20 = vector.extract_strided_slice %18 {offsets = [2, 0], sizes = [2, 64], strides = [1, 1]} : vector<4x64xf32> to vector<2x64xf32>
    %21 = arith.addf %19, %20 : vector<2x64xf32>
    %22 = arith.negf %21 : vector<2x64xf32>
    %23 = math.exp %22 : vector<2x64xf32>
    %cst_15 = arith.constant 1.000000e+00 : f32
    %24 = vector.broadcast %cst_15 : f32 to vector<2x64xf32>
    %25 = arith.addf %24, %23 : vector<2x64xf32>
    %26 = arith.divf %24, %25 : vector<2x64xf32>
    %27 = vector.shape_cast %26 : vector<2x64xf32> to vector<2x64x1xf32>
    %28 = vector.broadcast %27 : vector<2x64x1xf32> to vector<2x64x64xf32>
    %29 = arith.mulf %1, %28 : vector<2x64x64xf32>
    %cst_16 = arith.constant dense<0.000000e+00> : vector<2x64xf32>
    %30 = vector.multi_reduction <add>, %29, %cst_16 [1] : vector<2x64x64xf32> to vector<2x64xf32>
    %cst_17 = arith.constant 6.400000e+01 : f32
    %31 = vector.broadcast %cst_17 : f32 to vector<2x64xf32>
    %32 = arith.divf %30, %31 : vector<2x64xf32>
    %cst_18 = arith.constant dense<0xFF800000> : vector<2x64xf32>
    %33 = vector.multi_reduction <maximumf>, %29, %cst_18 [1] : vector<2x64x64xf32> to vector<2x64xf32>
    %c0_19 = arith.constant 0 : index
    %c0_20 = arith.constant 0 : index
    %34 = vector.load %arg6[%c0_19, %c0_20] : memref<64x64xf32, #tpu.memory_space<vmem>>, vector<64x64xf32>
    %cst_21 = arith.constant dense<0.000000e+00> : vector<2x64xf32>
    %35 = tpu.matmul %32, %34, %cst_21 {dimension_numbers = #tpu.dot_dimension_numbers<[1], [0], [0], [1], [0, 0, 1, 1], [], []>} : vector<2x64xf32>, vector<64x64xf32>, vector<2x64xf32> -> vector<2x64xf32>
    %c0_22 = arith.constant 0 : index
    %c0_23 = arith.constant 0 : index
    %36 = vector.load %arg7[%c0_22, %c0_23] : memref<64x64xf32, #tpu.memory_space<vmem>>, vector<64x64xf32>
    %cst_24 = arith.constant dense<0.000000e+00> : vector<2x64xf32>
    %37 = tpu.matmul %33, %36, %cst_24 {dimension_numbers = #tpu.dot_dimension_numbers<[1], [0], [0], [1], [0, 0, 1, 1], [], []>} : vector<2x64xf32>, vector<64x64xf32>, vector<2x64xf32> -> vector<2x64xf32>
    %38 = arith.addf %35, %37 : vector<2x64xf32>
    %c0_25 = arith.constant 0 : index
    %c0_26 = arith.constant 0 : index
    %39 = memref.load %arg8[%c0_25, %c0_26] : memref<1x1xf32, #tpu.memory_space<smem>>
    %40 = vector.broadcast %39 : f32 to vector<2x64xf32>
    %41 = arith.addf %38, %40 : vector<2x64xf32>
    %42 = arith.negf %41 : vector<2x64xf32>
    %43 = math.exp %42 : vector<2x64xf32>
    %cst_27 = arith.constant 1.000000e+00 : f32
    %44 = vector.broadcast %cst_27 : f32 to vector<2x64xf32>
    %45 = arith.addf %44, %43 : vector<2x64xf32>
    %46 = arith.divf %44, %45 : vector<2x64xf32>
    %47 = vector.shape_cast %46 : vector<2x64xf32> to vector<2x1x64xf32>
    "tpu.trace_start"() <{level = 10 : i32, message = "bqh,bch->bqc"}> : () -> ()
    %cst_28 = arith.constant dense<0.000000e+00> : vector<2x1x64xf32>
    %48 = tpu.matmul %47, %29, %cst_28 {dimension_numbers = #tpu.dot_dimension_numbers<[2], [2], [1], [1], [0, 0, 0, 1, 1, 1], [0], [0]>} : vector<2x1x64xf32>, vector<2x64x64xf32>, vector<2x1x64xf32> -> vector<2x1x64xf32>
    "tpu.trace_stop"() : () -> ()
    %49 = vector.shape_cast %48 : vector<2x1x64xf32> to vector<2x64xf32>
    %cst_29 = arith.constant 1.562500e-02 : f32
    %50 = vector.broadcast %cst_29 : f32 to vector<2x64xf32>
    %51 = arith.mulf %49, %50 : vector<2x64xf32>
    %52 = vector.shape_cast %46 : vector<2x64xf32> to vector<2x1x64xf32>
    %53 = vector.broadcast %52 : vector<2x1x64xf32> to vector<2x64x64xf32>
    %54 = arith.mulf %29, %53 : vector<2x64x64xf32>
    %55 = arith.truncf %54 : vector<2x64x64xf32> to vector<2x64x64xbf16>
    %c0_30 = arith.constant 0 : index
    %c0_31 = arith.constant 0 : index
    %c0_32 = arith.constant 0 : index
    %56 = vector.load %arg21[%c0_30, %c0_31, %c0_32] : memref<2x64x64xbf16, #tpu.memory_space<vmem>>, vector<2x64x64xbf16>
    tpu.vector_store %arg21[%c0_30, %c0_31, %c0_32], %55 {strides = array<i32>} : memref<2x64x64xbf16, #tpu.memory_space<vmem>>, vector<2x64x64xbf16>,
    %c0_33 = arith.constant 0 : index
    %c0_34 = arith.constant 0 : index
    %57 = vector.load %arg20[%c0_33, %c0_34] : memref<2x64xf32, #tpu.memory_space<vmem>>, vector<2x64xf32>
    tpu.vector_store %arg20[%c0_33, %c0_34], %51 {strides = array<i32>} : memref<2x64xf32, #tpu.memory_space<vmem>>, vector<2x64xf32>,
    %58 = arith.truncf %51 : vector<2x64xf32> to vector<2x64xbf16>
    %c0_35 = arith.constant 0 : index
    %c0_36 = arith.constant 0 : index
    %59 = vector.load %arg9[%c0_35, %c0_36] : memref<64x2048xbf16, #tpu.memory_space<vmem>>, vector<64x2048xbf16>
    %cst_37 = arith.constant dense<0.000000e+00> : vector<2x2048xf32>
    %60 = tpu.matmul %58, %59, %cst_37 {dimension_numbers = #tpu.dot_dimension_numbers<[1], [0], [0], [1], [0, 0, 1, 1], [], []>} : vector<2x64xbf16>, vector<64x2048xbf16>, vector<2x2048xf32> -> vector<2x2048xf32>
    %c0_38 = arith.constant 0 : index
    %c0_39 = arith.constant 0 : index
    %61 = vector.load %arg10[%c0_38, %c0_39] : memref<1x2048xf32, #tpu.memory_space<vmem>>, vector<1x2048xf32>
    %62 = vector.broadcast %61 : vector<1x2048xf32> to vector<2x2048xf32>
    %63 = arith.addf %60, %62 : vector<2x2048xf32>
    %64 = vector.extract_strided_slice %63 {offsets = [0, 0], sizes = [2, 1024], strides = [1, 1]} : vector<2x2048xf32> to vector<2x1024xf32>
    %65 = arith.mulf %64, %64 : vector<2x1024xf32>
    %66 = arith.mulf %64, %65 : vector<2x1024xf32>
    %cst_40 = arith.constant 4.471500e-02 : f32
    %67 = vector.broadcast %cst_40 : f32 to vector<2x1024xf32>
    %68 = arith.mulf %67, %66 : vector<2x1024xf32>
    %69 = arith.addf %64, %68 : vector<2x1024xf32>
    %cst_41 = arith.constant 0.797884583 : f32
    %70 = vector.broadcast %cst_41 : f32 to vector<2x1024xf32>
    %71 = arith.mulf %70, %69 : vector<2x1024xf32>
    %72 = math.tanh %71 : vector<2x1024xf32>
    %cst_42 = arith.constant 1.000000e+00 : f32
    %73 = vector.broadcast %cst_42 : f32 to vector<2x1024xf32>
    %74 = arith.addf %73, %72 : vector<2x1024xf32>
    %cst_43 = arith.constant 5.000000e-01 : f32
    %75 = vector.broadcast %cst_43 : f32 to vector<2x1024xf32>
    %76 = arith.mulf %75, %74 : vector<2x1024xf32>
    %77 = arith.mulf %64, %76 : vector<2x1024xf32>
    %78 = vector.extract_strided_slice %63 {offsets = [0, 1024], sizes = [2, 512], strides = [1, 1]} : vector<2x2048xf32> to vector<2x512xf32>
    %79 = arith.mulf %78, %78 : vector<2x512xf32>
    %80 = arith.mulf %78, %79 : vector<2x512xf32>
    %cst_44 = arith.constant 4.471500e-02 : f32
    %81 = vector.broadcast %cst_44 : f32 to vector<2x512xf32>
    %82 = arith.mulf %81, %80 : vector<2x512xf32>
    %83 = arith.addf %78, %82 : vector<2x512xf32>
    %cst_45 = arith.constant 0.797884583 : f32
    %84 = vector.broadcast %cst_45 : f32 to vector<2x512xf32>
    %85 = arith.mulf %84, %83 : vector<2x512xf32>
    %86 = math.tanh %85 : vector<2x512xf32>
    %cst_46 = arith.constant 1.000000e+00 : f32
    %87 = vector.broadcast %cst_46 : f32 to vector<2x512xf32>
    %88 = arith.addf %87, %86 : vector<2x512xf32>
    %cst_47 = arith.constant 5.000000e-01 : f32
    %89 = vector.broadcast %cst_47 : f32 to vector<2x512xf32>
    %90 = arith.mulf %89, %88 : vector<2x512xf32>
    %91 = arith.mulf %78, %90 : vector<2x512xf32>
    %92 = vector.extract_strided_slice %63 {offsets = [0, 1536], sizes = [2, 256], strides = [1, 1]} : vector<2x2048xf32> to vector<2x256xf32>
    %93 = arith.mulf %92, %92 : vector<2x256xf32>
    %94 = arith.mulf %92, %93 : vector<2x256xf32>
    %cst_48 = arith.constant 4.471500e-02 : f32
    %95 = vector.broadcast %cst_48 : f32 to vector<2x256xf32>
    %96 = arith.mulf %95, %94 : vector<2x256xf32>
    %97 = arith.addf %92, %96 : vector<2x256xf32>
    %cst_49 = arith.constant 0.797884583 : f32
    %98 = vector.broadcast %cst_49 : f32 to vector<2x256xf32>
    %99 = arith.mulf %98, %97 : vector<2x256xf32>
    %100 = math.tanh %99 : vector<2x256xf32>
    %cst_50 = arith.constant 1.000000e+00 : f32
    %101 = vector.broadcast %cst_50 : f32 to vector<2x256xf32>
    %102 = arith.addf %101, %100 : vector<2x256xf32>
    %cst_51 = arith.constant 5.000000e-01 : f32
    %103 = vector.broadcast %cst_51 : f32 to vector<2x256xf32>
    %104 = arith.mulf %103, %102 : vector<2x256xf32>
    %105 = arith.mulf %92, %104 : vector<2x256xf32>
    %106 = vector.extract_strided_slice %63 {offsets = [0, 1792], sizes = [2, 256], strides = [1, 1]} : vector<2x2048xf32> to vector<2x256xf32>
    %cst_52 = arith.constant 0.000000e+00 : f32
    %107 = vector.broadcast %cst_52 : f32 to vector<2x256xf32>
    %108 = arith.maximumf %106, %107 : vector<2x256xf32>
    %109 = arith.truncf %77 : vector<2x1024xf32> to vector<2x1024xbf16>
    %c0_53 = arith.constant 0 : index
    %c0_54 = arith.constant 0 : index
    %110 = vector.load %arg11[%c0_53, %c0_54] : memref<1024x512xbf16, #tpu.memory_space<vmem>>, vector<1024x512xbf16>
    %cst_55 = arith.constant dense<0.000000e+00> : vector<2x512xf32>
    %111 = tpu.matmul %109, %110, %cst_55 {dimension_numbers = #tpu.dot_dimension_numbers<[1], [0], [0], [1], [0, 0, 1, 1], [], []>} : vector<2x1024xbf16>, vector<1024x512xbf16>, vector<2x512xf32> -> vector<2x512xf32>
    %c0_56 = arith.constant 0 : index
    %c0_57 = arith.constant 0 : index
    %112 = vector.load %arg12[%c0_56, %c0_57] : memref<1x512xf32, #tpu.memory_space<vmem>>, vector<1x512xf32>
    %113 = vector.broadcast %112 : vector<1x512xf32> to vector<2x512xf32>
    %114 = arith.addf %111, %113 : vector<2x512xf32>
    %115 = arith.mulf %114, %114 : vector<2x512xf32>
    %116 = arith.mulf %114, %115 : vector<2x512xf32>
    %cst_58 = arith.constant 4.471500e-02 : f32
    %117 = vector.broadcast %cst_58 : f32 to vector<2x512xf32>
    %118 = arith.mulf %117, %116 : vector<2x512xf32>
    %119 = arith.addf %114, %118 : vector<2x512xf32>
    %cst_59 = arith.constant 0.797884583 : f32
    %120 = vector.broadcast %cst_59 : f32 to vector<2x512xf32>
    %121 = arith.mulf %120, %119 : vector<2x512xf32>
    %122 = math.tanh %121 : vector<2x512xf32>
    %cst_60 = arith.constant 1.000000e+00 : f32
    %123 = vector.broadcast %cst_60 : f32 to vector<2x512xf32>
    %124 = arith.addf %123, %122 : vector<2x512xf32>
    %cst_61 = arith.constant 5.000000e-01 : f32
    %125 = vector.broadcast %cst_61 : f32 to vector<2x512xf32>
    %126 = arith.mulf %125, %124 : vector<2x512xf32>
    %127 = arith.mulf %114, %126 : vector<2x512xf32>
    %128 = arith.truncf %91 : vector<2x512xf32> to vector<2x512xbf16>
    %c0_62 = arith.constant 0 : index
    %c0_63 = arith.constant 0 : index
    %129 = vector.load %arg13[%c0_62, %c0_63] : memref<512x256xbf16, #tpu.memory_space<vmem>>, vector<512x256xbf16>
    %cst_64 = arith.constant dense<0.000000e+00> : vector<2x256xf32>
    %130 = tpu.matmul %128, %129, %cst_64 {dimension_numbers = #tpu.dot_dimension_numbers<[1], [0], [0], [1], [0, 0, 1, 1], [], []>} : vector<2x512xbf16>, vector<512x256xbf16>, vector<2x256xf32> -> vector<2x256xf32>
    %c0_65 = arith.constant 0 : index
    %c0_66 = arith.constant 0 : index
    %131 = vector.load %arg14[%c0_65, %c0_66] : memref<1x256xf32, #tpu.memory_space<vmem>>, vector<1x256xf32>
    %132 = vector.broadcast %131 : vector<1x256xf32> to vector<2x256xf32>
    %133 = arith.addf %130, %132 : vector<2x256xf32>
    %134 = arith.mulf %133, %133 : vector<2x256xf32>
    %135 = arith.mulf %133, %134 : vector<2x256xf32>
    %cst_67 = arith.constant 4.471500e-02 : f32
    %136 = vector.broadcast %cst_67 : f32 to vector<2x256xf32>
    %137 = arith.mulf %136, %135 : vector<2x256xf32>
    %138 = arith.addf %133, %137 : vector<2x256xf32>
    %cst_68 = arith.constant 0.797884583 : f32
    %139 = vector.broadcast %cst_68 : f32 to vector<2x256xf32>
    %140 = arith.mulf %139, %138 : vector<2x256xf32>
    %141 = math.tanh %140 : vector<2x256xf32>
    %cst_69 = arith.constant 1.000000e+00 : f32
    %142 = vector.broadcast %cst_69 : f32 to vector<2x256xf32>
    %143 = arith.addf %142, %141 : vector<2x256xf32>
    %cst_70 = arith.constant 5.000000e-01 : f32
    %144 = vector.broadcast %cst_70 : f32 to vector<2x256xf32>
    %145 = arith.mulf %144, %143 : vector<2x256xf32>
    %146 = arith.mulf %133, %145 : vector<2x256xf32>
    %147 = arith.truncf %108 : vector<2x256xf32> to vector<2x256xbf16>
    %c0_71 = arith.constant 0 : index
    %c0_72 = arith.constant 0 : index
    %148 = vector.load %arg15[%c0_71, %c0_72] : memref<256x128xbf16, #tpu.memory_space<vmem>>, vector<256x128xbf16>
    %cst_73 = arith.constant dense<0.000000e+00> : vector<2x128xf32>
    %149 = tpu.matmul %147, %148, %cst_73 {dimension_numbers = #tpu.dot_dimension_numbers<[1], [0], [0], [1], [0, 0, 1, 1], [], []>} : vector<2x256xbf16>, vector<256x128xbf16>, vector<2x128xf32> -> vector<2x128xf32>
    %c0_74 = arith.constant 0 : index
    %c0_75 = arith.constant 0 : index
    %150 = vector.load %arg16[%c0_74, %c0_75] : memref<1x128xf32, #tpu.memory_space<vmem>>, vector<1x128xf32>
    %151 = vector.broadcast %150 : vector<1x128xf32> to vector<2x128xf32>
    %152 = arith.addf %149, %151 : vector<2x128xf32>
    %cst_76 = arith.constant 0.000000e+00 : f32
    %153 = vector.broadcast %cst_76 : f32 to vector<2x128xf32>
    %154 = arith.maximumf %152, %153 : vector<2x128xf32>
    %155 = tpu.concatenate %127, %146, %105, %154 in 1 : vector<2x512xf32>, vector<2x256xf32>, vector<2x256xf32>, vector<2x128xf32> -> vector<2x1152xf32>
    %156 = arith.truncf %155 : vector<2x1152xf32> to vector<2x1152xbf16>
    %c0_77 = arith.constant 0 : index
    %c0_78 = arith.constant 0 : index
    %157 = vector.load %arg17[%c0_77, %c0_78] : memref<1152x128xbf16, #tpu.memory_space<vmem>>, vector<1152x128xbf16>
    %cst_79 = arith.constant dense<0.000000e+00> : vector<2x128xf32>
    %158 = tpu.matmul %156, %157, %cst_79 {dimension_numbers = #tpu.dot_dimension_numbers<[1], [0], [0], [1], [0, 0, 1, 1], [], []>} : vector<2x1152xbf16>, vector<1152x128xbf16>, vector<2x128xf32> -> vector<2x128xf32>
    %c0_80 = arith.constant 0 : index
    %c0_81 = arith.constant 0 : index
    %159 = vector.load %arg18[%c0_80, %c0_81] : memref<1x128xf32, #tpu.memory_space<vmem>>, vector<1x128xf32>
    %160 = vector.broadcast %159 : vector<1x128xf32> to vector<2x128xf32>
    %161 = arith.addf %158, %160 : vector<2x128xf32>
    %c0_82 = arith.constant 0 : index
    %c0_83 = arith.constant 0 : index
    %162 = vector.load %arg19[%c0_82, %c0_83] : memref<2x128xf32, #tpu.memory_space<vmem>>, vector<2x128xf32>
    tpu.vector_store %arg19[%c0_82, %c0_83], %161 {strides = array<i32>} : memref<2x128xf32, #tpu.memory_space<vmem>>, vector<2x128xf32>,
    return
  }
  func.func @transform_0(%arg0: i32) -> (i32, i32, i32) {
    %c0_i32 = arith.constant 0 : i32
    %c0_i32_0 = arith.constant 0 : i32
    %c0_i32_1 = arith.constant 0 : i32
    return %arg0, %c0_i32, %c0_i32_0 : i32, i32, i32
  }
  func.func @transform_1(%arg0: i32) -> (i32, i32) {
    %c0_i32 = arith.constant 0 : i32
    %c0_i32_0 = arith.constant 0 : i32
    %c0_i32_1 = arith.constant 0 : i32
    return %c0_i32, %c0_i32_0 : i32, i32
  }
  func.func @transform_2(%arg0: i32) -> (i32, i32) {
    %c0_i32 = arith.constant 0 : i32
    %c0_i32_0 = arith.constant 0 : i32
    %c0_i32_1 = arith.constant 0 : i32
    return %c0_i32, %c0_i32_0 : i32, i32
  }
  func.func @transform_3(%arg0: i32) -> (i32, i32) {
    %c0_i32 = arith.constant 0 : i32
    %c0_i32_0 = arith.constant 0 : i32
    %c0_i32_1 = arith.constant 0 : i32
    return %c0_i32, %c0_i32_0 : i32, i32
  }
  func.func @transform_4(%arg0: i32) -> (i32, i32) {
    %c0_i32 = arith.constant 0 : i32
    %c0_i32_0 = arith.constant 0 : i32
    %c0_i32_1 = arith.constant 0 : i32
    return %c0_i32, %c0_i32_0 : i32, i32
  }
  func.func @transform_5(%arg0: i32) -> (i32, i32) {
    %c0_i32 = arith.constant 0 : i32
    %c0_i32_0 = arith.constant 0 : i32
    %c0_i32_1 = arith.constant 0 : i32
    return %c0_i32, %c0_i32_0 : i32, i32
  }
  func.func @transform_6(%arg0: i32) -> (i32, i32) {
    %c0_i32 = arith.constant 0 : i32
    %c0_i32_0 = arith.constant 0 : i32
    %c0_i32_1 = arith.constant 0 : i32
    return %c0_i32, %c0_i32_0 : i32, i32
  }
  func.func @transform_7(%arg0: i32) -> (i32, i32) {
    %c0_i32 = arith.constant 0 : i32
    %c0_i32_0 = arith.constant 0 : i32
    %c0_i32_1 = arith.constant 0 : i32
    return %c0_i32, %c0_i32_0 : i32, i32
  }
  func.func @transform_8(%arg0: i32) -> (i32, i32) {
    %c0_i32 = arith.constant 0 : i32
    %c0_i32_0 = arith.constant 0 : i32
    %c0_i32_1 = arith.constant 0 : i32
    return %c0_i32, %c0_i32_0 : i32, i32
  }
  func.func @transform_9(%arg0: i32) -> (i32, i32) {
    %c0_i32 = arith.constant 0 : i32
    %c0_i32_0 = arith.constant 0 : i32
    %c0_i32_1 = arith.constant 0 : i32
    return %c0_i32, %c0_i32_0 : i32, i32
  }
  func.func @transform_10(%arg0: i32) -> (i32, i32) {
    %c0_i32 = arith.constant 0 : i32
    %c0_i32_0 = arith.constant 0 : i32
    %c0_i32_1 = arith.constant 0 : i32
    return %c0_i32, %c0_i32_0 : i32, i32
  }
  func.func @transform_11(%arg0: i32) -> (i32, i32) {
    %c0_i32 = arith.constant 0 : i32
    %c0_i32_0 = arith.constant 0 : i32
    %c0_i32_1 = arith.constant 0 : i32
    return %c0_i32, %c0_i32_0 : i32, i32
  }
  func.func @transform_12(%arg0: i32) -> (i32, i32) {
    %c0_i32 = arith.constant 0 : i32
    %c0_i32_0 = arith.constant 0 : i32
    %c0_i32_1 = arith.constant 0 : i32
    return %c0_i32, %c0_i32_0 : i32, i32
  }
  func.func @transform_13(%arg0: i32) -> (i32, i32) {
    %c0_i32 = arith.constant 0 : i32
    %c0_i32_0 = arith.constant 0 : i32
    %c0_i32_1 = arith.constant 0 : i32
    return %c0_i32, %c0_i32_0 : i32, i32
  }
  func.func @transform_14(%arg0: i32) -> (i32, i32) {
    %c0_i32 = arith.constant 0 : i32
    %c0_i32_0 = arith.constant 0 : i32
    %c0_i32_1 = arith.constant 0 : i32
    return %c0_i32, %c0_i32_0 : i32, i32
  }
  func.func @transform_15(%arg0: i32) -> (i32, i32) {
    %c0_i32 = arith.constant 0 : i32
    %c0_i32_0 = arith.constant 0 : i32
    %c0_i32_1 = arith.constant 0 : i32
    return %c0_i32, %c0_i32_0 : i32, i32
  }
  func.func @transform_16(%arg0: i32) -> (i32, i32) {
    %c0_i32 = arith.constant 0 : i32
    %c0_i32_0 = arith.constant 0 : i32
    %c0_i32_1 = arith.constant 0 : i32
    return %c0_i32, %c0_i32_0 : i32, i32
  }
  func.func @transform_17(%arg0: i32) -> (i32, i32) {
    %c0_i32 = arith.constant 0 : i32
    %c0_i32_0 = arith.constant 0 : i32
    %c0_i32_1 = arith.constant 0 : i32
    return %c0_i32, %c0_i32_0 : i32, i32
  }
  func.func @transform_18(%arg0: i32) -> (i32, i32) {
    %c0_i32 = arith.constant 0 : i32
    %c0_i32_0 = arith.constant 0 : i32
    return %arg0, %c0_i32 : i32, i32
  }
  func.func @transform_19(%arg0: i32) -> (i32, i32) {
    %c0_i32 = arith.constant 0 : i32
    %c0_i32_0 = arith.constant 0 : i32
    return %arg0, %c0_i32 : i32, i32
  }
  func.func @transform_20(%arg0: i32) -> (i32, i32, i32) {
    %c0_i32 = arith.constant 0 : i32
    %c0_i32_0 = arith.constant 0 : i32
    %c0_i32_1 = arith.constant 0 : i32
    return %arg0, %c0_i32, %c0_i32_0 : i32, i32, i32
  }
}

</mosaic_0001>

<llo_original>
// kernel: tpu_custom_call.1
$region0: #{tpu_custom_call.1}
  #allocation0 [shape = 'u32[]', space=smem, size = 0x4, offset = 0x4, fixed_abs, tag = 'smem constant byte address 0x4 - core index']
  #allocation1 [shape = 'u32[144,128]{1,0:T(1,128)}', space=vmem, size = 0x12000, scoped, tag = 'internal scratch']
  #allocation2 [shape = 'f32[1,1]{1,0:T(1,128)S(6)}', space=smem, size = 0x200, scoped, tag = 'scoped memory for tpu_custom_call.1']
  %s0 = inlined_call_operand.vmem [shape: bf16[2,64,64], index: 0, kind: input, shape index: {}]
  %s1 = inlined_call_operand.hbm [shape: f32[64,128], index: 1, kind: input, shape index: {}]
  %s2 = inlined_call_operand.vmem [shape: f32[1,128], index: 2, kind: input, shape index: {}]
  %s3 = inlined_call_operand.vmem [shape: f32[128,64], index: 3, kind: input, shape index: {}]
  %s4 = inlined_call_operand.vmem [shape: f32[1,64], index: 4, kind: input, shape index: {}]
  %s5 = inlined_call_operand.hbm [shape: f32[64,64], index: 5, kind: input, shape index: {}]
  %s6 = inlined_call_operand.hbm [shape: f32[64,64], index: 6, kind: input, shape index: {}]
  %s7 = inlined_call_operand.<no memory space> [shape: f32[1,1], index: 7, kind: input, shape index: {}]
  %s8 = inlined_call_operand.hbm [shape: bf16[64,2048], index: 8, kind: input, shape index: {}]
  %s9 = inlined_call_operand.vmem [shape: f32[1,2048], index: 9, kind: input, shape index: {}]
  %s10 = inlined_call_operand.hbm [shape: bf16[1024,512], index: 10, kind: input, shape index: {}]
  %s11 = inlined_call_operand.vmem [shape: f32[1,512], index: 11, kind: input, shape index: {}]
  %s12 = inlined_call_operand.hbm [shape: bf16[512,256], index: 12, kind: input, shape index: {}]
  %s13 = inlined_call_operand.vmem [shape: f32[1,256], index: 13, kind: input, shape index: {}]
  %s14 = inlined_call_operand.vmem [shape: bf16[256,128], index: 14, kind: input, shape index: {}]
  %s15 = inlined_call_operand.vmem [shape: f32[1,128], index: 15, kind: input, shape index: {}]
  %s16 = inlined_call_operand.hbm [shape: bf16[1152,128], index: 16, kind: input, shape index: {}]
  %s17 = inlined_call_operand.vmem [shape: f32[1,128], index: 17, kind: input, shape index: {}]
  %s18 = inlined_call_operand.hbm [shape: f32[2,128], index: 18, kind: output, shape index: {0}]
  %s19 = inlined_call_operand.hbm [shape: f32[2,64], index: 19, kind: output, shape index: {1}]
  %s20 = inlined_call_operand.hbm [shape: bf16[2,64,64], index: 20, kind: output, shape index: {2}]
  %21 = xla_tuple %s18, %s19, %s20
  %s22 = sld [smem:[#allocation0]]
  $region126: #{tpu_custom_call.1} parent=0
    _
  %s24 = ssub.s32 1, %s22
  %s25 = scalar_select 0, %s24, %s22
  %26 = sst [smem:[#allocation2]] %s7
  $region1: #{tpu_custom_call.1} parent=0
    #allocation3 [shape = 'u8[32768]{0}', space=vmem, size = 0x8000, scoped, tag = 'input window, operand 1, single buffered']
    #allocation4 [shape = 's32[1]{0}', space=sflag, size = 0x4, scoped, tag = 'scoped memory for tpu_custom_call.1']
    #allocation5 [shape = 's32[1]{0}', space=sflag, size = 0x4, scoped, tag = 'scoped memory for tpu_custom_call.1']
    #allocation6 [shape = 'u8[32768]{0}', space=vmem, size = 0x8000, scoped, tag = 'input window, operand 5, single buffered']
    #allocation7 [shape = 's32[1]{0}', space=sflag, size = 0x4, scoped, tag = 'scoped memory for tpu_custom_call.1']
    #allocation8 [shape = 'u8[32768]{0}', space=vmem, size = 0x8000, scoped, tag = 'input window, operand 6, single buffered']
    #allocation9 [shape = 'u8[262144]{0}', space=vmem, size = 0x40000, scoped, tag = 'input window, operand 8, single buffered']
    #allocation10 [shape = 's32[1]{0}', space=sflag, size = 0x4, scoped, tag = 'scoped memory for tpu_custom_call.1']
    #allocation11 [shape = 'u8[1048576]{0}', space=vmem, size = 0x100000, scoped, tag = 'input window, operand 10, single buffered']
    #allocation12 [shape = 'u8[262144]{0}', space=vmem, size = 0x40000, scoped, tag = 'input window, operand 12, single buffered']
    #allocation13 [shape = 's32[1]{0}', space=sflag, size = 0x4, scoped, tag = 'scoped memory for tpu_custom_call.1']
    #allocation14 [shape = 'u8[294912]{0}', space=vmem, size = 0x48000, scoped, tag = 'input window, operand 16, single buffered']
    #allocation15 [shape = 'u8[1024]{0}', space=vmem, size = 0x400, scoped, tag = 'output window, operand 0, single buffered']
    #allocation16 [shape = 'u8[1024]{0}', space=vmem, size = 0x400, scoped, tag = 'output window, operand 1, single buffered']
    #allocation17 [shape = 's32[1]{0}', space=sflag, size = 0x4, scoped, tag = 'scoped memory for tpu_custom_call.1']
    #allocation18 [shape = 'u8[32768]{0}', space=vmem, size = 0x8000, scoped, tag = 'output window, operand 2, single buffered']
    %27 = vsyncpa [#allocation4], 0
    %28 = vsyncpa [#allocation7], 0
    %29 = vsyncpa [#allocation10], 0
    %30 = vsyncpa [#allocation13], 0
    %31 = vsyncpa [#allocation5], 0
    %32 = vsyncpa [#allocation17], 0
    // Predicated region
    $region2: #{tpu_custom_call.1} parent=1 // pred_check
      _
    $region3: #{tpu_custom_call.1} parent=1 // pred_check_branch
      %34 = sbr.rel (0) target = $region5
    $region4: #{tpu_custom_call.1} parent=1 // pred_region
      _
    $region5: #{tpu_custom_call.1} parent=1 // pred_fallthru
      _
    // Predicated region
    $region6: #{tpu_custom_call.1} parent=1 // pred_check
      _
    $region7: #{tpu_custom_call.1} parent=1 // pred_check_branch
      %36 = sbr.rel (0) target = $region9
    $region8: #{tpu_custom_call.1} parent=1 // pred_region
      %s38 = ssub.s32 1024, 1024
      %39 = vsyncadd [#allocation4], %s38
      %s40 = sshll.u32 [#allocation3], 4
      %s41 = int_to_ptr.vmem [resolvable:$true] %s40
      %46 = dma.hbm_to_vmem [thread:$0]  %s1, 1024, %s41, [#allocation4], 128, 128, 8
    $region9: #{tpu_custom_call.1} parent=1 // pred_fallthru
      _
    // Predicated region
    $region10: #{tpu_custom_call.1} parent=1 // pred_check
      _
    $region11: #{tpu_custom_call.1} parent=1 // pred_check_branch
      %48 = sbr.rel (0) target = $region13
    $region12: #{tpu_custom_call.1} parent=1 // pred_region
      _
    $region13: #{tpu_custom_call.1} parent=1 // pred_fallthru
      _
    // Predicated region
    $region14: #{tpu_custom_call.1} parent=1 // pred_check
      _
    $region15: #{tpu_custom_call.1} parent=1 // pred_check_branch
      %50 = sbr.rel (0) target = $region17
    $region16: #{tpu_custom_call.1} parent=1 // pred_region
      _
    $region17: #{tpu_custom_call.1} parent=1 // pred_fallthru
      _
    // Predicated region
    $region18: #{tpu_custom_call.1} parent=1 // pred_check
      _
    $region19: #{tpu_custom_call.1} parent=1 // pred_check_branch
      %52 = sbr.rel (0) target = $region21
    $region20: #{tpu_custom_call.1} parent=1 // pred_region
      _
    $region21: #{tpu_custom_call.1} parent=1 // pred_fallthru
      _
    // Predicated region
    $region22: #{tpu_custom_call.1} parent=1 // pred_check
      _
    $region23: #{tpu_custom_call.1} parent=1 // pred_check_branch
      %54 = sbr.rel (0) target = $region25
    $region24: #{tpu_custom_call.1} parent=1 // pred_region
      %s56 = ssub.s32 1024, 1024
      %57 = vsyncadd [#allocation7], %s56
      %s58 = sshll.u32 [#allocation6], 4
      %s59 = int_to_ptr.vmem [resolvable:$true] %s58
      %64 = dma.hbm_to_vmem [thread:$0]  %s5, 1024, %s59, [#allocation7], 128, 128, 8
    $region25: #{tpu_custom_call.1} parent=1 // pred_fallthru
      _
    // Predicated region
    $region26: #{tpu_custom_call.1} parent=1 // pred_check
      _
    $region27: #{tpu_custom_call.1} parent=1 // pred_check_branch
      %66 = sbr.rel (0) target = $region29
    $region28: #{tpu_custom_call.1} parent=1 // pred_region
      %s68 = ssub.s32 1024, 1024
      %69 = vsyncadd [#allocation7], %s68
      %s70 = sshll.u32 [#allocation8], 4
      %s71 = int_to_ptr.vmem [resolvable:$true] %s70
      %76 = dma.hbm_to_vmem [thread:$0]  %s6, 1024, %s71, [#allocation7], 128, 128, 8
    $region29: #{tpu_custom_call.1} parent=1 // pred_fallthru
      _
    // Predicated region
    $region30: #{tpu_custom_call.1} parent=1 // pred_check
      _
    $region31: #{tpu_custom_call.1} parent=1 // pred_check_branch
      %78 = sbr.rel (0) target = $region33
    $region32: #{tpu_custom_call.1} parent=1 // pred_region
      _
    $region33: #{tpu_custom_call.1} parent=1 // pred_fallthru
      _
    // Predicated region
    $region34: #{tpu_custom_call.1} parent=1 // pred_check
      _
    $region35: #{tpu_custom_call.1} parent=1 // pred_check_branch
      %80 = sbr.rel (0) target = $region37
    $region36: #{tpu_custom_call.1} parent=1 // pred_region
      %s82 = ssub.s32 8192, 8192
      %83 = vsyncadd [#allocation10], %s82
      %s84 = sshll.u32 [#allocation9], 4
      %s85 = int_to_ptr.vmem [resolvable:$true] %s84
      %90 = dma.hbm_to_vmem [thread:$0]  %s8, 8192, %s85, [#allocation10], 1024, 1024, 64
    $region37: #{tpu_custom_call.1} parent=1 // pred_fallthru
      _
    // Predicated region
    $region38: #{tpu_custom_call.1} parent=1 // pred_check
      _
    $region39: #{tpu_custom_call.1} parent=1 // pred_check_branch
      %92 = sbr.rel (0) target = $region41
    $region40: #{tpu_custom_call.1} parent=1 // pred_region
      _
    $region41: #{tpu_custom_call.1} parent=1 // pred_fallthru
      _
    // Predicated region
    $region42: #{tpu_custom_call.1} parent=1 // pred_check
      _
    $region43: #{tpu_custom_call.1} parent=1 // pred_check_branch
      %94 = sbr.rel (0) target = $region45
    $region44: #{tpu_custom_call.1} parent=1 // pred_region
      %s96 = ssub.s32 32768, 32768
      %97 = vsyncadd [#allocation10], %s96
      %s98 = sshll.u32 [#allocation11], 4
      %s99 = int_to_ptr.vmem [resolvable:$true] %s98
      %104 = dma.hbm_to_vmem [thread:$0]  %s10, 32768, %s99, [#allocation10], 256, 256, 16
    $region45: #{tpu_custom_call.1} parent=1 // pred_fallthru
      _
    // Predicated region
    $region46: #{tpu_custom_call.1} parent=1 // pred_check
      _
    $region47: #{tpu_custom_call.1} parent=1 // pred_check_branch
      %106 = sbr.rel (0) target = $region49
    $region48: #{tpu_custom_call.1} parent=1 // pred_region
      _
    $region49: #{tpu_custom_call.1} parent=1 // pred_fallthru
      _
    // Predicated region
    $region50: #{tpu_custom_call.1} parent=1 // pred_check
      _
    $region51: #{tpu_custom_call.1} parent=1 // pred_check_branch
      %108 = sbr.rel (0) target = $region53
    $region52: #{tpu_custom_call.1} parent=1 // pred_region
      %s110 = ssub.s32 8192, 8192
      %111 = vsyncadd [#allocation13], %s110
      %s112 = sshll.u32 [#allocation12], 4
      %s113 = int_to_ptr.vmem [resolvable:$true] %s112
      %118 = dma.hbm_to_vmem [thread:$0]  %s12, 8192, %s113, [#allocation13], 128, 128, 8
    $region53: #{tpu_custom_call.1} parent=1 // pred_fallthru
      _
    // Predicated region
    $region54: #{tpu_custom_call.1} parent=1 // pred_check
      _
    $region55: #{tpu_custom_call.1} parent=1 // pred_check_branch
      %120 = sbr.rel (0) target = $region57
    $region56: #{tpu_custom_call.1} parent=1 // pred_region
      _
    $region57: #{tpu_custom_call.1} parent=1 // pred_fallthru
      _
    // Predicated region
    $region58: #{tpu_custom_call.1} parent=1 // pred_check
      _
    $region59: #{tpu_custom_call.1} parent=1 // pred_check_branch
      %122 = sbr.rel (0) target = $region61
    $region60: #{tpu_custom_call.1} parent=1 // pred_region
      _
    $region61: #{tpu_custom_call.1} parent=1 // pred_fallthru
      _
    // Predicated region
    $region62: #{tpu_custom_call.1} parent=1 // pred_check
      _
    $region63: #{tpu_custom_call.1} parent=1 // pred_check_branch
      %124 = sbr.rel (0) target = $region65
    $region64: #{tpu_custom_call.1} parent=1 // pred_region
      _
    $region65: #{tpu_custom_call.1} parent=1 // pred_fallthru
      _
    // Predicated region
    $region66: #{tpu_custom_call.1} parent=1 // pred_check
      _
    $region67: #{tpu_custom_call.1} parent=1 // pred_check_branch
      %126 = sbr.rel (0) target = $region69
    $region68: #{tpu_custom_call.1} parent=1 // pred_region
      %s128 = ssub.s32 9216, 9216
      %129 = vsyncadd [#allocation13], %s128
      %s130 = sshll.u32 [#allocation14], 4
      %s131 = int_to_ptr.vmem [resolvable:$true] %s130
      %136 = dma.hbm_to_vmem [thread:$0]  %s16, 9216, %s131, [#allocation13], 64, 64, 4
    $region69: #{tpu_custom_call.1} parent=1 // pred_fallthru
      _
    // Predicated region
    $region70: #{tpu_custom_call.1} parent=1 // pred_check
      _
    $region71: #{tpu_custom_call.1} parent=1 // pred_check_branch
      %138 = sbr.rel (0) target = $region73
    $region72: #{tpu_custom_call.1} parent=1 // pred_region
      _
    $region73: #{tpu_custom_call.1} parent=1 // pred_fallthru
      _
    // Predicated region
    $region74: #{tpu_custom_call.1} parent=1 // pred_check
      _
    $region75: #{tpu_custom_call.1} parent=1 // pred_check_branch
      %140 = sbr.rel (0) target = $region77
    $region76: #{tpu_custom_call.1} parent=1 // pred_region
      %141 = dma.done [#allocation4], 1024
    $region77: #{tpu_custom_call.1} parent=1 // pred_fallthru
      _
    // Predicated region
    $region78: #{tpu_custom_call.1} parent=1 // pred_check
      _
    $region79: #{tpu_custom_call.1} parent=1 // pred_check_branch
      %143 = sbr.rel (0) target = $region81
    $region80: #{tpu_custom_call.1} parent=1 // pred_region
      %144 = dma.done [#allocation7], 1024
    $region81: #{tpu_custom_call.1} parent=1 // pred_fallthru
      _
    // Predicated region
    $region82: #{tpu_custom_call.1} parent=1 // pred_check
      _
    $region83: #{tpu_custom_call.1} parent=1 // pred_check_branch
      %146 = sbr.rel (0) target = $region85
    $region84: #{tpu_custom_call.1} parent=1 // pred_region
      %147 = dma.done [#allocation7], 1024
    $region85: #{tpu_custom_call.1} parent=1 // pred_fallthru
      _
    // Predicated region
    $region86: #{tpu_custom_call.1} parent=1 // pred_check
      _
    $region87: #{tpu_custom_call.1} parent=1 // pred_check_branch
      %149 = sbr.rel (0) target = $region89
    $region88: #{tpu_custom_call.1} parent=1 // pred_region
      %150 = dma.done [#allocation10], 8192
    $region89: #{tpu_custom_call.1} parent=1 // pred_fallthru
      _
    // Predicated region
    $region90: #{tpu_custom_call.1} parent=1 // pred_check
      _
    $region91: #{tpu_custom_call.1} parent=1 // pred_check_branch
      %152 = sbr.rel (0) target = $region93
    $region92: #{tpu_custom_call.1} parent=1 // pred_region
      %153 = dma.done [#allocation10], 32768
    $region93: #{tpu_custom_call.1} parent=1 // pred_fallthru
      _
    // Predicated region
    $region94: #{tpu_custom_call.1} parent=1 // pred_check
      _
    $region95: #{tpu_custom_call.1} parent=1 // pred_check_branch
      %155 = sbr.rel (0) target = $region97
    $region96: #{tpu_custom_call.1} parent=1 // pred_region
      %156 = dma.done [#allocation13], 8192
    $region97: #{tpu_custom_call.1} parent=1 // pred_fallthru
      _
    // Predicated region
    $region98: #{tpu_custom_call.1} parent=1 // pred_check
      _
    $region99: #{tpu_custom_call.1} parent=1 // pred_check_branch
      %158 = sbr.rel (0) target = $region101
    $region100: #{tpu_custom_call.1} parent=1 // pred_region
      %159 = dma.done [#allocation13], 9216
    $region101: #{tpu_custom_call.1} parent=1 // pred_fallthru
      _
    %v161 = vld [vmem:[%s0] sm:$0xf]
    %v162 = vld [vmem:[%s0 + $0x4] sm:$0xf]
    %v163 = vld [vmem:[%s0 + $0x8] sm:$0xf]
    %v164 = vld [vmem:[%s0 + $0xc] sm:$0xf]
    %v165 = vld [vmem:[%s0 + $0x10] sm:$0xf]
    %v166 = vld [vmem:[%s0 + $0x14] sm:$0xf]
    %v167 = vld [vmem:[%s0 + $0x18] sm:$0xf]
    %v168 = vld [vmem:[%s0 + $0x1c] sm:$0xf]
    %v169 = vld [vmem:[%s0 + $0x20] sm:$0xf]
    %v170 = vld [vmem:[%s0 + $0x24] sm:$0xf]
    %v171 = vld [vmem:[%s0 + $0x28] sm:$0xf]
    %v172 = vld [vmem:[%s0 + $0x2c] sm:$0xf]
    %v173 = vld [vmem:[%s0 + $0x30] sm:$0xf]
    %v174 = vld [vmem:[%s0 + $0x34] sm:$0xf]
    %v175 = vld [vmem:[%s0 + $0x38] sm:$0xf]
    %v176 = vld [vmem:[%s0 + $0x3c] sm:$0xf]
    %v177 = vunpack.c.l.bf16 %v161
    %v178 = vunpack.c.l.bf16 %v162
    %v179 = vunpack.c.l.bf16 %v163
    %v180 = vunpack.c.l.bf16 %v164
    %v181 = vunpack.c.l.bf16 %v165
    %v182 = vunpack.c.l.bf16 %v166
    %v183 = vunpack.c.l.bf16 %v167
    %v184 = vunpack.c.l.bf16 %v168
    %v185 = vunpack.c.l.bf16 %v169
    %v186 = vunpack.c.l.bf16 %v170
    %v187 = vunpack.c.l.bf16 %v171
    %v188 = vunpack.c.l.bf16 %v172
    %v189 = vunpack.c.l.bf16 %v173
    %v190 = vunpack.c.l.bf16 %v174
    %v191 = vunpack.c.l.bf16 %v175
    %v192 = vunpack.c.l.bf16 %v176
    %vm193 = vcmask 523264
    %v194 = vsel %vm193, %v177, 0.0
    %195 = vadd.xlane.f32.xlu0 %v194
    %v196 = vpop.xlane.xlu0 %195
    %v197 = vsel %vm193, %v178, 0.0
    %198 = vadd.xlane.f32.xlu0 %v197
    %v199 = vpop.xlane.xlu0 %198
    %v200 = vsel %vm193, %v179, 0.0
    %201 = vadd.xlane.f32.xlu0 %v200
    %v202 = vpop.xlane.xlu0 %201
    %v203 = vsel %vm193, %v180, 0.0
    %204 = vadd.xlane.f32.xlu0 %v203
    %v205 = vpop.xlane.xlu0 %204
    %v206 = vsel %vm193, %v181, 0.0
    %207 = vadd.xlane.f32.xlu0 %v206
    %v208 = vpop.xlane.xlu0 %207
    %v209 = vsel %vm193, %v182, 0.0
    %210 = vadd.xlane.f32.xlu0 %v209
    %v211 = vpop.xlane.xlu0 %210
    %v212 = vsel %vm193, %v183, 0.0
    %213 = vadd.xlane.f32.xlu0 %v212
    %v214 = vpop.xlane.xlu0 %213
    %v215 = vsel %vm193, %v184, 0.0
    %216 = vadd.xlane.f32.xlu0 %v215
    %v217 = vpop.xlane.xlu0 %216
    %v218 = vsel %vm193, %v185, 0.0
    %219 = vadd.xlane.f32.xlu0 %v218
    %v220 = vpop.xlane.xlu0 %219
    %v221 = vsel %vm193, %v186, 0.0
    %222 = vadd.xlane.f32.xlu0 %v221
    %v223 = vpop.xlane.xlu0 %222
    %v224 = vsel %vm193, %v187, 0.0
    %225 = vadd.xlane.f32.xlu0 %v224
    %v226 = vpop.xlane.xlu0 %225
    %v227 = vsel %vm193, %v188, 0.0
    %228 = vadd.xlane.f32.xlu0 %v227
    %v229 = vpop.xlane.xlu0 %228
    %v230 = vsel %vm193, %v189, 0.0
    %231 = vadd.xlane.f32.xlu0 %v230
    %v232 = vpop.xlane.xlu0 %231
    %v233 = vsel %vm193, %v190, 0.0
    %234 = vadd.xlane.f32.xlu0 %v233
    %v235 = vpop.xlane.xlu0 %234
    %v236 = vsel %vm193, %v191, 0.0
    %237 = vadd.xlane.f32.xlu0 %v236
    %v238 = vpop.xlane.xlu0 %237
    %v239 = vsel %vm193, %v192, 0.0
    %240 = vadd.xlane.f32.xlu0 %v239
    %v241 = vpop.xlane.xlu0 %240
    %v242 = vrcp.pop 64.0
    %v243 = vmul.f32 %v196, %v242
    %v244 = vmul.f32 %v199, %v242
    %v245 = vmul.f32 %v202, %v242
    %v246 = vmul.f32 %v205, %v242
    %v247 = vmul.f32 %v208, %v242
    %v248 = vmul.f32 %v211, %v242
    %v249 = vmul.f32 %v214, %v242
    %v250 = vmul.f32 %v217, %v242
    %v251 = vmul.f32 %v220, %v242
    %v252 = vmul.f32 %v223, %v242
    %v253 = vmul.f32 %v226, %v242
    %v254 = vmul.f32 %v229, %v242
    %v255 = vmul.f32 %v232, %v242
    %v256 = vmul.f32 %v235, %v242
    %v257 = vmul.f32 %v238, %v242
    %v258 = vmul.f32 %v241, %v242
    %v259 = vsel %vm193, %v177, -inf
    %260 = vmax.xlane.f32.xlu0 %v259
    %v261 = vpop.xlane.xlu0 %260
    %v262 = vsel %vm193, %v178, -inf
    %263 = vmax.xlane.f32.xlu0 %v262
    %v264 = vpop.xlane.xlu0 %263
    %v265 = vsel %vm193, %v179, -inf
    %266 = vmax.xlane.f32.xlu0 %v265
    %v267 = vpop.xlane.xlu0 %266
    %v268 = vsel %vm193, %v180, -inf
    %269 = vmax.xlane.f32.xlu0 %v268
    %v270 = vpop.xlane.xlu0 %269
    %v271 = vsel %vm193, %v181, -inf
    %272 = vmax.xlane.f32.xlu0 %v271
    %v273 = vpop.xlane.xlu0 %272
    %v274 = vsel %vm193, %v182, -inf
    %275 = vmax.xlane.f32.xlu0 %v274
    %v276 = vpop.xlane.xlu0 %275
    %v277 = vsel %vm193, %v183, -inf
    %278 = vmax.xlane.f32.xlu0 %v277
    %v279 = vpop.xlane.xlu0 %278
    %v280 = vsel %vm193, %v184, -inf
    %281 = vmax.xlane.f32.xlu0 %v280
    %v282 = vpop.xlane.xlu0 %281
    %v283 = vsel %vm193, %v185, -inf
    %284 = vmax.xlane.f32.xlu0 %v283
    %v285 = vpop.xlane.xlu0 %284
    %v286 = vsel %vm193, %v186, -inf
    %287 = vmax.xlane.f32.xlu0 %v286
    %v288 = vpop.xlane.xlu0 %287
    %v289 = vsel %vm193, %v187, -inf
    %290 = vmax.xlane.f32.xlu0 %v289
    %v291 = vpop.xlane.xlu0 %290
    %v292 = vsel %vm193, %v188, -inf
    %293 = vmax.xlane.f32.xlu0 %v292
    %v294 = vpop.xlane.xlu0 %293
    %v295 = vsel %vm193, %v189, -inf
    %296 = vmax.xlane.f32.xlu0 %v295
    %v297 = vpop.xlane.xlu0 %296
    %v298 = vsel %vm193, %v190, -inf
    %299 = vmax.xlane.f32.xlu0 %v298
    %v300 = vpop.xlane.xlu0 %299
    %v301 = vsel %vm193, %v191, -inf
    %302 = vmax.xlane.f32.xlu0 %v301
    %v303 = vpop.xlane.xlu0 %302
    %v304 = vsel %vm193, %v192, -inf
    %305 = vmax.xlane.f32.xlu0 %v304
    %v306 = vpop.xlane.xlu0 %305
    %v323 = vlaneseq
    %v324 = vand.u32 %v323, 127
    %v325 = vlaneseq
    %v326 = vshrl.u32 %v325, 7
    %v327 = vsub.s32 %v324, %v326
    %v328 = vrot.slane %v243, %v327
    %v329 = vadd.s32 %v324, 4294967288
    %v330 = vlaneseq
    %v331 = vshrl.u32 %v330, 7
    %v332 = vsub.s32 %v329, %v331
    %v333 = vrot.slane %v244, %v332
    %vm334 = vcmask 130112
    %v335 = vsel %vm334, %v333, %v328
    %v336 = vadd.s32 %v324, 4294967280
    %v337 = vlaneseq
    %v338 = vshrl.u32 %v337, 7
    %v339 = vsub.s32 %v336, %v338
    %v340 = vrot.slane %v245, %v339
    %vm341 = vcmask 195712
    %v342 = vsel %vm341, %v340, %v335
    %v343 = vadd.s32 %v324, 4294967272
    %v344 = vlaneseq
    %v345 = vshrl.u32 %v344, 7
    %v346 = vsub.s32 %v343, %v345
    %v347 = vrot.slane %v246, %v346
    %vm348 = vcmask 261312
    %v349 = vsel %vm348, %v347, %v342
    %v350 = vadd.s32 %v324, 4294967264
    %v351 = vlaneseq
    %v352 = vshrl.u32 %v351, 7
    %v353 = vsub.s32 %v350, %v352
    %v354 = vrot.slane %v247, %v353
    %vm355 = vcmask 326912
    %v356 = vsel %vm355, %v354, %v349
    %v357 = vadd.s32 %v324, 4294967256
    %v358 = vlaneseq
    %v359 = vshrl.u32 %v358, 7
    %v360 = vsub.s32 %v357, %v359
    %v361 = vrot.slane %v248, %v360
    %vm362 = vcmask 392512
    %v363 = vsel %vm362, %v361, %v356
    %v364 = vadd.s32 %v324, 4294967248
    %v365 = vlaneseq
    %v366 = vshrl.u32 %v365, 7
    %v367 = vsub.s32 %v364, %v366
    %v368 = vrot.slane %v249, %v367
    %vm369 = vcmask 458112
    %v370 = vsel %vm369, %v368, %v363
    %v371 = vadd.s32 %v324, 4294967240
    %v372 = vlaneseq
    %v373 = vshrl.u32 %v372, 7
    %v374 = vsub.s32 %v371, %v373
    %v375 = vrot.slane %v250, %v374
    %vm376 = vcmask 523712
    %v377 = vsel %vm376, %v375, %v370
    %v378 = vlaneseq
    %v379 = vshrl.u32 %v378, 7
    %v380 = vsub.s32 %v324, %v379
    %v381 = vrot.slane %v251, %v380
    %v382 = vlaneseq
    %v383 = vshrl.u32 %v382, 7
    %v384 = vsub.s32 %v329, %v383
    %v385 = vrot.slane %v252, %v384
    %v386 = vsel %vm334, %v385, %v381
    %v387 = vlaneseq
    %v388 = vshrl.u32 %v387, 7
    %v389 = vsub.s32 %v336, %v388
    %v390 = vrot.slane %v253, %v389
    %v391 = vsel %vm341, %v390, %v386
    %v392 = vlaneseq
    %v393 = vshrl.u32 %v392, 7
    %v394 = vsub.s32 %v343, %v393
    %v395 = vrot.slane %v254, %v394
    %v396 = vsel %vm348, %v395, %v391
    %v397 = vlaneseq
    %v398 = vshrl.u32 %v397, 7
    %v399 = vsub.s32 %v350, %v398
    %v400 = vrot.slane %v255, %v399
    %v401 = vsel %vm355, %v400, %v396
    %v402 = vlaneseq
    %v403 = vshrl.u32 %v402, 7
    %v404 = vsub.s32 %v357, %v403
    %v405 = vrot.slane %v256, %v404
    %v406 = vsel %vm362, %v405, %v401
    %v407 = vlaneseq
    %v408 = vshrl.u32 %v407, 7
    %v409 = vsub.s32 %v364, %v408
    %v410 = vrot.slane %v257, %v409
    %v411 = vsel %vm369, %v410, %v406
    %v412 = vlaneseq
    %v413 = vshrl.u32 %v412, 7
    %v414 = vsub.s32 %v371, %v413
    %v415 = vrot.slane %v258, %v414
    %v416 = vsel %vm376, %v415, %v411
    %vm417 = vcmask 1041409
    %v418 = vsel %vm417, %v416, %v377
    %v436 = vlaneseq
    %v437 = vshrl.u32 %v436, 7
    %v438 = vsub.s32 %v324, %v437
    %v439 = vrot.slane %v261, %v438
    %v440 = vlaneseq
    %v441 = vshrl.u32 %v440, 7
    %v442 = vsub.s32 %v329, %v441
    %v443 = vrot.slane %v264, %v442
    %v444 = vsel %vm334, %v443, %v439
    %v445 = vlaneseq
    %v446 = vshrl.u32 %v445, 7
    %v447 = vsub.s32 %v336, %v446
    %v448 = vrot.slane %v267, %v447
    %v449 = vsel %vm341, %v448, %v444
    %v450 = vlaneseq
    %v451 = vshrl.u32 %v450, 7
    %v452 = vsub.s32 %v343, %v451
    %v453 = vrot.slane %v270, %v452
    %v454 = vsel %vm348, %v453, %v449
    %v455 = vlaneseq
    %v456 = vshrl.u32 %v455, 7
    %v457 = vsub.s32 %v350, %v456
    %v458 = vrot.slane %v273, %v457
    %v459 = vsel %vm355, %v458, %v454
    %v460 = vlaneseq
    %v461 = vshrl.u32 %v460, 7
    %v462 = vsub.s32 %v357, %v461
    %v463 = vrot.slane %v276, %v462
    %v464 = vsel %vm362, %v463, %v459
    %v465 = vlaneseq
    %v466 = vshrl.u32 %v465, 7
    %v467 = vsub.s32 %v364, %v466
    %v468 = vrot.slane %v279, %v467
    %v469 = vsel %vm369, %v468, %v464
    %v470 = vlaneseq
    %v471 = vshrl.u32 %v470, 7
    %v472 = vsub.s32 %v371, %v471
    %v473 = vrot.slane %v282, %v472
    %v474 = vsel %vm376, %v473, %v469
    %v475 = vlaneseq
    %v476 = vshrl.u32 %v475, 7
    %v477 = vsub.s32 %v324, %v476
    %v478 = vrot.slane %v285, %v477
    %v479 = vlaneseq
    %v480 = vshrl.u32 %v479, 7
    %v481 = vsub.s32 %v329, %v480
    %v482 = vrot.slane %v288, %v481
    %v483 = vsel %vm334, %v482, %v478
    %v484 = vlaneseq
    %v485 = vshrl.u32 %v484, 7
    %v486 = vsub.s32 %v336, %v485
    %v487 = vrot.slane %v291, %v486
    %v488 = vsel %vm341, %v487, %v483
    %v489 = vlaneseq
    %v490 = vshrl.u32 %v489, 7
    %v491 = vsub.s32 %v343, %v490
    %v492 = vrot.slane %v294, %v491
    %v493 = vsel %vm348, %v492, %v488
    %v494 = vlaneseq
    %v495 = vshrl.u32 %v494, 7
    %v496 = vsub.s32 %v350, %v495
    %v497 = vrot.slane %v297, %v496
    %v498 = vsel %vm355, %v497, %v493
    %v499 = vlaneseq
    %v500 = vshrl.u32 %v499, 7
    %v501 = vsub.s32 %v357, %v500
    %v502 = vrot.slane %v300, %v501
    %v503 = vsel %vm362, %v502, %v498
    %v504 = vlaneseq
    %v505 = vshrl.u32 %v504, 7
    %v506 = vsub.s32 %v364, %v505
    %v507 = vrot.slane %v303, %v506
    %v508 = vsel %vm369, %v507, %v503
    %v509 = vlaneseq
    %v510 = vshrl.u32 %v509, 7
    %v511 = vsub.s32 %v371, %v510
    %v512 = vrot.slane %v306, %v511
    %v513 = vsel %vm376, %v512, %v508
    %vm514 = vcmask 1043459
    %v515 = vsel %vm514, %v513, %v474
    %vm517 = vcmask 1041408
    %v518 = vsel %vm517, %v418, %v515
    %v519 = vld [vmem:[#allocation3] sm:$0xff]
    %v520 = vld [vmem:[#allocation3 + $0x8] sm:$0xff]
    %v521 = vld [vmem:[#allocation3 + $0x10] sm:$0xff]
    %v522 = vld [vmem:[#allocation3 + $0x18] sm:$0xff]
    %v523 = vld [vmem:[#allocation3 + $0x20] sm:$0xff]
    %v524 = vld [vmem:[#allocation3 + $0x28] sm:$0xff]
    %v525 = vld [vmem:[#allocation3 + $0x30] sm:$0xff]
    %v526 = vld [vmem:[#allocation3 + $0x38] sm:$0xff]
    %v527 = vld [vmem:[%s2] sm:$0x1]
    %v529 = vlaneseq
    %v530 = vshrl.u32 %v529, 7
    %v531 = vsub.s32 0, %v530
    %v532 = vrot.slane %v527, %v531
    %v535 = vsel %vm193, %v518, 0
    %537 = vmatprep.subr.mxu0 0.0
    %538 = vmatpush1.msra.mxu0 %v519
    %539 = vmatprep.subr.mxu0 0.0
    %540 = vmatpush1.msra.mxu0 %v520
    %541 = vmatprep.subr.mxu0 0.0
    %542 = vmatpush1.msra.mxu0 %v521
    %543 = vmatprep.subr.mxu0 0.0
    %544 = vmatpush1.msra.mxu0 %v522
    %545 = vmatprep.subr.mxu0 0.0
    %546 = vmatpush1.msra.mxu0 %v523
    %547 = vmatprep.subr.mxu0 0.0
    %548 = vmatpush1.msra.mxu0 %v524
    %549 = vmatprep.subr.mxu0 0.0
    %550 = vmatpush1.msra.mxu0 %v525
    %551 = vmatprep.subr.mxu0 0.0
    %552 = vmatpush1.msra.mxu0 %v526
    %553 = vmatprep.subr.mxu0 0.0
    %554 = vmatpush1.msra.mxu0 0.0
    %555 = vmatprep.subr.mxu0 0.0
    %556 = vmatpush1.msra.mxu0 0.0
    %557 = vmatprep.subr.mxu0 0.0
    %558 = vmatpush1.msra.mxu0 0.0
    %559 = vmatprep.subr.mxu0 0.0
    %560 = vmatpush1.msra.mxu0 0.0
    %561 = vmatprep.subr.mxu0 0.0
    %562 = vmatpush1.msra.mxu0 0.0
    %563 = vmatprep.subr.mxu0 0.0
    %564 = vmatpush1.msra.mxu0 0.0
    %565 = vmatprep.subr.mxu0 0.0
    %566 = vmatpush1.msra.mxu0 0.0
    %567 = vmatprep.subr.mxu0 0.0
    %568 = vmatpush1.msra.mxu0 0.0
    %569 = vmatprep.subr.mxu0 0.0
    %570 = vmatpush1.msra.mxu0 0.0
    %571 = vmatprep.subr.mxu0 0.0
    %572 = vmatpush1.msra.mxu0 0.0
    %573 = vmatprep.subr.mxu0 0.0
    %574 = vmatpush1.msra.mxu0 0.0
    %575 = vmatprep.subr.mxu0 0.0
    %576 = vmatpush1.msra.mxu0 0.0
    %577 = vmatprep.subr.mxu0 0.0
    %578 = vmatpush1.msra.mxu0 0.0
    %579 = vmatprep.subr.mxu0 0.0
    %580 = vmatpush1.msra.mxu0 0.0
    %581 = vmatprep.subr.mxu0 0.0
    %582 = vmatpush1.msra.mxu0 0.0
    %583 = vmatprep.subr.mxu0 0.0
    %584 = vmatpush1.msra.mxu0 0.0
    %585 = vmatprep.subr.mxu0 0.0
    %586 = vmatpush1.msra.mxu0 0.0
    %587 = vmatprep.subr.mxu0 0.0
    %588 = vmatpush1.msra.mxu0 0.0
    %589 = vmatprep.subr.mxu0 0.0
    %590 = vmatpush1.msra.mxu0 0.0
    %591 = vmatprep.subr.mxu0 0.0
    %592 = vmatpush1.msra.mxu0 0.0
    %593 = vmatprep.subr.mxu0 0.0
    %594 = vmatpush1.msra.mxu0 0.0
    %595 = vmatprep.subr.mxu0 0.0
    %596 = vmatpush1.msra.mxu0 0.0
    %597 = vmatprep.subr.mxu0 0.0
    %598 = vmatpush1.msra.mxu0 0.0
    %599 = vmatprep.subr.mxu0 0.0
    %600 = vmatpush1.msra.mxu0 0.0
    %601 = vmatprep.mubr.f32.mxu0 0.0
    %602 = vmatmul.mubr.f32.gmra.mrb[0].mxu0 %v535
    %v603 = vpop.f32.mrb[0].mxu0
    %v604 = vadd.f32 %v532, %v603
    %v605 = vpop.f32.mrb[0].mxu0
    %606 = vdwg.mxu0
    %v607 = vmax.f32 %v604, 0.0
    %v608 = vld [vmem:[%s3] sm:$0xff]
    %v609 = vld [vmem:[%s3 + $0x8] sm:$0xff]
    %v610 = vld [vmem:[%s3 + $0x10] sm:$0xff]
    %v611 = vld [vmem:[%s3 + $0x18] sm:$0xff]
    %v612 = vld [vmem:[%s3 + $0x20] sm:$0xff]
    %v613 = vld [vmem:[%s3 + $0x28] sm:$0xff]
    %v614 = vld [vmem:[%s3 + $0x30] sm:$0xff]
    %v615 = vld [vmem:[%s3 + $0x38] sm:$0xff]
    %v616 = vld [vmem:[%s3 + $0x40] sm:$0xff]
    %v617 = vld [vmem:[%s3 + $0x48] sm:$0xff]
    %v618 = vld [vmem:[%s3 + $0x50] sm:$0xff]
    %v619 = vld [vmem:[%s3 + $0x58] sm:$0xff]
    %v620 = vld [vmem:[%s3 + $0x60] sm:$0xff]
    %v621 = vld [vmem:[%s3 + $0x68] sm:$0xff]
    %v622 = vld [vmem:[%s3 + $0x70] sm:$0xff]
    %v623 = vld [vmem:[%s3 + $0x78] sm:$0xff]
    %v624 = vld [vmem:[%s4] sm:$0x1]
    %v626 = vlaneseq
    %v627 = vshrl.u32 %v626, 7
    %v628 = vsub.s32 0, %v627
    %v629 = vrot.slane %v624, %v628
    %631 = vmatprep.subr.mxu0 0.0
    %632 = vmatpush1.msra.mxu0 %v608
    %633 = vmatprep.subr.mxu0 0.0
    %634 = vmatpush1.msra.mxu0 %v609
    %635 = vmatprep.subr.mxu0 0.0
    %636 = vmatpush1.msra.mxu0 %v610
    %637 = vmatprep.subr.mxu0 0.0
    %638 = vmatpush1.msra.mxu0 %v611
    %639 = vmatprep.subr.mxu0 0.0
    %640 = vmatpush1.msra.mxu0 %v612
    %641 = vmatprep.subr.mxu0 0.0
    %642 = vmatpush1.msra.mxu0 %v613
    %643 = vmatprep.subr.mxu0 0.0
    %644 = vmatpush1.msra.mxu0 %v614
    %645 = vmatprep.subr.mxu0 0.0
    %646 = vmatpush1.msra.mxu0 %v615
    %647 = vmatprep.subr.mxu0 0.0
    %648 = vmatpush1.msra.mxu0 %v616
    %649 = vmatprep.subr.mxu0 0.0
    %650 = vmatpush1.msra.mxu0 %v617
    %651 = vmatprep.subr.mxu0 0.0
    %652 = vmatpush1.msra.mxu0 %v618
    %653 = vmatprep.subr.mxu0 0.0
    %654 = vmatpush1.msra.mxu0 %v619
    %655 = vmatprep.subr.mxu0 0.0
    %656 = vmatpush1.msra.mxu0 %v620
    %657 = vmatprep.subr.mxu0 0.0
    %658 = vmatpush1.msra.mxu0 %v621
    %659 = vmatprep.subr.mxu0 0.0
    %660 = vmatpush1.msra.mxu0 %v622
    %661 = vmatprep.subr.mxu0 0.0
    %662 = vmatpush1.msra.mxu0 %v623
    %663 = vmatprep.subr.mxu0 0.0
    %664 = vmatpush1.msra.mxu0 0.0
    %665 = vmatprep.subr.mxu0 0.0
    %666 = vmatpush1.msra.mxu0 0.0
    %667 = vmatprep.subr.mxu0 0.0
    %668 = vmatpush1.msra.mxu0 0.0
    %669 = vmatprep.subr.mxu0 0.0
    %670 = vmatpush1.msra.mxu0 0.0
    %671 = vmatprep.subr.mxu0 0.0
    %672 = vmatpush1.msra.mxu0 0.0
    %673 = vmatprep.subr.mxu0 0.0
    %674 = vmatpush1.msra.mxu0 0.0
    %675 = vmatprep.subr.mxu0 0.0
    %676 = vmatpush1.msra.mxu0 0.0
    %677 = vmatprep.subr.mxu0 0.0
    %678 = vmatpush1.msra.mxu0 0.0
    %679 = vmatprep.subr.mxu0 0.0
    %680 = vmatpush1.msra.mxu0 0.0
    %681 = vmatprep.subr.mxu0 0.0
    %682 = vmatpush1.msra.mxu0 0.0
    %683 = vmatprep.subr.mxu0 0.0
    %684 = vmatpush1.msra.mxu0 0.0
    %685 = vmatprep.subr.mxu0 0.0
    %686 = vmatpush1.msra.mxu0 0.0
    %687 = vmatprep.subr.mxu0 0.0
    %688 = vmatpush1.msra.mxu0 0.0
    %689 = vmatprep.subr.mxu0 0.0
    %690 = vmatpush1.msra.mxu0 0.0
    %691 = vmatprep.subr.mxu0 0.0
    %692 = vmatpush1.msra.mxu0 0.0
    %693 = vmatprep.subr.mxu0 0.0
    %694 = vmatpush1.msra.mxu0 0.0
    %695 = vmatprep.mubr.f32.mxu0 0.0
    %696 = vmatmul.mubr.f32.gmra.mrb[0].mxu0 %v607
    %v697 = vpop.f32.mrb[0].mxu0
    %v698 = vadd.f32 %v629, %v697
    %v699 = vpop.f32.mrb[0].mxu0
    %700 = vdwg.mxu0
    %v702 = vrot.slane %v698, 2
    %v704 = vadd.f32 %v698, %v702
    %v705 = vxor.u32 %v704, 2147483648
    %v706 = vmul.f32 %v705, 1.442695
    %v707 = vpow.pop %v706
    %v708 = vadd.f32 %v707, 1.0
    %v709 = vrcp.pop %v708
    %v710 = vmul.f32 1.0, %v709
    %v711 = vlaneseq
    %v712 = vshrl.u32 %v711, 7
    %v713 = vsub.s32 0, %v712
    %v714 = vrot.slane %v710, %v713
    %716 = vbcast.lane.b32.xlu0 %v714, 256
    %v717 = vpop.permute.xlu0 %716
    %s719 = sor.u32 256, 8
    %720 = vbcast.lane.b32.xlu0 %v714, %s719
    %v721 = vpop.permute.xlu0 %720
    %s723 = sor.u32 256, 16
    %724 = vbcast.lane.b32.xlu0 %v714, %s723
    %v725 = vpop.permute.xlu0 %724
    %s727 = sor.u32 256, 24
    %728 = vbcast.lane.b32.xlu0 %v714, %s727
    %v729 = vpop.permute.xlu0 %728
    %s731 = sor.u32 256, 32
    %732 = vbcast.lane.b32.xlu0 %v714, %s731
    %v733 = vpop.permute.xlu0 %732
    %s735 = sor.u32 256, 40
    %736 = vbcast.lane.b32.xlu0 %v714, %s735
    %v737 = vpop.permute.xlu0 %736
    %s739 = sor.u32 256, 48
    %740 = vbcast.lane.b32.xlu0 %v714, %s739
    %v741 = vpop.permute.xlu0 %740
    %s743 = sor.u32 256, 56
    %744 = vbcast.lane.b32.xlu0 %v714, %s743
    %v745 = vpop.permute.xlu0 %744
    %v746 = vlaneseq
    %v747 = vshrl.u32 %v746, 7
    %v748 = vsub.s32 1, %v747
    %v749 = vrot.slane %v710, %v748
    %751 = vbcast.lane.b32.xlu0 %v749, 256
    %v752 = vpop.permute.xlu0 %751
    %s754 = sor.u32 256, 8
    %755 = vbcast.lane.b32.xlu0 %v749, %s754
    %v756 = vpop.permute.xlu0 %755
    %s758 = sor.u32 256, 16
    %759 = vbcast.lane.b32.xlu0 %v749, %s758
    %v760 = vpop.permute.xlu0 %759
    %s762 = sor.u32 256, 24
    %763 = vbcast.lane.b32.xlu0 %v749, %s762
    %v764 = vpop.permute.xlu0 %763
    %s766 = sor.u32 256, 32
    %767 = vbcast.lane.b32.xlu0 %v749, %s766
    %v768 = vpop.permute.xlu0 %767
    %s770 = sor.u32 256, 40
    %771 = vbcast.lane.b32.xlu0 %v749, %s770
    %v772 = vpop.permute.xlu0 %771
    %s774 = sor.u32 256, 48
    %775 = vbcast.lane.b32.xlu0 %v749, %s774
    %v776 = vpop.permute.xlu0 %775
    %s778 = sor.u32 256, 56
    %779 = vbcast.lane.b32.xlu0 %v749, %s778
    %v780 = vpop.permute.xlu0 %779
    %v781 = vmul.f32 %v177, %v717
    %v782 = vmul.f32 %v178, %v721
    %v783 = vmul.f32 %v179, %v725
    %v784 = vmul.f32 %v180, %v729
    %v785 = vmul.f32 %v181, %v733
    %v786 = vmul.f32 %v182, %v737
    %v787 = vmul.f32 %v183, %v741
    %v788 = vmul.f32 %v184, %v745
    %v789 = vmul.f32 %v185, %v752
    %v790 = vmul.f32 %v186, %v756
    %v791 = vmul.f32 %v187, %v760
    %v792 = vmul.f32 %v188, %v764
    %v793 = vmul.f32 %v189, %v768
    %v794 = vmul.f32 %v190, %v772
    %v795 = vmul.f32 %v191, %v776
    %v796 = vmul.f32 %v192, %v780
    %v797 = vsel %vm193, %v781, 0.0
    %v798 = vsel %vm193, %v782, 0.0
    %v799 = vadd.f32 %v797, %v798
    %v800 = vsel %vm193, %v783, 0.0
    %v801 = vadd.f32 %v799, %v800
    %v802 = vsel %vm193, %v784, 0.0
    %v803 = vadd.f32 %v801, %v802
    %v804 = vsel %vm193, %v785, 0.0
    %v805 = vadd.f32 %v803, %v804
    %v806 = vsel %vm193, %v786, 0.0
    %v807 = vadd.f32 %v805, %v806
    %v808 = vsel %vm193, %v787, 0.0
    %v809 = vadd.f32 %v807, %v808
    %v810 = vsel %vm193, %v788, 0.0
    %v811 = vadd.f32 %v809, %v810
    %v812 = vrot.slane %v811, 4
    %v813 = vadd.f32 %v811, %v812
    %v814 = vrot.slane %v813, 2
    %v815 = vadd.f32 %v813, %v814
    %v816 = vrot.slane %v815, 1
    %v817 = vadd.f32 %v815, %v816
    %v818 = vsel %vm193, %v789, 0.0
    %v819 = vsel %vm193, %v790, 0.0
    %v820 = vadd.f32 %v818, %v819
    %v821 = vsel %vm193, %v791, 0.0
    %v822 = vadd.f32 %v820, %v821
    %v823 = vsel %vm193, %v792, 0.0
    %v824 = vadd.f32 %v822, %v823
    %v825 = vsel %vm193, %v793, 0.0
    %v826 = vadd.f32 %v824, %v825
    %v827 = vsel %vm193, %v794, 0.0
    %v828 = vadd.f32 %v826, %v827
    %v829 = vsel %vm193, %v795, 0.0
    %v830 = vadd.f32 %v828, %v829
    %v831 = vsel %vm193, %v796, 0.0
    %v832 = vadd.f32 %v830, %v831
    %v833 = vrot.slane %v832, 4
    %v834 = vadd.f32 %v832, %v833
    %v835 = vrot.slane %v834, 2
    %v836 = vadd.f32 %v834, %v835
    %v837 = vrot.slane %v836, 1
    %v838 = vadd.f32 %v836, %v837
    %v839 = vmul.f32 %v817, %v242
    %v840 = vmul.f32 %v838, %v242
    %v841 = vsel %vm193, %v781, -inf
    %v842 = vsel %vm193, %v782, -inf
    %v843 = vsel %vm193, %v783, -inf
    %v844 = vmax.f32 %v841, %v843
    %v845 = vsel %vm193, %v784, -inf
    %v846 = vmax.f32 %v842, %v845
    %v847 = vsel %vm193, %v785, -inf
    %v848 = vmax.f32 %v844, %v847
    %v849 = vsel %vm193, %v786, -inf
    %v850 = vmax.f32 %v846, %v849
    %v851 = vsel %vm193, %v787, -inf
    %v852 = vmax.f32 %v848, %v851
    %v853 = vsel %vm193, %v788, -inf
    %v854 = vmax.f32 %v850, %v853
    %v855 = vmax.f32 %v852, %v854
    %v856 = vrot.slane %v855, 4
    %v857 = vmax.f32 %v855, %v856
    %v858 = vrot.slane %v857, 2
    %v859 = vmax.f32 %v857, %v858
    %v860 = vrot.slane %v859, 1
    %v861 = vmax.f32 %v859, %v860
    %v862 = vsel %vm193, %v789, -inf
    %v863 = vsel %vm193, %v790, -inf
    %v864 = vsel %vm193, %v791, -inf
    %v865 = vmax.f32 %v862, %v864
    %v866 = vsel %vm193, %v792, -inf
    %v867 = vmax.f32 %v863, %v866
    %v868 = vsel %vm193, %v793, -inf
    %v869 = vmax.f32 %v865, %v868
    %v870 = vsel %vm193, %v794, -inf
    %v871 = vmax.f32 %v867, %v870
    %v872 = vsel %vm193, %v795, -inf
    %v873 = vmax.f32 %v869, %v872
    %v874 = vsel %vm193, %v796, -inf
    %v875 = vmax.f32 %v871, %v874
    %v876 = vmax.f32 %v873, %v875
    %v877 = vrot.slane %v876, 4
    %v878 = vmax.f32 %v876, %v877
    %v879 = vrot.slane %v878, 2
    %v880 = vmax.f32 %v878, %v879
    %v881 = vrot.slane %v880, 1
    %v882 = vmax.f32 %v880, %v881
    %v883 = vld [vmem:[#allocation6] sm:$0xff]
    %v884 = vld [vmem:[#allocation6 + $0x8] sm:$0xff]
    %v885 = vld [vmem:[#allocation6 + $0x10] sm:$0xff]
    %v886 = vld [vmem:[#allocation6 + $0x18] sm:$0xff]
    %v887 = vld [vmem:[#allocation6 + $0x20] sm:$0xff]
    %v888 = vld [vmem:[#allocation6 + $0x28] sm:$0xff]
    %v889 = vld [vmem:[#allocation6 + $0x30] sm:$0xff]
    %v890 = vld [vmem:[#allocation6 + $0x38] sm:$0xff]
    %v891 = vld [vmem:[#allocation8] sm:$0xff]
    %v892 = vld [vmem:[#allocation8 + $0x8] sm:$0xff]
    %v893 = vld [vmem:[#allocation8 + $0x10] sm:$0xff]
    %v894 = vld [vmem:[#allocation8 + $0x18] sm:$0xff]
    %v895 = vld [vmem:[#allocation8 + $0x20] sm:$0xff]
    %v896 = vld [vmem:[#allocation8 + $0x28] sm:$0xff]
    %v897 = vld [vmem:[#allocation8 + $0x30] sm:$0xff]
    %v898 = vld [vmem:[#allocation8 + $0x38] sm:$0xff]
    %v901 = vsel %vm417, %v882, %v861
    %v902 = vsel %vm193, %v901, 0
    %904 = vmatprep.subr.mxu0 0.0
    %905 = vmatpush1.msra.mxu0 %v891
    %906 = vmatprep.subr.mxu0 0.0
    %907 = vmatpush1.msra.mxu0 %v892
    %908 = vmatprep.subr.mxu0 0.0
    %909 = vmatpush1.msra.mxu0 %v893
    %910 = vmatprep.subr.mxu0 0.0
    %911 = vmatpush1.msra.mxu0 %v894
    %912 = vmatprep.subr.mxu0 0.0
    %913 = vmatpush1.msra.mxu0 %v895
    %914 = vmatprep.subr.mxu0 0.0
    %915 = vmatpush1.msra.mxu0 %v896
    %916 = vmatprep.subr.mxu0 0.0
    %917 = vmatpush1.msra.mxu0 %v897
    %918 = vmatprep.subr.mxu0 0.0
    %919 = vmatpush1.msra.mxu0 %v898
    %920 = vmatprep.subr.mxu0 0.0
    %921 = vmatpush1.msra.mxu0 0.0
    %922 = vmatprep.subr.mxu0 0.0
    %923 = vmatpush1.msra.mxu0 0.0
    %924 = vmatprep.subr.mxu0 0.0
    %925 = vmatpush1.msra.mxu0 0.0
    %926 = vmatprep.subr.mxu0 0.0
    %927 = vmatpush1.msra.mxu0 0.0
    %928 = vmatprep.subr.mxu0 0.0
    %929 = vmatpush1.msra.mxu0 0.0
    %930 = vmatprep.subr.mxu0 0.0
    %931 = vmatpush1.msra.mxu0 0.0
    %932 = vmatprep.subr.mxu0 0.0
    %933 = vmatpush1.msra.mxu0 0.0
    %934 = vmatprep.subr.mxu0 0.0
    %935 = vmatpush1.msra.mxu0 0.0
    %936 = vmatprep.subr.mxu0 0.0
    %937 = vmatpush1.msra.mxu0 0.0
    %938 = vmatprep.subr.mxu0 0.0
    %939 = vmatpush1.msra.mxu0 0.0
    %940 = vmatprep.subr.mxu0 0.0
    %941 = vmatpush1.msra.mxu0 0.0
    %942 = vmatprep.subr.mxu0 0.0
    %943 = vmatpush1.msra.mxu0 0.0
    %944 = vmatprep.subr.mxu0 0.0
    %945 = vmatpush1.msra.mxu0 0.0
    %946 = vmatprep.subr.mxu0 0.0
    %947 = vmatpush1.msra.mxu0 0.0
    %948 = vmatprep.subr.mxu0 0.0
    %949 = vmatpush1.msra.mxu0 0.0
    %950 = vmatprep.subr.mxu0 0.0
    %951 = vmatpush1.msra.mxu0 0.0
    %952 = vmatprep.subr.mxu0 0.0
    %953 = vmatpush1.msra.mxu0 0.0
    %954 = vmatprep.subr.mxu0 0.0
    %955 = vmatpush1.msra.mxu0 0.0
    %956 = vmatprep.subr.mxu0 0.0
    %957 = vmatpush1.msra.mxu0 0.0
    %958 = vmatprep.subr.mxu0 0.0
    %959 = vmatpush1.msra.mxu0 0.0
    %960 = vmatprep.subr.mxu0 0.0
    %961 = vmatpush1.msra.mxu0 0.0
    %962 = vmatprep.subr.mxu0 0.0
    %963 = vmatpush1.msra.mxu0 0.0
    %964 = vmatprep.subr.mxu0 0.0
    %965 = vmatpush1.msra.mxu0 0.0
    %966 = vmatprep.subr.mxu0 0.0
    %967 = vmatpush1.msra.mxu0 0.0
    %968 = vmatprep.mubr.f32.mxu0 0.0
    %969 = vmatmul.mubr.f32.gmra.mrb[0].mxu0 %v902
    %v970 = vpop.f32.mrb[0].mxu0
    %v971 = vadd.f32 0.0, %v970
    %v972 = vpop.f32.mrb[0].mxu0
    %973 = vdwg.mxu0
    %v976 = vsel %vm417, %v840, %v839
    %v977 = vsel %vm193, %v976, 0
    %979 = vmatprep.subr.mxu0 0.0
    %980 = vmatpush1.msra.mxu0 %v883
    %981 = vmatprep.subr.mxu0 0.0
    %982 = vmatpush1.msra.mxu0 %v884
    %983 = vmatprep.subr.mxu0 0.0
    %984 = vmatpush1.msra.mxu0 %v885
    %985 = vmatprep.subr.mxu0 0.0
    %986 = vmatpush1.msra.mxu0 %v886
    %987 = vmatprep.subr.mxu0 0.0
    %988 = vmatpush1.msra.mxu0 %v887
    %989 = vmatprep.subr.mxu0 0.0
    %990 = vmatpush1.msra.mxu0 %v888
    %991 = vmatprep.subr.mxu0 0.0
    %992 = vmatpush1.msra.mxu0 %v889
    %993 = vmatprep.subr.mxu0 0.0
    %994 = vmatpush1.msra.mxu0 %v890
    %995 = vmatprep.subr.mxu0 0.0
    %996 = vmatpush1.msra.mxu0 0.0
    %997 = vmatprep.subr.mxu0 0.0
    %998 = vmatpush1.msra.mxu0 0.0
    %999 = vmatprep.subr.mxu0 0.0
    %1000 = vmatpush1.msra.mxu0 0.0
    %1001 = vmatprep.subr.mxu0 0.0
    %1002 = vmatpush1.msra.mxu0 0.0
    %1003 = vmatprep.subr.mxu0 0.0
    %1004 = vmatpush1.msra.mxu0 0.0
    %1005 = vmatprep.subr.mxu0 0.0
    %1006 = vmatpush1.msra.mxu0 0.0
    %1007 = vmatprep.subr.mxu0 0.0
    %1008 = vmatpush1.msra.mxu0 0.0
    %1009 = vmatprep.subr.mxu0 0.0
    %1010 = vmatpush1.msra.mxu0 0.0
    %1011 = vmatprep.subr.mxu0 0.0
    %1012 = vmatpush1.msra.mxu0 0.0
    %1013 = vmatprep.subr.mxu0 0.0
    %1014 = vmatpush1.msra.mxu0 0.0
    %1015 = vmatprep.subr.mxu0 0.0
    %1016 = vmatpush1.msra.mxu0 0.0
    %1017 = vmatprep.subr.mxu0 0.0
    %1018 = vmatpush1.msra.mxu0 0.0
    %1019 = vmatprep.subr.mxu0 0.0
    %1020 = vmatpush1.msra.mxu0 0.0
    %1021 = vmatprep.subr.mxu0 0.0
    %1022 = vmatpush1.msra.mxu0 0.0
    %1023 = vmatprep.subr.mxu0 0.0
    %1024 = vmatpush1.msra.mxu0 0.0
    %1025 = vmatprep.subr.mxu0 0.0
    %1026 = vmatpush1.msra.mxu0 0.0
    %1027 = vmatprep.subr.mxu0 0.0
    %1028 = vmatpush1.msra.mxu0 0.0
    %1029 = vmatprep.subr.mxu0 0.0
    %1030 = vmatpush1.msra.mxu0 0.0
    %1031 = vmatprep.subr.mxu0 0.0
    %1032 = vmatpush1.msra.mxu0 0.0
    %1033 = vmatprep.subr.mxu0 0.0
    %1034 = vmatpush1.msra.mxu0 0.0
    %1035 = vmatprep.subr.mxu0 0.0
    %1036 = vmatpush1.msra.mxu0 0.0
    %1037 = vmatprep.subr.mxu0 0.0
    %1038 = vmatpush1.msra.mxu0 0.0
    %1039 = vmatprep.subr.mxu0 0.0
    %1040 = vmatpush1.msra.mxu0 0.0
    %1041 = vmatprep.subr.mxu0 0.0
    %1042 = vmatpush1.msra.mxu0 0.0
    %1043 = vmatprep.mubr.f32.mxu0 0.0
    %1044 = vmatmul.mubr.f32.gmra.mrb[0].mxu0 %v977
    %v1045 = vpop.f32.mrb[0].mxu0
    %v1046 = vadd.f32 %v971, %v1045
    %v1047 = vpop.f32.mrb[0].mxu0
    %1048 = vdwg.mxu0
    %s1049 = sld [smem:[#allocation2]]
    %v1050 = vstv %s1049
    %v1051 = vadd.f32 %v1046, %v1050
    %v1052 = vxor.u32 %v1051, 2147483648
    %v1053 = vmul.f32 %v1052, 1.442695
    %v1054 = vpow.pop %v1053
    %v1055 = vadd.f32 %v1054, 1.0
    %v1056 = vrcp.pop %v1055
    %v1057 = vmul.f32 1.0, %v1056
    %v1060 = vunpack.c.l.s4 1966171168
    %v1061 = vunpack.c.0.s8 %v1060
    %v1062 = vlaneseq
    %v1063 = vshrl.u32 %v1062, 7
    %v1064 = vsub.s32 %v1061, %v1063
    %v1065 = vrot.slane %v1057, %v1064
    %v1066 = vcombine.high %v1065, %v1065
    %v1068 = vunpack.c.l.s4 1966171168
    %v1069 = vunpack.c.0.s8 %v1068
    %v1070 = vlaneseq
    %v1071 = vshrl.u32 %v1070, 7
    %v1072 = vsub.s32 %v1069, %v1071
    %v1073 = vrot.slane %v1065, %v1072
    %v1075 = vunpack.c.l.s4 1966171168
    %v1076 = vunpack.c.0.s8 %v1075
    %v1077 = vlaneseq
    %v1078 = vshrl.u32 %v1077, 7
    %v1079 = vsub.s32 %v1076, %v1078
    %v1080 = vrot.slane %v1066, %v1079
    %v1081 = vsel %vm193, %v1073, 0
    %v1084 = vsel %vm193, %v781, 0
    %v1087 = vsel %vm193, %v782, 0
    %v1090 = vsel %vm193, %v783, 0
    %v1093 = vsel %vm193, %v784, 0
    %v1096 = vsel %vm193, %v785, 0
    %v1099 = vsel %vm193, %v786, 0
    %v1102 = vsel %vm193, %v787, 0
    %v1105 = vsel %vm193, %v788, 0
    %1107 = vmatprep.subr.mxu0 0.0
    %1108 = vmatpush1.xpose.msra.mxu0 %v1084
    %1109 = vmatprep.subr.mxu0 0.0
    %1110 = vmatpush1.xpose.msra.mxu0 %v1087
    %1111 = vmatprep.subr.mxu0 0.0
    %1112 = vmatpush1.xpose.msra.mxu0 %v1090
    %1113 = vmatprep.subr.mxu0 0.0
    %1114 = vmatpush1.xpose.msra.mxu0 %v1093
    %1115 = vmatprep.subr.mxu0 0.0
    %1116 = vmatpush1.xpose.msra.mxu0 %v1096
    %1117 = vmatprep.subr.mxu0 0.0
    %1118 = vmatpush1.xpose.msra.mxu0 %v1099
    %1119 = vmatprep.subr.mxu0 0.0
    %1120 = vmatpush1.xpose.msra.mxu0 %v1102
    %1121 = vmatprep.subr.mxu0 0.0
    %1122 = vmatpush1.xpose.msra.mxu0 %v1105
    %1123 = vmatprep.subr.mxu0 0.0
    %1124 = vmatpush1.xpose.msra.mxu0 0.0
    %1125 = vmatprep.subr.mxu0 0.0
    %1126 = vmatpush1.xpose.msra.mxu0 0.0
    %1127 = vmatprep.subr.mxu0 0.0
    %1128 = vmatpush1.xpose.msra.mxu0 0.0
    %1129 = vmatprep.subr.mxu0 0.0
    %1130 = vmatpush1.xpose.msra.mxu0 0.0
    %1131 = vmatprep.subr.mxu0 0.0
    %1132 = vmatpush1.xpose.msra.mxu0 0.0
    %1133 = vmatprep.subr.mxu0 0.0
    %1134 = vmatpush1.xpose.msra.mxu0 0.0
    %1135 = vmatprep.subr.mxu0 0.0
    %1136 = vmatpush1.xpose.msra.mxu0 0.0
    %1137 = vmatprep.subr.mxu0 0.0
    %1138 = vmatpush1.xpose.msra.mxu0 0.0
    %1139 = vmatprep.subr.mxu0 0.0
    %1140 = vmatpush1.xpose.msra.mxu0 0.0
    %1141 = vmatprep.subr.mxu0 0.0
    %1142 = vmatpush1.xpose.msra.mxu0 0.0
    %1143 = vmatprep.subr.mxu0 0.0
    %1144 = vmatpush1.xpose.msra.mxu0 0.0
    %1145 = vmatprep.subr.mxu0 0.0
    %1146 = vmatpush1.xpose.msra.mxu0 0.0
    %1147 = vmatprep.subr.mxu0 0.0
    %1148 = vmatpush1.xpose.msra.mxu0 0.0
    %1149 = vmatprep.subr.mxu0 0.0
    %1150 = vmatpush1.xpose.msra.mxu0 0.0
    %1151 = vmatprep.subr.mxu0 0.0
    %1152 = vmatpush1.xpose.msra.mxu0 0.0
    %1153 = vmatprep.subr.mxu0 0.0
    %1154 = vmatpush1.xpose.msra.mxu0 0.0
    %1155 = vmatprep.subr.mxu0 0.0
    %1156 = vmatpush1.xpose.msra.mxu0 0.0
    %1157 = vmatprep.subr.mxu0 0.0
    %1158 = vmatpush1.xpose.msra.mxu0 0.0
    %1159 = vmatprep.subr.mxu0 0.0
    %1160 = vmatpush1.xpose.msra.mxu0 0.0
    %1161 = vmatprep.subr.mxu0 0.0
    %1162 = vmatpush1.xpose.msra.mxu0 0.0
    %1163 = vmatprep.subr.mxu0 0.0
    %1164 = vmatpush1.xpose.msra.mxu0 0.0
    %1165 = vmatprep.subr.mxu0 0.0
    %1166 = vmatpush1.xpose.msra.mxu0 0.0
    %1167 = vmatprep.subr.mxu0 0.0
    %1168 = vmatpush1.xpose.msra.mxu0 0.0
    %1169 = vmatprep.subr.mxu0 0.0
    %1170 = vmatpush1.xpose.msra.mxu0 0.0
    %1171 = vmatprep.mubr.f32.mxu0 0.0
    %1172 = vmatmul.mubr.f32.gmra.mrb[0].mxu0 %v1081
    %v1173 = vpop.f32.mrb[0].mxu0
    %v1174 = vadd.f32 0.0, %v1173
    %v1175 = vpop.f32.mrb[0].mxu0
    %1176 = vdwg.mxu0
    %v1177 = vsel %vm193, %v1080, 0
    %v1180 = vsel %vm193, %v789, 0
    %v1183 = vsel %vm193, %v790, 0
    %v1186 = vsel %vm193, %v791, 0
    %v1189 = vsel %vm193, %v792, 0
    %v1192 = vsel %vm193, %v793, 0
    %v1195 = vsel %vm193, %v794, 0
    %v1198 = vsel %vm193, %v795, 0
    %v1201 = vsel %vm193, %v796, 0
    %1203 = vmatprep.subr.mxu0 0.0
    %1204 = vmatpush1.xpose.msra.mxu0 %v1180
    %1205 = vmatprep.subr.mxu0 0.0
    %1206 = vmatpush1.xpose.msra.mxu0 %v1183
    %1207 = vmatprep.subr.mxu0 0.0
    %1208 = vmatpush1.xpose.msra.mxu0 %v1186
    %1209 = vmatprep.subr.mxu0 0.0
    %1210 = vmatpush1.xpose.msra.mxu0 %v1189
    %1211 = vmatprep.subr.mxu0 0.0
    %1212 = vmatpush1.xpose.msra.mxu0 %v1192
    %1213 = vmatprep.subr.mxu0 0.0
    %1214 = vmatpush1.xpose.msra.mxu0 %v1195
    %1215 = vmatprep.subr.mxu0 0.0
    %1216 = vmatpush1.xpose.msra.mxu0 %v1198
    %1217 = vmatprep.subr.mxu0 0.0
    %1218 = vmatpush1.xpose.msra.mxu0 %v1201
    %1219 = vmatprep.subr.mxu0 0.0
    %1220 = vmatpush1.xpose.msra.mxu0 0.0
    %1221 = vmatprep.subr.mxu0 0.0
    %1222 = vmatpush1.xpose.msra.mxu0 0.0
    %1223 = vmatprep.subr.mxu0 0.0
    %1224 = vmatpush1.xpose.msra.mxu0 0.0
    %1225 = vmatprep.subr.mxu0 0.0
    %1226 = vmatpush1.xpose.msra.mxu0 0.0
    %1227 = vmatprep.subr.mxu0 0.0
    %1228 = vmatpush1.xpose.msra.mxu0 0.0
    %1229 = vmatprep.subr.mxu0 0.0
    %1230 = vmatpush1.xpose.msra.mxu0 0.0
    %1231 = vmatprep.subr.mxu0 0.0
    %1232 = vmatpush1.xpose.msra.mxu0 0.0
    %1233 = vmatprep.subr.mxu0 0.0
    %1234 = vmatpush1.xpose.msra.mxu0 0.0
    %1235 = vmatprep.subr.mxu0 0.0
    %1236 = vmatpush1.xpose.msra.mxu0 0.0
    %1237 = vmatprep.subr.mxu0 0.0
    %1238 = vmatpush1.xpose.msra.mxu0 0.0
    %1239 = vmatprep.subr.mxu0 0.0
    %1240 = vmatpush1.xpose.msra.mxu0 0.0
    %1241 = vmatprep.subr.mxu0 0.0
    %1242 = vmatpush1.xpose.msra.mxu0 0.0
    %1243 = vmatprep.subr.mxu0 0.0
    %1244 = vmatpush1.xpose.msra.mxu0 0.0
    %1245 = vmatprep.subr.mxu0 0.0
    %1246 = vmatpush1.xpose.msra.mxu0 0.0
    %1247 = vmatprep.subr.mxu0 0.0
    %1248 = vmatpush1.xpose.msra.mxu0 0.0
    %1249 = vmatprep.subr.mxu0 0.0
    %1250 = vmatpush1.xpose.msra.mxu0 0.0
    %1251 = vmatprep.subr.mxu0 0.0
    %1252 = vmatpush1.xpose.msra.mxu0 0.0
    %1253 = vmatprep.subr.mxu0 0.0
    %1254 = vmatpush1.xpose.msra.mxu0 0.0
    %1255 = vmatprep.subr.mxu0 0.0
    %1256 = vmatpush1.xpose.msra.mxu0 0.0
    %1257 = vmatprep.subr.mxu0 0.0
    %1258 = vmatpush1.xpose.msra.mxu0 0.0
    %1259 = vmatprep.subr.mxu0 0.0
    %1260 = vmatpush1.xpose.msra.mxu0 0.0
    %1261 = vmatprep.subr.mxu0 0.0
    %1262 = vmatpush1.xpose.msra.mxu0 0.0
    %1263 = vmatprep.subr.mxu0 0.0
    %1264 = vmatpush1.xpose.msra.mxu0 0.0
    %1265 = vmatprep.subr.mxu0 0.0
    %1266 = vmatpush1.xpose.msra.mxu0 0.0
    %1267 = vmatprep.mubr.f32.mxu0 0.0
    %1268 = vmatmul.mubr.f32.gmra.mrb[0].mxu0 %v1177
    %v1269 = vpop.f32.mrb[0].mxu0
    %v1270 = vadd.f32 0.0, %v1269
    %v1271 = vpop.f32.mrb[0].mxu0
    %1272 = vdwg.mxu0
    %v1273 = vmul.f32 %v1174, 0.015625
    %v1274 = vmul.f32 %v1270, 0.015625
    %v1275 = vlaneseq
    %v1276 = vshrl.u32 %v1275, 7
    %v1277 = vsub.s32 0, %v1276
    %v1278 = vrot.slane %v1073, %v1277
    %v1279 = vlaneseq
    %v1280 = vshrl.u32 %v1279, 7
    %v1281 = vsub.s32 0, %v1280
    %v1282 = vrot.slane %v1080, %v1281
    %v1285 = vmul.f32 %v781, %v1278
    %v1286 = vmul.f32 %v782, %v1278
    %v1287 = vmul.f32 %v783, %v1278
    %v1288 = vmul.f32 %v784, %v1278
    %v1289 = vmul.f32 %v785, %v1278
    %v1290 = vmul.f32 %v786, %v1278
    %v1291 = vmul.f32 %v787, %v1278
    %v1292 = vmul.f32 %v788, %v1278
    %v1293 = vmul.f32 %v789, %v1282
    %v1294 = vmul.f32 %v790, %v1282
    %v1295 = vmul.f32 %v791, %v1282
    %v1296 = vmul.f32 %v792, %v1282
    %v1297 = vmul.f32 %v793, %v1282
    %v1298 = vmul.f32 %v794, %v1282
    %v1299 = vmul.f32 %v795, %v1282
    %v1300 = vmul.f32 %v796, %v1282
    %v1301 = vpack.c.bf16 %v1286, %v1285
    %v1302 = vpack.c.bf16 %v1288, %v1287
    %v1303 = vpack.c.bf16 %v1290, %v1289
    %v1304 = vpack.c.bf16 %v1292, %v1291
    %v1305 = vpack.c.bf16 %v1294, %v1293
    %v1306 = vpack.c.bf16 %v1296, %v1295
    %v1307 = vpack.c.bf16 %v1298, %v1297
    %v1308 = vpack.c.bf16 %v1300, %v1299
    %v1317 = vunpack.c.l.b16 %v1301
    %v1318 = vunpack.c.h.b16 %v1301
    %v1319 = vunpack.c.l.b16 %v1302
    %v1320 = vunpack.c.h.b16 %v1302
    %v1321 = vunpack.c.l.b16 %v1303
    %v1322 = vunpack.c.h.b16 %v1303
    %v1323 = vunpack.c.l.b16 %v1304
    %v1324 = vunpack.c.h.b16 %v1304
    %v1325 = vunpack.c.l.b16 %v1305
    %v1326 = vunpack.c.h.b16 %v1305
    %v1327 = vunpack.c.l.b16 %v1306
    %v1328 = vunpack.c.h.b16 %v1306
    %v1329 = vunpack.c.l.b16 %v1307
    %v1330 = vunpack.c.h.b16 %v1307
    %v1331 = vunpack.c.l.b16 %v1308
    %v1332 = vunpack.c.h.b16 %v1308
    %v1333 = vpack.c.b16 %v1317, %v1317
    %v1334 = vpack.c.b16 %v1318, %v1318
    %v1335 = vpack.c.b16 %v1319, %v1319
    %v1336 = vpack.c.b16 %v1320, %v1320
    %v1337 = vpack.c.b16 %v1321, %v1321
    %v1338 = vpack.c.b16 %v1322, %v1322
    %v1339 = vpack.c.b16 %v1323, %v1323
    %v1340 = vpack.c.b16 %v1324, %v1324
    %v1341 = vpack.c.b16 %v1325, %v1325
    %v1342 = vpack.c.b16 %v1326, %v1326
    %v1343 = vpack.c.b16 %v1327, %v1327
    %v1344 = vpack.c.b16 %v1328, %v1328
    %v1345 = vpack.c.b16 %v1329, %v1329
    %v1346 = vpack.c.b16 %v1330, %v1330
    %v1347 = vpack.c.b16 %v1331, %v1331
    %v1348 = vpack.c.b16 %v1332, %v1332
    %vm1365 = vcmask 519168
    %1366 = vst.msk [vmem:[#allocation18] sm:$0xf] %vm1365, %v1333
    %1367 = vst.msk [vmem:[#allocation18 + $0x4] sm:$0xf] %vm1365, %v1334
    %1368 = vst.msk [vmem:[#allocation18 + $0x8] sm:$0xf] %vm1365, %v1335
    %1369 = vst.msk [vmem:[#allocation18 + $0xc] sm:$0xf] %vm1365, %v1336
    %1370 = vst.msk [vmem:[#allocation18 + $0x10] sm:$0xf] %vm1365, %v1337
    %1371 = vst.msk [vmem:[#allocation18 + $0x14] sm:$0xf] %vm1365, %v1338
    %1372 = vst.msk [vmem:[#allocation18 + $0x18] sm:$0xf] %vm1365, %v1339
    %1373 = vst.msk [vmem:[#allocation18 + $0x1c] sm:$0xf] %vm1365, %v1340
    %1374 = vst.msk [vmem:[#allocation18 + $0x20] sm:$0xf] %vm1365, %v1341
    %1375 = vst.msk [vmem:[#allocation18 + $0x24] sm:$0xf] %vm1365, %v1342
    %1376 = vst.msk [vmem:[#allocation18 + $0x28] sm:$0xf] %vm1365, %v1343
    %1377 = vst.msk [vmem:[#allocation18 + $0x2c] sm:$0xf] %vm1365, %v1344
    %1378 = vst.msk [vmem:[#allocation18 + $0x30] sm:$0xf] %vm1365, %v1345
    %1379 = vst.msk [vmem:[#allocation18 + $0x34] sm:$0xf] %vm1365, %v1346
    %1380 = vst.msk [vmem:[#allocation18 + $0x38] sm:$0xf] %vm1365, %v1347
    %1381 = vst.msk [vmem:[#allocation18 + $0x3c] sm:$0xf] %vm1365, %v1348
    %v1384 = vrot.slane %v1274, 7
    %v1385 = vsel %vm417, %v1384, %v1273
    %vm1387 = vcmask 517120
    %1388 = vst.msk [vmem:[#allocation16] sm:$0x3] %vm1387, %v1385
    %v1389 = vpack.c.bf16 %v1273, %v1273
    %v1390 = vpack.c.bf16 %v1274, %v1274
    %v1391 = vld [vmem:[#allocation9] sm:$0xff]
    %v1392 = vld [vmem:[#allocation9 + $0x8] sm:$0xff]
    %v1393 = vld [vmem:[#allocation9 + $0x10] sm:$0xff]
    %v1394 = vld [vmem:[#allocation9 + $0x18] sm:$0xff]
    %v1395 = vld [vmem:[#allocation9 + $0x20] sm:$0xff]
    %v1396 = vld [vmem:[#allocation9 + $0x28] sm:$0xff]
    %v1397 = vld [vmem:[#allocation9 + $0x30] sm:$0xff]
    %v1398 = vld [vmem:[#allocation9 + $0x38] sm:$0xff]
    %v1399 = vld [vmem:[#allocation9 + $0x40] sm:$0xff]
    %v1400 = vld [vmem:[#allocation9 + $0x48] sm:$0xff]
    %v1401 = vld [vmem:[#allocation9 + $0x50] sm:$0xff]
    %v1402 = vld [vmem:[#allocation9 + $0x58] sm:$0xff]
    %v1403 = vld [vmem:[#allocation9 + $0x60] sm:$0xff]
    %v1404 = vld [vmem:[#allocation9 + $0x68] sm:$0xff]
    %v1405 = vld [vmem:[#allocation9 + $0x70] sm:$0xff]
    %v1406 = vld [vmem:[#allocation9 + $0x78] sm:$0xff]
    %v1407 = vld [vmem:[#allocation9 + $0x80] sm:$0xff]
    %v1408 = vld [vmem:[#allocation9 + $0x88] sm:$0xff]
    %v1409 = vld [vmem:[#allocation9 + $0x90] sm:$0xff]
    %v1410 = vld [vmem:[#allocation9 + $0x98] sm:$0xff]
    %v1411 = vld [vmem:[#allocation9 + $0xa0] sm:$0xff]
    %v1412 = vld [vmem:[#allocation9 + $0xa8] sm:$0xff]
    %v1413 = vld [vmem:[#allocation9 + $0xb0] sm:$0xff]
    %v1414 = vld [vmem:[#allocation9 + $0xb8] sm:$0xff]
    %v1415 = vld [vmem:[#allocation9 + $0xc0] sm:$0xff]
    %v1416 = vld [vmem:[#allocation9 + $0xc8] sm:$0xff]
    %v1417 = vld [vmem:[#allocation9 + $0xd0] sm:$0xff]
    %v1418 = vld [vmem:[#allocation9 + $0xd8] sm:$0xff]
    %v1419 = vld [vmem:[#allocation9 + $0xe0] sm:$0xff]
    %v1420 = vld [vmem:[#allocation9 + $0xe8] sm:$0xff]
    %v1421 = vld [vmem:[#allocation9 + $0xf0] sm:$0xff]
    %v1422 = vld [vmem:[#allocation9 + $0xf8] sm:$0xff]
    %v1423 = vld [vmem:[#allocation9 + $0x100] sm:$0xff]
    %v1424 = vld [vmem:[#allocation9 + $0x108] sm:$0xff]
    %v1425 = vld [vmem:[#allocation9 + $0x110] sm:$0xff]
    %v1426 = vld [vmem:[#allocation9 + $0x118] sm:$0xff]
    %v1427 = vld [vmem:[#allocation9 + $0x120] sm:$0xff]
    %v1428 = vld [vmem:[#allocation9 + $0x128] sm:$0xff]
    %v1429 = vld [vmem:[#allocation9 + $0x130] sm:$0xff]
    %v1430 = vld [vmem:[#allocation9 + $0x138] sm:$0xff]
    %v1431 = vld [vmem:[#allocation9 + $0x140] sm:$0xff]
    %v1432 = vld [vmem:[#allocation9 + $0x148] sm:$0xff]
    %v1433 = vld [vmem:[#allocation9 + $0x150] sm:$0xff]
    %v1434 = vld [vmem:[#allocation9 + $0x158] sm:$0xff]
    %v1435 = vld [vmem:[#allocation9 + $0x160] sm:$0xff]
    %v1436 = vld [vmem:[#allocation9 + $0x168] sm:$0xff]
    %v1437 = vld [vmem:[#allocation9 + $0x170] sm:$0xff]
    %v1438 = vld [vmem:[#allocation9 + $0x178] sm:$0xff]
    %v1439 = vld [vmem:[#allocation9 + $0x180] sm:$0xff]
    %v1440 = vld [vmem:[#allocation9 + $0x188] sm:$0xff]
    %v1441 = vld [vmem:[#allocation9 + $0x190] sm:$0xff]
    %v1442 = vld [vmem:[#allocation9 + $0x198] sm:$0xff]
    %v1443 = vld [vmem:[#allocation9 + $0x1a0] sm:$0xff]
    %v1444 = vld [vmem:[#allocation9 + $0x1a8] sm:$0xff]
    %v1445 = vld [vmem:[#allocation9 + $0x1b0] sm:$0xff]
    %v1446 = vld [vmem:[#allocation9 + $0x1b8] sm:$0xff]
    %v1447 = vld [vmem:[#allocation9 + $0x1c0] sm:$0xff]
    %v1448 = vld [vmem:[#allocation9 + $0x1c8] sm:$0xff]
    %v1449 = vld [vmem:[#allocation9 + $0x1d0] sm:$0xff]
    %v1450 = vld [vmem:[#allocation9 + $0x1d8] sm:$0xff]
    %v1451 = vld [vmem:[#allocation9 + $0x1e0] sm:$0xff]
    %v1452 = vld [vmem:[#allocation9 + $0x1e8] sm:$0xff]
    %v1453 = vld [vmem:[#allocation9 + $0x1f0] sm:$0xff]
    %v1454 = vld [vmem:[#allocation9 + $0x1f8] sm:$0xff]
    %v1455 = vld [vmem:[%s9] sm:$0xff]
    %v1456 = vld [vmem:[%s9 + $0x8] sm:$0xff]
    %v1459 = vlaneseq
    %v1460 = vshrl.u32 %v1459, 7
    %v1461 = vsub.s32 0, %v1460
    %v1462 = vrot.slane %v1455, %v1461
    %v1463 = vlaneseq
    %v1464 = vshrl.u32 %v1463, 7
    %v1465 = vsub.s32 1, %v1464
    %v1466 = vrot.slane %v1455, %v1465
    %v1467 = vlaneseq
    %v1468 = vshrl.u32 %v1467, 7
    %v1469 = vsub.s32 2, %v1468
    %v1470 = vrot.slane %v1455, %v1469
    %v1471 = vlaneseq
    %v1472 = vshrl.u32 %v1471, 7
    %v1473 = vsub.s32 3, %v1472
    %v1474 = vrot.slane %v1455, %v1473
    %v1475 = vlaneseq
    %v1476 = vshrl.u32 %v1475, 7
    %v1477 = vsub.s32 4, %v1476
    %v1478 = vrot.slane %v1455, %v1477
    %v1479 = vlaneseq
    %v1480 = vshrl.u32 %v1479, 7
    %v1481 = vsub.s32 5, %v1480
    %v1482 = vrot.slane %v1455, %v1481
    %v1483 = vlaneseq
    %v1484 = vshrl.u32 %v1483, 7
    %v1485 = vsub.s32 6, %v1484
    %v1486 = vrot.slane %v1455, %v1485
    %v1487 = vlaneseq
    %v1488 = vshrl.u32 %v1487, 7
    %v1489 = vsub.s32 7, %v1488
    %v1490 = vrot.slane %v1455, %v1489
    %v1491 = vlaneseq
    %v1492 = vshrl.u32 %v1491, 7
    %v1493 = vsub.s32 0, %v1492
    %v1494 = vrot.slane %v1456, %v1493
    %v1495 = vlaneseq
    %v1496 = vshrl.u32 %v1495, 7
    %v1497 = vsub.s32 1, %v1496
    %v1498 = vrot.slane %v1456, %v1497
    %v1499 = vlaneseq
    %v1500 = vshrl.u32 %v1499, 7
    %v1501 = vsub.s32 2, %v1500
    %v1502 = vrot.slane %v1456, %v1501
    %v1503 = vlaneseq
    %v1504 = vshrl.u32 %v1503, 7
    %v1505 = vsub.s32 3, %v1504
    %v1506 = vrot.slane %v1456, %v1505
    %v1507 = vlaneseq
    %v1508 = vshrl.u32 %v1507, 7
    %v1509 = vsub.s32 4, %v1508
    %v1510 = vrot.slane %v1456, %v1509
    %v1511 = vlaneseq
    %v1512 = vshrl.u32 %v1511, 7
    %v1513 = vsub.s32 5, %v1512
    %v1514 = vrot.slane %v1456, %v1513
    %v1515 = vlaneseq
    %v1516 = vshrl.u32 %v1515, 7
    %v1517 = vsub.s32 6, %v1516
    %v1518 = vrot.slane %v1456, %v1517
    %v1519 = vlaneseq
    %v1520 = vshrl.u32 %v1519, 7
    %v1521 = vsub.s32 7, %v1520
    %v1522 = vrot.slane %v1456, %v1521
    %v1541 = vunpack.c.l.b16 %v1389
    %v1542 = vunpack.c.l.b16 %v1390
    %v1543 = vrot.slane %v1542, 7
    %v1544 = vsel %vm417, %v1543, %v1541
    %v1545 = vpack.c.b16 %v1544, %v1544
    %v1610 = vunpack.c.l.b16 %v1391
    %v1611 = vunpack.c.h.b16 %v1391
    %v1612 = vunpack.c.l.b16 %v1392
    %v1613 = vunpack.c.h.b16 %v1392
    %v1614 = vunpack.c.l.b16 %v1393
    %v1615 = vunpack.c.h.b16 %v1393
    %v1616 = vunpack.c.l.b16 %v1394
    %v1617 = vunpack.c.h.b16 %v1394
    %v1618 = vunpack.c.l.b16 %v1395
    %v1619 = vunpack.c.h.b16 %v1395
    %v1620 = vunpack.c.l.b16 %v1396
    %v1621 = vunpack.c.h.b16 %v1396
    %v1622 = vunpack.c.l.b16 %v1397
    %v1623 = vunpack.c.h.b16 %v1397
    %v1624 = vunpack.c.l.b16 %v1398
    %v1625 = vunpack.c.h.b16 %v1398
    %v1626 = vunpack.c.l.b16 %v1399
    %v1627 = vunpack.c.h.b16 %v1399
    %v1628 = vunpack.c.l.b16 %v1400
    %v1629 = vunpack.c.h.b16 %v1400
    %v1630 = vunpack.c.l.b16 %v1401
    %v1631 = vunpack.c.h.b16 %v1401
    %v1632 = vunpack.c.l.b16 %v1402
    %v1633 = vunpack.c.h.b16 %v1402
    %v1634 = vunpack.c.l.b16 %v1403
    %v1635 = vunpack.c.h.b16 %v1403
    %v1636 = vunpack.c.l.b16 %v1404
    %v1637 = vunpack.c.h.b16 %v1404
    %v1638 = vunpack.c.l.b16 %v1405
    %v1639 = vunpack.c.h.b16 %v1405
    %v1640 = vunpack.c.l.b16 %v1406
    %v1641 = vunpack.c.h.b16 %v1406
    %v1642 = vunpack.c.l.b16 %v1407
    %v1643 = vunpack.c.h.b16 %v1407
    %v1644 = vunpack.c.l.b16 %v1408
    %v1645 = vunpack.c.h.b16 %v1408
    %v1646 = vunpack.c.l.b16 %v1409
    %v1647 = vunpack.c.h.b16 %v1409
    %v1648 = vunpack.c.l.b16 %v1410
    %v1649 = vunpack.c.h.b16 %v1410
    %v1650 = vunpack.c.l.b16 %v1411
    %v1651 = vunpack.c.h.b16 %v1411
    %v1652 = vunpack.c.l.b16 %v1412
    %v1653 = vunpack.c.h.b16 %v1412
    %v1654 = vunpack.c.l.b16 %v1413
    %v1655 = vunpack.c.h.b16 %v1413
    %v1656 = vunpack.c.l.b16 %v1414
    %v1657 = vunpack.c.h.b16 %v1414
    %v1658 = vunpack.c.l.b16 %v1415
    %v1659 = vunpack.c.h.b16 %v1415
    %v1660 = vunpack.c.l.b16 %v1416
    %v1661 = vunpack.c.h.b16 %v1416
    %v1662 = vunpack.c.l.b16 %v1417
    %v1663 = vunpack.c.h.b16 %v1417
    %v1664 = vunpack.c.l.b16 %v1418
    %v1665 = vunpack.c.h.b16 %v1418
    %v1666 = vunpack.c.l.b16 %v1419
    %v1667 = vunpack.c.h.b16 %v1419
    %v1668 = vunpack.c.l.b16 %v1420
    %v1669 = vunpack.c.h.b16 %v1420
    %v1670 = vunpack.c.l.b16 %v1421
    %v1671 = vunpack.c.h.b16 %v1421
    %v1672 = vunpack.c.l.b16 %v1422
    %v1673 = vunpack.c.h.b16 %v1422
    %v1674 = vunpack.c.l.b16 %v1423
    %v1675 = vunpack.c.h.b16 %v1423
    %v1676 = vunpack.c.l.b16 %v1424
    %v1677 = vunpack.c.h.b16 %v1424
    %v1678 = vunpack.c.l.b16 %v1425
    %v1679 = vunpack.c.h.b16 %v1425
    %v1680 = vunpack.c.l.b16 %v1426
    %v1681 = vunpack.c.h.b16 %v1426
    %v1682 = vunpack.c.l.b16 %v1427
    %v1683 = vunpack.c.h.b16 %v1427
    %v1684 = vunpack.c.l.b16 %v1428
    %v1685 = vunpack.c.h.b16 %v1428
    %v1686 = vunpack.c.l.b16 %v1429
    %v1687 = vunpack.c.h.b16 %v1429
    %v1688 = vunpack.c.l.b16 %v1430
    %v1689 = vunpack.c.h.b16 %v1430
    %v1690 = vunpack.c.l.b16 %v1431
    %v1691 = vunpack.c.h.b16 %v1431
    %v1692 = vunpack.c.l.b16 %v1432
    %v1693 = vunpack.c.h.b16 %v1432
    %v1694 = vunpack.c.l.b16 %v1433
    %v1695 = vunpack.c.h.b16 %v1433
    %v1696 = vunpack.c.l.b16 %v1434
    %v1697 = vunpack.c.h.b16 %v1434
    %v1698 = vunpack.c.l.b16 %v1435
    %v1699 = vunpack.c.h.b16 %v1435
    %v1700 = vunpack.c.l.b16 %v1436
    %v1701 = vunpack.c.h.b16 %v1436
    %v1702 = vunpack.c.l.b16 %v1437
    %v1703 = vunpack.c.h.b16 %v1437
    %v1704 = vunpack.c.l.b16 %v1438
    %v1705 = vunpack.c.h.b16 %v1438
    %v1706 = vunpack.c.l.b16 %v1439
    %v1707 = vunpack.c.h.b16 %v1439
    %v1708 = vunpack.c.l.b16 %v1440
    %v1709 = vunpack.c.h.b16 %v1440
    %v1710 = vunpack.c.l.b16 %v1441
    %v1711 = vunpack.c.h.b16 %v1441
    %v1712 = vunpack.c.l.b16 %v1442
    %v1713 = vunpack.c.h.b16 %v1442
    %v1714 = vunpack.c.l.b16 %v1443
    %v1715 = vunpack.c.h.b16 %v1443
    %v1716 = vunpack.c.l.b16 %v1444
    %v1717 = vunpack.c.h.b16 %v1444
    %v1718 = vunpack.c.l.b16 %v1445
    %v1719 = vunpack.c.h.b16 %v1445
    %v1720 = vunpack.c.l.b16 %v1446
    %v1721 = vunpack.c.h.b16 %v1446
    %v1722 = vunpack.c.l.b16 %v1447
    %v1723 = vunpack.c.h.b16 %v1447
    %v1724 = vunpack.c.l.b16 %v1448
    %v1725 = vunpack.c.h.b16 %v1448
    %v1726 = vunpack.c.l.b16 %v1449
    %v1727 = vunpack.c.h.b16 %v1449
    %v1728 = vunpack.c.l.b16 %v1450
    %v1729 = vunpack.c.h.b16 %v1450
    %v1730 = vunpack.c.l.b16 %v1451
    %v1731 = vunpack.c.h.b16 %v1451
    %v1732 = vunpack.c.l.b16 %v1452
    %v1733 = vunpack.c.h.b16 %v1452
    %v1734 = vunpack.c.l.b16 %v1453
    %v1735 = vunpack.c.h.b16 %v1453
    %v1736 = vunpack.c.l.b16 %v1454
    %v1737 = vunpack.c.h.b16 %v1454
    %v1738 = vpack.c.b16 %v1626, %v1610
    %v1739 = vpack.c.b16 %v1627, %v1611
    %v1740 = vpack.c.b16 %v1628, %v1612
    %v1741 = vpack.c.b16 %v1629, %v1613
    %v1742 = vpack.c.b16 %v1630, %v1614
    %v1743 = vpack.c.b16 %v1631, %v1615
    %v1744 = vpack.c.b16 %v1632, %v1616
    %v1745 = vpack.c.b16 %v1633, %v1617
    %v1746 = vpack.c.b16 %v1634, %v1618
    %v1747 = vpack.c.b16 %v1635, %v1619
    %v1748 = vpack.c.b16 %v1636, %v1620
    %v1749 = vpack.c.b16 %v1637, %v1621
    %v1750 = vpack.c.b16 %v1638, %v1622
    %v1751 = vpack.c.b16 %v1639, %v1623
    %v1752 = vpack.c.b16 %v1640, %v1624
    %v1753 = vpack.c.b16 %v1641, %v1625
    %v1754 = vpack.c.b16 %v1658, %v1642
    %v1755 = vpack.c.b16 %v1659, %v1643
    %v1756 = vpack.c.b16 %v1660, %v1644
    %v1757 = vpack.c.b16 %v1661, %v1645
    %v1758 = vpack.c.b16 %v1662, %v1646
    %v1759 = vpack.c.b16 %v1663, %v1647
    %v1760 = vpack.c.b16 %v1664, %v1648
    %v1761 = vpack.c.b16 %v1665, %v1649
    %v1762 = vpack.c.b16 %v1666, %v1650
    %v1763 = vpack.c.b16 %v1667, %v1651
    %v1764 = vpack.c.b16 %v1668, %v1652
    %v1765 = vpack.c.b16 %v1669, %v1653
    %v1766 = vpack.c.b16 %v1670, %v1654
    %v1767 = vpack.c.b16 %v1671, %v1655
    %v1768 = vpack.c.b16 %v1672, %v1656
    %v1769 = vpack.c.b16 %v1673, %v1657
    %v1770 = vpack.c.b16 %v1690, %v1674
    %v1771 = vpack.c.b16 %v1691, %v1675
    %v1772 = vpack.c.b16 %v1692, %v1676
    %v1773 = vpack.c.b16 %v1693, %v1677
    %v1774 = vpack.c.b16 %v1694, %v1678
    %v1775 = vpack.c.b16 %v1695, %v1679
    %v1776 = vpack.c.b16 %v1696, %v1680
    %v1777 = vpack.c.b16 %v1697, %v1681
    %v1778 = vpack.c.b16 %v1698, %v1682
    %v1779 = vpack.c.b16 %v1699, %v1683
    %v1780 = vpack.c.b16 %v1700, %v1684
    %v1781 = vpack.c.b16 %v1701, %v1685
    %v1782 = vpack.c.b16 %v1702, %v1686
    %v1783 = vpack.c.b16 %v1703, %v1687
    %v1784 = vpack.c.b16 %v1704, %v1688
    %v1785 = vpack.c.b16 %v1705, %v1689
    %v1786 = vpack.c.b16 %v1722, %v1706
    %v1787 = vpack.c.b16 %v1723, %v1707
    %v1788 = vpack.c.b16 %v1724, %v1708
    %v1789 = vpack.c.b16 %v1725, %v1709
    %v1790 = vpack.c.b16 %v1726, %v1710
    %v1791 = vpack.c.b16 %v1727, %v1711
    %v1792 = vpack.c.b16 %v1728, %v1712
    %v1793 = vpack.c.b16 %v1729, %v1713
    %v1794 = vpack.c.b16 %v1730, %v1714
    %v1795 = vpack.c.b16 %v1731, %v1715
    %v1796 = vpack.c.b16 %v1732, %v1716
    %v1797 = vpack.c.b16 %v1733, %v1717
    %v1798 = vpack.c.b16 %v1734, %v1718
    %v1799 = vpack.c.b16 %v1735, %v1719
    %v1800 = vpack.c.b16 %v1736, %v1720
    %v1801 = vpack.c.b16 %v1737, %v1721
    %v1867 = vsel %vm193, %v1545, 0
    %1869 = vmatprep.subr.bf16.mxu0 %v1739
    %1870 = vmatpush1.bf16.msra.mxu0 %v1738
    %1871 = vmatprep.subr.bf16.mxu0 %v1755
    %1872 = vmatpush1.bf16.msra.mxu0 %v1754
    %1873 = vmatprep.subr.bf16.mxu0 %v1771
    %1874 = vmatpush1.bf16.msra.mxu0 %v1770
    %1875 = vmatprep.subr.bf16.mxu0 %v1787
    %1876 = vmatpush1.bf16.msra.mxu0 %v1786
    %1877 = vmatprep.subr.bf16.mxu0 0
    %1878 = vmatpush1.bf16.msra.mxu0 0
    %1879 = vmatprep.subr.bf16.mxu0 0
    %1880 = vmatpush1.bf16.msra.mxu0 0
    %1881 = vmatprep.subr.bf16.mxu0 0
    %1882 = vmatpush1.bf16.msra.mxu0 0
    %1883 = vmatprep.subr.bf16.mxu0 0
    %1884 = vmatpush1.bf16.msra.mxu0 0
    %1885 = vmatprep.subr.bf16.mxu0 0
    %1886 = vmatpush1.bf16.msra.mxu0 0
    %1887 = vmatprep.subr.bf16.mxu0 0
    %1888 = vmatpush1.bf16.msra.mxu0 0
    %1889 = vmatprep.subr.bf16.mxu0 0
    %1890 = vmatpush1.bf16.msra.mxu0 0
    %1891 = vmatprep.subr.bf16.mxu0 0
    %1892 = vmatpush1.bf16.msra.mxu0 0
    %1893 = vmatprep.subr.bf16.mxu0 0
    %1894 = vmatpush1.bf16.msra.mxu0 0
    %1895 = vmatprep.subr.bf16.mxu0 0
    %1896 = vmatpush1.bf16.msra.mxu0 0
    %1897 = vmatprep.subr.bf16.mxu0 0
    %1898 = vmatpush1.bf16.msra.mxu0 0
    %1899 = vmatprep.subr.bf16.mxu0 0
    %1900 = vmatpush1.bf16.msra.mxu0 0
    %1901 = vmatprep.mubr.bf16.mxu0 0
    %1902 = vmatmul.mubr.bf16.gmra.mrb[0].mxu0 %v1867
    %v1903 = vpop.f32.mrb[0].mxu0
    %v1904 = vadd.f32 %v1462, %v1903
    %v1905 = vpop.f32.mrb[0].mxu0
    %v1906 = vadd.f32 %v1466, %v1905
    %v1907 = vpop.f32.mrb[0].mxu0
    %v1908 = vpop.f32.mrb[0].mxu0
    %1909 = vdwg.mxu0
    %1910 = vmatprep.subr.bf16.mxu0 %v1741
    %1911 = vmatpush1.bf16.msra.mxu0 %v1740
    %1912 = vmatprep.subr.bf16.mxu0 %v1757
    %1913 = vmatpush1.bf16.msra.mxu0 %v1756
    %1914 = vmatprep.subr.bf16.mxu0 %v1773
    %1915 = vmatpush1.bf16.msra.mxu0 %v1772
    %1916 = vmatprep.subr.bf16.mxu0 %v1789
    %1917 = vmatpush1.bf16.msra.mxu0 %v1788
    %1918 = vmatprep.subr.bf16.mxu0 0
    %1919 = vmatpush1.bf16.msra.mxu0 0
    %1920 = vmatprep.subr.bf16.mxu0 0
    %1921 = vmatpush1.bf16.msra.mxu0 0
    %1922 = vmatprep.subr.bf16.mxu0 0
    %1923 = vmatpush1.bf16.msra.mxu0 0
    %1924 = vmatprep.subr.bf16.mxu0 0
    %1925 = vmatpush1.bf16.msra.mxu0 0
    %1926 = vmatprep.subr.bf16.mxu0 0
    %1927 = vmatpush1.bf16.msra.mxu0 0
    %1928 = vmatprep.subr.bf16.mxu0 0
    %1929 = vmatpush1.bf16.msra.mxu0 0
    %1930 = vmatprep.subr.bf16.mxu0 0
    %1931 = vmatpush1.bf16.msra.mxu0 0
    %1932 = vmatprep.subr.bf16.mxu0 0
    %1933 = vmatpush1.bf16.msra.mxu0 0
    %1934 = vmatprep.subr.bf16.mxu0 0
    %1935 = vmatpush1.bf16.msra.mxu0 0
    %1936 = vmatprep.subr.bf16.mxu0 0
    %1937 = vmatpush1.bf16.msra.mxu0 0
    %1938 = vmatprep.subr.bf16.mxu0 0
    %1939 = vmatpush1.bf16.msra.mxu0 0
    %1940 = vmatprep.subr.bf16.mxu0 0
    %1941 = vmatpush1.bf16.msra.mxu0 0
    %1942 = vmatprep.mubr.bf16.mxu0 0
    %1943 = vmatmul.mubr.bf16.gmra.mrb[0].mxu0 %v1867
    %v1944 = vpop.f32.mrb[0].mxu0
    %v1945 = vadd.f32 %v1470, %v1944
    %v1946 = vpop.f32.mrb[0].mxu0
    %v1947 = vadd.f32 %v1474, %v1946
    %v1948 = vpop.f32.mrb[0].mxu0
    %v1949 = vpop.f32.mrb[0].mxu0
    %1950 = vdwg.mxu0
    %1951 = vmatprep.subr.bf16.mxu0 %v1743
    %1952 = vmatpush1.bf16.msra.mxu0 %v1742
    %1953 = vmatprep.subr.bf16.mxu0 %v1759
    %1954 = vmatpush1.bf16.msra.mxu0 %v1758
    %1955 = vmatprep.subr.bf16.mxu0 %v1775
    %1956 = vmatpush1.bf16.msra.mxu0 %v1774
    %1957 = vmatprep.subr.bf16.mxu0 %v1791
    %1958 = vmatpush1.bf16.msra.mxu0 %v1790
    %1959 = vmatprep.subr.bf16.mxu0 0
    %1960 = vmatpush1.bf16.msra.mxu0 0
    %1961 = vmatprep.subr.bf16.mxu0 0
    %1962 = vmatpush1.bf16.msra.mxu0 0
    %1963 = vmatprep.subr.bf16.mxu0 0
    %1964 = vmatpush1.bf16.msra.mxu0 0
    %1965 = vmatprep.subr.bf16.mxu0 0
    %1966 = vmatpush1.bf16.msra.mxu0 0
    %1967 = vmatprep.subr.bf16.mxu0 0
    %1968 = vmatpush1.bf16.msra.mxu0 0
    %1969 = vmatprep.subr.bf16.mxu0 0
    %1970 = vmatpush1.bf16.msra.mxu0 0
    %1971 = vmatprep.subr.bf16.mxu0 0
    %1972 = vmatpush1.bf16.msra.mxu0 0
    %1973 = vmatprep.subr.bf16.mxu0 0
    %1974 = vmatpush1.bf16.msra.mxu0 0
    %1975 = vmatprep.subr.bf16.mxu0 0
    %1976 = vmatpush1.bf16.msra.mxu0 0
    %1977 = vmatprep.subr.bf16.mxu0 0
    %1978 = vmatpush1.bf16.msra.mxu0 0
    %1979 = vmatprep.subr.bf16.mxu0 0
    %1980 = vmatpush1.bf16.msra.mxu0 0
    %1981 = vmatprep.subr.bf16.mxu0 0
    %1982 = vmatpush1.bf16.msra.mxu0 0
    %1983 = vmatprep.mubr.bf16.mxu0 0
    %1984 = vmatmul.mubr.bf16.gmra.mrb[0].mxu0 %v1867
    %v1985 = vpop.f32.mrb[0].mxu0
    %v1986 = vadd.f32 %v1478, %v1985
    %v1987 = vpop.f32.mrb[0].mxu0
    %v1988 = vadd.f32 %v1482, %v1987
    %v1989 = vpop.f32.mrb[0].mxu0
    %v1990 = vpop.f32.mrb[0].mxu0
    %1991 = vdwg.mxu0
    %1992 = vmatprep.subr.bf16.mxu0 %v1745
    %1993 = vmatpush1.bf16.msra.mxu0 %v1744
    %1994 = vmatprep.subr.bf16.mxu0 %v1761
    %1995 = vmatpush1.bf16.msra.mxu0 %v1760
    %1996 = vmatprep.subr.bf16.mxu0 %v1777
    %1997 = vmatpush1.bf16.msra.mxu0 %v1776
    %1998 = vmatprep.subr.bf16.mxu0 %v1793
    %1999 = vmatpush1.bf16.msra.mxu0 %v1792
    %2000 = vmatprep.subr.bf16.mxu0 0
    %2001 = vmatpush1.bf16.msra.mxu0 0
    %2002 = vmatprep.subr.bf16.mxu0 0
    %2003 = vmatpush1.bf16.msra.mxu0 0
    %2004 = vmatprep.subr.bf16.mxu0 0
    %2005 = vmatpush1.bf16.msra.mxu0 0
    %2006 = vmatprep.subr.bf16.mxu0 0
    %2007 = vmatpush1.bf16.msra.mxu0 0
    %2008 = vmatprep.subr.bf16.mxu0 0
    %2009 = vmatpush1.bf16.msra.mxu0 0
    %2010 = vmatprep.subr.bf16.mxu0 0
    %2011 = vmatpush1.bf16.msra.mxu0 0
    %2012 = vmatprep.subr.bf16.mxu0 0
    %2013 = vmatpush1.bf16.msra.mxu0 0
    %2014 = vmatprep.subr.bf16.mxu0 0
    %2015 = vmatpush1.bf16.msra.mxu0 0
    %2016 = vmatprep.subr.bf16.mxu0 0
    %2017 = vmatpush1.bf16.msra.mxu0 0
    %2018 = vmatprep.subr.bf16.mxu0 0
    %2019 = vmatpush1.bf16.msra.mxu0 0
    %2020 = vmatprep.subr.bf16.mxu0 0
    %2021 = vmatpush1.bf16.msra.mxu0 0
    %2022 = vmatprep.subr.bf16.mxu0 0
    %2023 = vmatpush1.bf16.msra.mxu0 0
    %2024 = vmatprep.mubr.bf16.mxu0 0
    %2025 = vmatmul.mubr.bf16.gmra.mrb[0].mxu0 %v1867
    %v2026 = vpop.f32.mrb[0].mxu0
    %v2027 = vadd.f32 %v1486, %v2026
    %v2028 = vpop.f32.mrb[0].mxu0
    %v2029 = vadd.f32 %v1490, %v2028
    %v2030 = vpop.f32.mrb[0].mxu0
    %v2031 = vpop.f32.mrb[0].mxu0
    %2032 = vdwg.mxu0
    %2033 = vmatprep.subr.bf16.mxu0 %v1747
    %2034 = vmatpush1.bf16.msra.mxu0 %v1746
    %2035 = vmatprep.subr.bf16.mxu0 %v1763
    %2036 = vmatpush1.bf16.msra.mxu0 %v1762
    %2037 = vmatprep.subr.bf16.mxu0 %v1779
    %2038 = vmatpush1.bf16.msra.mxu0 %v1778
    %2039 = vmatprep.subr.bf16.mxu0 %v1795
    %2040 = vmatpush1.bf16.msra.mxu0 %v1794
    %2041 = vmatprep.subr.bf16.mxu0 0
    %2042 = vmatpush1.bf16.msra.mxu0 0
    %2043 = vmatprep.subr.bf16.mxu0 0
    %2044 = vmatpush1.bf16.msra.mxu0 0
    %2045 = vmatprep.subr.bf16.mxu0 0
    %2046 = vmatpush1.bf16.msra.mxu0 0
    %2047 = vmatprep.subr.bf16.mxu0 0
    %2048 = vmatpush1.bf16.msra.mxu0 0
    %2049 = vmatprep.subr.bf16.mxu0 0
    %2050 = vmatpush1.bf16.msra.mxu0 0
    %2051 = vmatprep.subr.bf16.mxu0 0
    %2052 = vmatpush1.bf16.msra.mxu0 0
    %2053 = vmatprep.subr.bf16.mxu0 0
    %2054 = vmatpush1.bf16.msra.mxu0 0
    %2055 = vmatprep.subr.bf16.mxu0 0
    %2056 = vmatpush1.bf16.msra.mxu0 0
    %2057 = vmatprep.subr.bf16.mxu0 0
    %2058 = vmatpush1.bf16.msra.mxu0 0
    %2059 = vmatprep.subr.bf16.mxu0 0
    %2060 = vmatpush1.bf16.msra.mxu0 0
    %2061 = vmatprep.subr.bf16.mxu0 0
    %2062 = vmatpush1.bf16.msra.mxu0 0
    %2063 = vmatprep.subr.bf16.mxu0 0
    %2064 = vmatpush1.bf16.msra.mxu0 0
    %2065 = vmatprep.mubr.bf16.mxu0 0
    %2066 = vmatmul.mubr.bf16.gmra.mrb[0].mxu0 %v1867
    %v2067 = vpop.f32.mrb[0].mxu0
    %v2068 = vadd.f32 %v1494, %v2067
    %v2069 = vpop.f32.mrb[0].mxu0
    %v2070 = vadd.f32 %v1498, %v2069
    %v2071 = vpop.f32.mrb[0].mxu0
    %v2072 = vpop.f32.mrb[0].mxu0
    %2073 = vdwg.mxu0
    %2074 = vmatprep.subr.bf16.mxu0 %v1749
    %2075 = vmatpush1.bf16.msra.mxu0 %v1748
    %2076 = vmatprep.subr.bf16.mxu0 %v1765
    %2077 = vmatpush1.bf16.msra.mxu0 %v1764
    %2078 = vmatprep.subr.bf16.mxu0 %v1781
    %2079 = vmatpush1.bf16.msra.mxu0 %v1780
    %2080 = vmatprep.subr.bf16.mxu0 %v1797
    %2081 = vmatpush1.bf16.msra.mxu0 %v1796
    %2082 = vmatprep.subr.bf16.mxu0 0
    %2083 = vmatpush1.bf16.msra.mxu0 0
    %2084 = vmatprep.subr.bf16.mxu0 0
    %2085 = vmatpush1.bf16.msra.mxu0 0
    %2086 = vmatprep.subr.bf16.mxu0 0
    %2087 = vmatpush1.bf16.msra.mxu0 0
    %2088 = vmatprep.subr.bf16.mxu0 0
    %2089 = vmatpush1.bf16.msra.mxu0 0
    %2090 = vmatprep.subr.bf16.mxu0 0
    %2091 = vmatpush1.bf16.msra.mxu0 0
    %2092 = vmatprep.subr.bf16.mxu0 0
    %2093 = vmatpush1.bf16.msra.mxu0 0
    %2094 = vmatprep.subr.bf16.mxu0 0
    %2095 = vmatpush1.bf16.msra.mxu0 0
    %2096 = vmatprep.subr.bf16.mxu0 0
    %2097 = vmatpush1.bf16.msra.mxu0 0
    %2098 = vmatprep.subr.bf16.mxu0 0
    %2099 = vmatpush1.bf16.msra.mxu0 0
    %2100 = vmatprep.subr.bf16.mxu0 0
    %2101 = vmatpush1.bf16.msra.mxu0 0
    %2102 = vmatprep.subr.bf16.mxu0 0
    %2103 = vmatpush1.bf16.msra.mxu0 0
    %2104 = vmatprep.subr.bf16.mxu0 0
    %2105 = vmatpush1.bf16.msra.mxu0 0
    %2106 = vmatprep.mubr.bf16.mxu0 0
    %2107 = vmatmul.mubr.bf16.gmra.mrb[0].mxu0 %v1867
    %v2108 = vpop.f32.mrb[0].mxu0
    %v2109 = vadd.f32 %v1502, %v2108
    %v2110 = vpop.f32.mrb[0].mxu0
    %v2111 = vadd.f32 %v1506, %v2110
    %v2112 = vpop.f32.mrb[0].mxu0
    %v2113 = vpop.f32.mrb[0].mxu0
    %2114 = vdwg.mxu0
    %2115 = vmatprep.subr.bf16.mxu0 %v1751
    %2116 = vmatpush1.bf16.msra.mxu0 %v1750
    %2117 = vmatprep.subr.bf16.mxu0 %v1767
    %2118 = vmatpush1.bf16.msra.mxu0 %v1766
    %2119 = vmatprep.subr.bf16.mxu0 %v1783
    %2120 = vmatpush1.bf16.msra.mxu0 %v1782
    %2121 = vmatprep.subr.bf16.mxu0 %v1799
    %2122 = vmatpush1.bf16.msra.mxu0 %v1798
    %2123 = vmatprep.subr.bf16.mxu0 0
    %2124 = vmatpush1.bf16.msra.mxu0 0
    %2125 = vmatprep.subr.bf16.mxu0 0
    %2126 = vmatpush1.bf16.msra.mxu0 0
    %2127 = vmatprep.subr.bf16.mxu0 0
    %2128 = vmatpush1.bf16.msra.mxu0 0
    %2129 = vmatprep.subr.bf16.mxu0 0
    %2130 = vmatpush1.bf16.msra.mxu0 0
    %2131 = vmatprep.subr.bf16.mxu0 0
    %2132 = vmatpush1.bf16.msra.mxu0 0
    %2133 = vmatprep.subr.bf16.mxu0 0
    %2134 = vmatpush1.bf16.msra.mxu0 0
    %2135 = vmatprep.subr.bf16.mxu0 0
    %2136 = vmatpush1.bf16.msra.mxu0 0
    %2137 = vmatprep.subr.bf16.mxu0 0
    %2138 = vmatpush1.bf16.msra.mxu0 0
    %2139 = vmatprep.subr.bf16.mxu0 0
    %2140 = vmatpush1.bf16.msra.mxu0 0
    %2141 = vmatprep.subr.bf16.mxu0 0
    %2142 = vmatpush1.bf16.msra.mxu0 0
    %2143 = vmatprep.subr.bf16.mxu0 0
    %2144 = vmatpush1.bf16.msra.mxu0 0
    %2145 = vmatprep.subr.bf16.mxu0 0
    %2146 = vmatpush1.bf16.msra.mxu0 0
    %2147 = vmatprep.mubr.bf16.mxu0 0
    %2148 = vmatmul.mubr.bf16.gmra.mrb[0].mxu0 %v1867
    %v2149 = vpop.f32.mrb[0].mxu0
    %v2150 = vadd.f32 %v1510, %v2149
    %v2151 = vpop.f32.mrb[0].mxu0
    %v2152 = vadd.f32 %v1514, %v2151
    %v2153 = vpop.f32.mrb[0].mxu0
    %v2154 = vpop.f32.mrb[0].mxu0
    %2155 = vdwg.mxu0
    %2156 = vmatprep.subr.bf16.mxu0 %v1753
    %2157 = vmatpush1.bf16.msra.mxu0 %v1752
    %2158 = vmatprep.subr.bf16.mxu0 %v1769
    %2159 = vmatpush1.bf16.msra.mxu0 %v1768
    %2160 = vmatprep.subr.bf16.mxu0 %v1785
    %2161 = vmatpush1.bf16.msra.mxu0 %v1784
    %2162 = vmatprep.subr.bf16.mxu0 %v1801
    %2163 = vmatpush1.bf16.msra.mxu0 %v1800
    %2164 = vmatprep.subr.bf16.mxu0 0
    %2165 = vmatpush1.bf16.msra.mxu0 0
    %2166 = vmatprep.subr.bf16.mxu0 0
    %2167 = vmatpush1.bf16.msra.mxu0 0
    %2168 = vmatprep.subr.bf16.mxu0 0
    %2169 = vmatpush1.bf16.msra.mxu0 0
    %2170 = vmatprep.subr.bf16.mxu0 0
    %2171 = vmatpush1.bf16.msra.mxu0 0
    %2172 = vmatprep.subr.bf16.mxu0 0
    %2173 = vmatpush1.bf16.msra.mxu0 0
    %2174 = vmatprep.subr.bf16.mxu0 0
    %2175 = vmatpush1.bf16.msra.mxu0 0
    %2176 = vmatprep.subr.bf16.mxu0 0
    %2177 = vmatpush1.bf16.msra.mxu0 0
    %2178 = vmatprep.subr.bf16.mxu0 0
    %2179 = vmatpush1.bf16.msra.mxu0 0
    %2180 = vmatprep.subr.bf16.mxu0 0
    %2181 = vmatpush1.bf16.msra.mxu0 0
    %2182 = vmatprep.subr.bf16.mxu0 0
    %2183 = vmatpush1.bf16.msra.mxu0 0
    %2184 = vmatprep.subr.bf16.mxu0 0
    %2185 = vmatpush1.bf16.msra.mxu0 0
    %2186 = vmatprep.subr.bf16.mxu0 0
    %2187 = vmatpush1.bf16.msra.mxu0 0
    %2188 = vmatprep.mubr.bf16.mxu0 0
    %2189 = vmatmul.mubr.bf16.gmra.mrb[0].mxu0 %v1867
    %v2190 = vpop.f32.mrb[0].mxu0
    %v2191 = vadd.f32 %v1518, %v2190
    %v2192 = vpop.f32.mrb[0].mxu0
    %v2193 = vadd.f32 %v1522, %v2192
    %v2194 = vpop.f32.mrb[0].mxu0
    %v2195 = vpop.f32.mrb[0].mxu0
    %2196 = vdwg.mxu0
    %v2197 = vmul.f32 %v1904, %v1904
    %v2198 = vmul.f32 %v1906, %v1906
    %v2199 = vmul.f32 %v1945, %v1945
    %v2200 = vmul.f32 %v1947, %v1947
    %v2201 = vmul.f32 %v1986, %v1986
    %v2202 = vmul.f32 %v1988, %v1988
    %v2203 = vmul.f32 %v2027, %v2027
    %v2204 = vmul.f32 %v2029, %v2029
    %v2205 = vmul.f32 %v1904, %v2197
    %v2206 = vmul.f32 %v1906, %v2198
    %v2207 = vmul.f32 %v1945, %v2199
    %v2208 = vmul.f32 %v1947, %v2200
    %v2209 = vmul.f32 %v1986, %v2201
    %v2210 = vmul.f32 %v1988, %v2202
    %v2211 = vmul.f32 %v2027, %v2203
    %v2212 = vmul.f32 %v2029, %v2204
    %v2213 = vmul.f32 %v2205, 0.044715
    %v2214 = vmul.f32 %v2206, 0.044715
    %v2215 = vmul.f32 %v2207, 0.044715
    %v2216 = vmul.f32 %v2208, 0.044715
    %v2217 = vmul.f32 %v2209, 0.044715
    %v2218 = vmul.f32 %v2210, 0.044715
    %v2219 = vmul.f32 %v2211, 0.044715
    %v2220 = vmul.f32 %v2212, 0.044715
    %v2221 = vadd.f32 %v1904, %v2213
    %v2222 = vadd.f32 %v1906, %v2214
    %v2223 = vadd.f32 %v1945, %v2215
    %v2224 = vadd.f32 %v1947, %v2216
    %v2225 = vadd.f32 %v1986, %v2217
    %v2226 = vadd.f32 %v1988, %v2218
    %v2227 = vadd.f32 %v2027, %v2219
    %v2228 = vadd.f32 %v2029, %v2220
    %v2229 = vmul.f32 %v2221, 0.7978846
    %v2230 = vmul.f32 %v2222, 0.7978846
    %v2231 = vmul.f32 %v2223, 0.7978846
    %v2232 = vmul.f32 %v2224, 0.7978846
    %v2233 = vmul.f32 %v2225, 0.7978846
    %v2234 = vmul.f32 %v2226, 0.7978846
    %v2235 = vmul.f32 %v2227, 0.7978846
    %v2236 = vmul.f32 %v2228, 0.7978846
    %v2237 = vtanh.pop %v2229
    %v2238 = vtanh.pop %v2230
    %v2239 = vtanh.pop %v2231
    %v2240 = vtanh.pop %v2232
    %v2241 = vtanh.pop %v2233
    %v2242 = vtanh.pop %v2234
    %v2243 = vtanh.pop %v2235
    %v2244 = vtanh.pop %v2236
    %v2245 = vadd.f32 %v2237, 1.0
    %v2246 = vadd.f32 %v2238, 1.0
    %v2247 = vadd.f32 %v2239, 1.0
    %v2248 = vadd.f32 %v2240, 1.0
    %v2249 = vadd.f32 %v2241, 1.0
    %v2250 = vadd.f32 %v2242, 1.0
    %v2251 = vadd.f32 %v2243, 1.0
    %v2252 = vadd.f32 %v2244, 1.0
    %v2253 = vmul.f32 %v2245, 0.5
    %v2254 = vmul.f32 %v2246, 0.5
    %v2255 = vmul.f32 %v2247, 0.5
    %v2256 = vmul.f32 %v2248, 0.5
    %v2257 = vmul.f32 %v2249, 0.5
    %v2258 = vmul.f32 %v2250, 0.5
    %v2259 = vmul.f32 %v2251, 0.5
    %v2260 = vmul.f32 %v2252, 0.5
    %v2261 = vmul.f32 %v1904, %v2253
    %v2262 = vmul.f32 %v1906, %v2254
    %v2263 = vmul.f32 %v1945, %v2255
    %v2264 = vmul.f32 %v1947, %v2256
    %v2265 = vmul.f32 %v1986, %v2257
    %v2266 = vmul.f32 %v1988, %v2258
    %v2267 = vmul.f32 %v2027, %v2259
    %v2268 = vmul.f32 %v2029, %v2260
    %v2269 = vmul.f32 %v2068, %v2068
    %v2270 = vmul.f32 %v2070, %v2070
    %v2271 = vmul.f32 %v2109, %v2109
    %v2272 = vmul.f32 %v2111, %v2111
    %v2273 = vmul.f32 %v2068, %v2269
    %v2274 = vmul.f32 %v2070, %v2270
    %v2275 = vmul.f32 %v2109, %v2271
    %v2276 = vmul.f32 %v2111, %v2272
    %v2277 = vmul.f32 %v2273, 0.044715
    %v2278 = vmul.f32 %v2274, 0.044715
    %v2279 = vmul.f32 %v2275, 0.044715
    %v2280 = vmul.f32 %v2276, 0.044715
    %v2281 = vadd.f32 %v2068, %v2277
    %v2282 = vadd.f32 %v2070, %v2278
    %v2283 = vadd.f32 %v2109, %v2279
    %v2284 = vadd.f32 %v2111, %v2280
    %v2285 = vmul.f32 %v2281, 0.7978846
    %v2286 = vmul.f32 %v2282, 0.7978846
    %v2287 = vmul.f32 %v2283, 0.7978846
    %v2288 = vmul.f32 %v2284, 0.7978846
    %v2289 = vtanh.pop %v2285
    %v2290 = vtanh.pop %v2286
    %v2291 = vtanh.pop %v2287
    %v2292 = vtanh.pop %v2288
    %v2293 = vadd.f32 %v2289, 1.0
    %v2294 = vadd.f32 %v2290, 1.0
    %v2295 = vadd.f32 %v2291, 1.0
    %v2296 = vadd.f32 %v2292, 1.0
    %v2297 = vmul.f32 %v2293, 0.5
    %v2298 = vmul.f32 %v2294, 0.5
    %v2299 = vmul.f32 %v2295, 0.5
    %v2300 = vmul.f32 %v2296, 0.5
    %v2301 = vmul.f32 %v2068, %v2297
    %v2302 = vmul.f32 %v2070, %v2298
    %v2303 = vmul.f32 %v2109, %v2299
    %v2304 = vmul.f32 %v2111, %v2300
    %v2305 = vmul.f32 %v2150, %v2150
    %v2306 = vmul.f32 %v2152, %v2152
    %v2307 = vmul.f32 %v2150, %v2305
    %v2308 = vmul.f32 %v2152, %v2306
    %v2309 = vmul.f32 %v2307, 0.044715
    %v2310 = vmul.f32 %v2308, 0.044715
    %v2311 = vadd.f32 %v2150, %v2309
    %v2312 = vadd.f32 %v2152, %v2310
    %v2313 = vmul.f32 %v2311, 0.7978846
    %v2314 = vmul.f32 %v2312, 0.7978846
    %v2315 = vtanh.pop %v2313
    %v2316 = vtanh.pop %v2314
    %v2317 = vadd.f32 %v2315, 1.0
    %v2318 = vadd.f32 %v2316, 1.0
    %v2319 = vmul.f32 %v2317, 0.5
    %v2320 = vmul.f32 %v2318, 0.5
    %v2321 = vmul.f32 %v2150, %v2319
    %v2322 = vmul.f32 %v2152, %v2320
    %v2323 = vmax.f32 %v2191, 0.0
    %v2324 = vmax.f32 %v2193, 0.0
    %v2325 = vpack.c.bf16 %v2261, %v2261
    %v2326 = vpack.c.bf16 %v2262, %v2262
    %v2327 = vpack.c.bf16 %v2263, %v2263
    %v2328 = vpack.c.bf16 %v2264, %v2264
    %v2329 = vpack.c.bf16 %v2265, %v2265
    %v2330 = vpack.c.bf16 %v2266, %v2266
    %v2331 = vpack.c.bf16 %v2267, %v2267
    %v2332 = vpack.c.bf16 %v2268, %v2268
    %v2333 = vld [vmem:[#allocation11] sm:$0xff]
    %v2334 = vld [vmem:[#allocation11 + $0x8] sm:$0xff]
    %v2335 = vld [vmem:[#allocation11 + $0x10] sm:$0xff]
    %v2336 = vld [vmem:[#allocation11 + $0x18] sm:$0xff]
    %v2337 = vld [vmem:[#allocation11 + $0x20] sm:$0xff]
    %v2338 = vld [vmem:[#allocation11 + $0x28] sm:$0xff]
    %v2339 = vld [vmem:[#allocation11 + $0x30] sm:$0xff]
    %v2340 = vld [vmem:[#allocation11 + $0x38] sm:$0xff]
    %v2341 = vld [vmem:[#allocation11 + $0x40] sm:$0xff]
    %v2342 = vld [vmem:[#allocation11 + $0x48] sm:$0xff]
    %v2343 = vld [vmem:[#allocation11 + $0x50] sm:$0xff]
    %v2344 = vld [vmem:[#allocation11 + $0x58] sm:$0xff]
    %v2345 = vld [vmem:[#allocation11 + $0x60] sm:$0xff]
    %v2346 = vld [vmem:[#allocation11 + $0x68] sm:$0xff]
    %v2347 = vld [vmem:[#allocation11 + $0x70] sm:$0xff]
    %v2348 = vld [vmem:[#allocation11 + $0x78] sm:$0xff]
    %v2349 = vld [vmem:[#allocation11 + $0x80] sm:$0xff]
    %v2350 = vld [vmem:[#allocation11 + $0x88] sm:$0xff]
    %v2351 = vld [vmem:[#allocation11 + $0x90] sm:$0xff]
    %v2352 = vld [vmem:[#allocation11 + $0x98] sm:$0xff]
    %v2353 = vld [vmem:[#allocation11 + $0xa0] sm:$0xff]
    %v2354 = vld [vmem:[#allocation11 + $0xa8] sm:$0xff]
    %v2355 = vld [vmem:[#allocation11 + $0xb0] sm:$0xff]
    %v2356 = vld [vmem:[#allocation11 + $0xb8] sm:$0xff]
    %v2357 = vld [vmem:[#allocation11 + $0xc0] sm:$0xff]
    %v2358 = vld [vmem:[#allocation11 + $0xc8] sm:$0xff]
    %v2359 = vld [vmem:[#allocation11 + $0xd0] sm:$0xff]
    %v2360 = vld [vmem:[#allocation11 + $0xd8] sm:$0xff]
    %v2361 = vld [vmem:[#allocation11 + $0xe0] sm:$0xff]
    %v2362 = vld [vmem:[#allocation11 + $0xe8] sm:$0xff]
    %v2363 = vld [vmem:[#allocation11 + $0xf0] sm:$0xff]
    %v2364 = vld [vmem:[#allocation11 + $0xf8] sm:$0xff]
    %v2365 = vld [vmem:[#allocation11 + $0x100] sm:$0xff]
    %v2366 = vld [vmem:[#allocation11 + $0x108] sm:$0xff]
    %v2367 = vld [vmem:[#allocation11 + $0x110] sm:$0xff]
    %v2368 = vld [vmem:[#allocation11 + $0x118] sm:$0xff]
    %v2369 = vld [vmem:[#allocation11 + $0x120] sm:$0xff]
    %v2370 = vld [vmem:[#allocation11 + $0x128] sm:$0xff]
    %v2371 = vld [vmem:[#allocation11 + $0x130] sm:$0xff]
    %v2372 = vld [vmem:[#allocation11 + $0x138] sm:$0xff]
    %v2373 = vld [vmem:[#allocation11 + $0x140] sm:$0xff]
    %v2374 = vld [vmem:[#allocation11 + $0x148] sm:$0xff]
    %v2375 = vld [vmem:[#allocation11 + $0x150] sm:$0xff]
    %v2376 = vld [vmem:[#allocation11 + $0x158] sm:$0xff]
    %v2377 = vld [vmem:[#allocation11 + $0x160] sm:$0xff]
    %v2378 = vld [vmem:[#allocation11 + $0x168] sm:$0xff]
    %v2379 = vld [vmem:[#allocation11 + $0x170] sm:$0xff]
    %v2380 = vld [vmem:[#allocation11 + $0x178] sm:$0xff]
    %v2381 = vld [vmem:[#allocation11 + $0x180] sm:$0xff]
    %v2382 = vld [vmem:[#allocation11 + $0x188] sm:$0xff]
    %v2383 = vld [vmem:[#allocation11 + $0x190] sm:$0xff]
    %v2384 = vld [vmem:[#allocation11 + $0x198] sm:$0xff]
    %v2385 = vld [vmem:[#allocation11 + $0x1a0] sm:$0xff]
    %v2386 = vld [vmem:[#allocation11 + $0x1a8] sm:$0xff]
    %v2387 = vld [vmem:[#allocation11 + $0x1b0] sm:$0xff]
    %v2388 = vld [vmem:[#allocation11 + $0x1b8] sm:$0xff]
    %v2389 = vld [vmem:[#allocation11 + $0x1c0] sm:$0xff]
    %v2390 = vld [vmem:[#allocation11 + $0x1c8] sm:$0xff]
    %v2391 = vld [vmem:[#allocation11 + $0x1d0] sm:$0xff]
    %v2392 = vld [vmem:[#allocation11 + $0x1d8] sm:$0xff]
    %v2393 = vld [vmem:[#allocation11 + $0x1e0] sm:$0xff]
    %v2394 = vld [vmem:[#allocation11 + $0x1e8] sm:$0xff]
    %v2395 = vld [vmem:[#allocation11 + $0x1f0] sm:$0xff]
    %v2396 = vld [vmem:[#allocation11 + $0x1f8] sm:$0xff]
    %v2397 = vld [vmem:[#allocation11 + $0x200] sm:$0xff]
    %v2398 = vld [vmem:[#allocation11 + $0x208] sm:$0xff]
    %v2399 = vld [vmem:[#allocation11 + $0x210] sm:$0xff]
    %v2400 = vld [vmem:[#allocation11 + $0x218] sm:$0xff]
    %v2401 = vld [vmem:[#allocation11 + $0x220] sm:$0xff]
    %v2402 = vld [vmem:[#allocation11 + $0x228] sm:$0xff]
    %v2403 = vld [vmem:[#allocation11 + $0x230] sm:$0xff]
    %v2404 = vld [vmem:[#allocation11 + $0x238] sm:$0xff]
    %v2405 = vld [vmem:[#allocation11 + $0x240] sm:$0xff]
    %v2406 = vld [vmem:[#allocation11 + $0x248] sm:$0xff]
    %v2407 = vld [vmem:[#allocation11 + $0x250] sm:$0xff]
    %v2408 = vld [vmem:[#allocation11 + $0x258] sm:$0xff]
    %v2409 = vld [vmem:[#allocation11 + $0x260] sm:$0xff]
    %v2410 = vld [vmem:[#allocation11 + $0x268] sm:$0xff]
    %v2411 = vld [vmem:[#allocation11 + $0x270] sm:$0xff]
    %v2412 = vld [vmem:[#allocation11 + $0x278] sm:$0xff]
    %v2413 = vld [vmem:[#allocation11 + $0x280] sm:$0xff]
    %v2414 = vld [vmem:[#allocation11 + $0x288] sm:$0xff]
    %v2415 = vld [vmem:[#allocation11 + $0x290] sm:$0xff]
    %v2416 = vld [vmem:[#allocation11 + $0x298] sm:$0xff]
    %v2417 = vld [vmem:[#allocation11 + $0x2a0] sm:$0xff]
    %v2418 = vld [vmem:[#allocation11 + $0x2a8] sm:$0xff]
    %v2419 = vld [vmem:[#allocation11 + $0x2b0] sm:$0xff]
    %v2420 = vld [vmem:[#allocation11 + $0x2b8] sm:$0xff]
    %v2421 = vld [vmem:[#allocation11 + $0x2c0] sm:$0xff]
    %v2422 = vld [vmem:[#allocation11 + $0x2c8] sm:$0xff]
    %v2423 = vld [vmem:[#allocation11 + $0x2d0] sm:$0xff]
    %v2424 = vld [vmem:[#allocation11 + $0x2d8] sm:$0xff]
    %v2425 = vld [vmem:[#allocation11 + $0x2e0] sm:$0xff]
    %v2426 = vld [vmem:[#allocation11 + $0x2e8] sm:$0xff]
    %v2427 = vld [vmem:[#allocation11 + $0x2f0] sm:$0xff]
    %v2428 = vld [vmem:[#allocation11 + $0x2f8] sm:$0xff]
    %v2429 = vld [vmem:[#allocation11 + $0x300] sm:$0xff]
    %v2430 = vld [vmem:[#allocation11 + $0x308] sm:$0xff]
    %v2431 = vld [vmem:[#allocation11 + $0x310] sm:$0xff]
    %v2432 = vld [vmem:[#allocation11 + $0x318] sm:$0xff]
    %v2433 = vld [vmem:[#allocation11 + $0x320] sm:$0xff]
    %v2434 = vld [vmem:[#allocation11 + $0x328] sm:$0xff]
    %v2435 = vld [vmem:[#allocation11 + $0x330] sm:$0xff]
    %v2436 = vld [vmem:[#allocation11 + $0x338] sm:$0xff]
    %v2437 = vld [vmem:[#allocation11 + $0x340] sm:$0xff]
    %v2438 = vld [vmem:[#allocation11 + $0x348] sm:$0xff]
    %v2439 = vld [vmem:[#allocation11 + $0x350] sm:$0xff]
    %v2440 = vld [vmem:[#allocation11 + $0x358] sm:$0xff]
    %v2441 = vld [vmem:[#allocation11 + $0x360] sm:$0xff]
    %v2442 = vld [vmem:[#allocation11 + $0x368] sm:$0xff]
    %v2443 = vld [vmem:[#allocation11 + $0x370] sm:$0xff]
    %v2444 = vld [vmem:[#allocation11 + $0x378] sm:$0xff]
    %v2445 = vld [vmem:[#allocation11 + $0x380] sm:$0xff]
    %v2446 = vld [vmem:[#allocation11 + $0x388] sm:$0xff]
    %v2447 = vld [vmem:[#allocation11 + $0x390] sm:$0xff]
    %v2448 = vld [vmem:[#allocation11 + $0x398] sm:$0xff]
    %v2449 = vld [vmem:[#allocation11 + $0x3a0] sm:$0xff]
    %v2450 = vld [vmem:[#allocation11 + $0x3a8] sm:$0xff]
    %v2451 = vld [vmem:[#allocation11 + $0x3b0] sm:$0xff]
    %v2452 = vld [vmem:[#allocation11 + $0x3b8] sm:$0xff]
    %v2453 = vld [vmem:[#allocation11 + $0x3c0] sm:$0xff]
    %v2454 = vld [vmem:[#allocation11 + $0x3c8] sm:$0xff]
    %v2455 = vld [vmem:[#allocation11 + $0x3d0] sm:$0xff]
    %v2456 = vld [vmem:[#allocation11 + $0x3d8] sm:$0xff]
    %v2457 = vld [vmem:[#allocation11 + $0x3e0] sm:$0xff]
    %v2458 = vld [vmem:[#allocation11 + $0x3e8] sm:$0xff]
    %v2459 = vld [vmem:[#allocation11 + $0x3f0] sm:$0xff]
    %v2460 = vld [vmem:[#allocation11 + $0x3f8] sm:$0xff]
    %v2461 = vld [vmem:[#allocation11 + $0x400] sm:$0xff]
    %v2462 = vld [vmem:[#allocation11 + $0x408] sm:$0xff]
    %v2463 = vld [vmem:[#allocation11 + $0x410] sm:$0xff]
    %v2464 = vld [vmem:[#allocation11 + $0x418] sm:$0xff]
    %v2465 = vld [vmem:[#allocation11 + $0x420] sm:$0xff]
    %v2466 = vld [vmem:[#allocation11 + $0x428] sm:$0xff]
    %v2467 = vld [vmem:[#allocation11 + $0x430] sm:$0xff]
    %v2468 = vld [vmem:[#allocation11 + $0x438] sm:$0xff]
    %v2469 = vld [vmem:[#allocation11 + $0x440] sm:$0xff]
    %v2470 = vld [vmem:[#allocation11 + $0x448] sm:$0xff]
    %v2471 = vld [vmem:[#allocation11 + $0x450] sm:$0xff]
    %v2472 = vld [vmem:[#allocation11 + $0x458] sm:$0xff]
    %v2473 = vld [vmem:[#allocation11 + $0x460] sm:$0xff]
    %v2474 = vld [vmem:[#allocation11 + $0x468] sm:$0xff]
    %v2475 = vld [vmem:[#allocation11 + $0x470] sm:$0xff]
    %v2476 = vld [vmem:[#allocation11 + $0x478] sm:$0xff]
    %v2477 = vld [vmem:[#allocation11 + $0x480] sm:$0xff]
    %v2478 = vld [vmem:[#allocation11 + $0x488] sm:$0xff]
    %v2479 = vld [vmem:[#allocation11 + $0x490] sm:$0xff]
    %v2480 = vld [vmem:[#allocation11 + $0x498] sm:$0xff]
    %v2481 = vld [vmem:[#allocation11 + $0x4a0] sm:$0xff]
    %v2482 = vld [vmem:[#allocation11 + $0x4a8] sm:$0xff]
    %v2483 = vld [vmem:[#allocation11 + $0x4b0] sm:$0xff]
    %v2484 = vld [vmem:[#allocation11 + $0x4b8] sm:$0xff]
    %v2485 = vld [vmem:[#allocation11 + $0x4c0] sm:$0xff]
    %v2486 = vld [vmem:[#allocation11 + $0x4c8] sm:$0xff]
    %v2487 = vld [vmem:[#allocation11 + $0x4d0] sm:$0xff]
    %v2488 = vld [vmem:[#allocation11 + $0x4d8] sm:$0xff]
    %v2489 = vld [vmem:[#allocation11 + $0x4e0] sm:$0xff]
    %v2490 = vld [vmem:[#allocation11 + $0x4e8] sm:$0xff]
    %v2491 = vld [vmem:[#allocation11 + $0x4f0] sm:$0xff]
    %v2492 = vld [vmem:[#allocation11 + $0x4f8] sm:$0xff]
    %v2493 = vld [vmem:[#allocation11 + $0x500] sm:$0xff]
    %v2494 = vld [vmem:[#allocation11 + $0x508] sm:$0xff]
    %v2495 = vld [vmem:[#allocation11 + $0x510] sm:$0xff]
    %v2496 = vld [vmem:[#allocation11 + $0x518] sm:$0xff]
    %v2497 = vld [vmem:[#allocation11 + $0x520] sm:$0xff]
    %v2498 = vld [vmem:[#allocation11 + $0x528] sm:$0xff]
    %v2499 = vld [vmem:[#allocation11 + $0x530] sm:$0xff]
    %v2500 = vld [vmem:[#allocation11 + $0x538] sm:$0xff]
    %v2501 = vld [vmem:[#allocation11 + $0x540] sm:$0xff]
    %v2502 = vld [vmem:[#allocation11 + $0x548] sm:$0xff]
    %v2503 = vld [vmem:[#allocation11 + $0x550] sm:$0xff]
    %v2504 = vld [vmem:[#allocation11 + $0x558] sm:$0xff]
    %v2505 = vld [vmem:[#allocation11 + $0x560] sm:$0xff]
    %v2506 = vld [vmem:[#allocation11 + $0x568] sm:$0xff]
    %v2507 = vld [vmem:[#allocation11 + $0x570] sm:$0xff]
    %v2508 = vld [vmem:[#allocation11 + $0x578] sm:$0xff]
    %v2509 = vld [vmem:[#allocation11 + $0x580] sm:$0xff]
    %v2510 = vld [vmem:[#allocation11 + $0x588] sm:$0xff]
    %v2511 = vld [vmem:[#allocation11 + $0x590] sm:$0xff]
    %v2512 = vld [vmem:[#allocation11 + $0x598] sm:$0xff]
    %v2513 = vld [vmem:[#allocation11 + $0x5a0] sm:$0xff]
    %v2514 = vld [vmem:[#allocation11 + $0x5a8] sm:$0xff]
    %v2515 = vld [vmem:[#allocation11 + $0x5b0] sm:$0xff]
    %v2516 = vld [vmem:[#allocation11 + $0x5b8] sm:$0xff]
    %v2517 = vld [vmem:[#allocation11 + $0x5c0] sm:$0xff]
    %v2518 = vld [vmem:[#allocation11 + $0x5c8] sm:$0xff]
    %v2519 = vld [vmem:[#allocation11 + $0x5d0] sm:$0xff]
    %v2520 = vld [vmem:[#allocation11 + $0x5d8] sm:$0xff]
    %v2521 = vld [vmem:[#allocation11 + $0x5e0] sm:$0xff]
    %v2522 = vld [vmem:[#allocation11 + $0x5e8] sm:$0xff]
    %v2523 = vld [vmem:[#allocation11 + $0x5f0] sm:$0xff]
    %v2524 = vld [vmem:[#allocation11 + $0x5f8] sm:$0xff]
    %v2525 = vld [vmem:[#allocation11 + $0x600] sm:$0xff]
    %v2526 = vld [vmem:[#allocation11 + $0x608] sm:$0xff]
    %v2527 = vld [vmem:[#allocation11 + $0x610] sm:$0xff]
    %v2528 = vld [vmem:[#allocation11 + $0x618] sm:$0xff]
    %v2529 = vld [vmem:[#allocation11 + $0x620] sm:$0xff]
    %v2530 = vld [vmem:[#allocation11 + $0x628] sm:$0xff]
    %v2531 = vld [vmem:[#allocation11 + $0x630] sm:$0xff]
    %v2532 = vld [vmem:[#allocation11 + $0x638] sm:$0xff]
    %v2533 = vld [vmem:[#allocation11 + $0x640] sm:$0xff]
    %v2534 = vld [vmem:[#allocation11 + $0x648] sm:$0xff]
    %v2535 = vld [vmem:[#allocation11 + $0x650] sm:$0xff]
    %v2536 = vld [vmem:[#allocation11 + $0x658] sm:$0xff]
    %v2537 = vld [vmem:[#allocation11 + $0x660] sm:$0xff]
    %v2538 = vld [vmem:[#allocation11 + $0x668] sm:$0xff]
    %v2539 = vld [vmem:[#allocation11 + $0x670] sm:$0xff]
    %v2540 = vld [vmem:[#allocation11 + $0x678] sm:$0xff]
    %v2541 = vld [vmem:[#allocation11 + $0x680] sm:$0xff]
    %v2542 = vld [vmem:[#allocation11 + $0x688] sm:$0xff]
    %v2543 = vld [vmem:[#allocation11 + $0x690] sm:$0xff]
    %v2544 = vld [vmem:[#allocation11 + $0x698] sm:$0xff]
    %v2545 = vld [vmem:[#allocation11 + $0x6a0] sm:$0xff]
    %v2546 = vld [vmem:[#allocation11 + $0x6a8] sm:$0xff]
    %v2547 = vld [vmem:[#allocation11 + $0x6b0] sm:$0xff]
    %v2548 = vld [vmem:[#allocation11 + $0x6b8] sm:$0xff]
    %v2549 = vld [vmem:[#allocation11 + $0x6c0] sm:$0xff]
    %v2550 = vld [vmem:[#allocation11 + $0x6c8] sm:$0xff]
    %v2551 = vld [vmem:[#allocation11 + $0x6d0] sm:$0xff]
    %v2552 = vld [vmem:[#allocation11 + $0x6d8] sm:$0xff]
    %v2553 = vld [vmem:[#allocation11 + $0x6e0] sm:$0xff]
    %v2554 = vld [vmem:[#allocation11 + $0x6e8] sm:$0xff]
    %v2555 = vld [vmem:[#allocation11 + $0x6f0] sm:$0xff]
    %v2556 = vld [vmem:[#allocation11 + $0x6f8] sm:$0xff]
    %v2557 = vld [vmem:[#allocation11 + $0x700] sm:$0xff]
    %v2558 = vld [vmem:[#allocation11 + $0x708] sm:$0xff]
    %v2559 = vld [vmem:[#allocation11 + $0x710] sm:$0xff]
    %v2560 = vld [vmem:[#allocation11 + $0x718] sm:$0xff]
    %v2561 = vld [vmem:[#allocation11 + $0x720] sm:$0xff]
    %v2562 = vld [vmem:[#allocation11 + $0x728] sm:$0xff]
    %v2563 = vld [vmem:[#allocation11 + $0x730] sm:$0xff]
    %v2564 = vld [vmem:[#allocation11 + $0x738] sm:$0xff]
    %v2565 = vld [vmem:[#allocation11 + $0x740] sm:$0xff]
    %v2566 = vld [vmem:[#allocation11 + $0x748] sm:$0xff]
    %v2567 = vld [vmem:[#allocation11 + $0x750] sm:$0xff]
    %v2568 = vld [vmem:[#allocation11 + $0x758] sm:$0xff]
    %v2569 = vld [vmem:[#allocation11 + $0x760] sm:$0xff]
    %v2570 = vld [vmem:[#allocation11 + $0x768] sm:$0xff]
    %v2571 = vld [vmem:[#allocation11 + $0x770] sm:$0xff]
    %v2572 = vld [vmem:[#allocation11 + $0x778] sm:$0xff]
    %v2573 = vld [vmem:[#allocation11 + $0x780] sm:$0xff]
    %v2574 = vld [vmem:[#allocation11 + $0x788] sm:$0xff]
    %v2575 = vld [vmem:[#allocation11 + $0x790] sm:$0xff]
    %v2576 = vld [vmem:[#allocation11 + $0x798] sm:$0xff]
    %v2577 = vld [vmem:[#allocation11 + $0x7a0] sm:$0xff]
    %v2578 = vld [vmem:[#allocation11 + $0x7a8] sm:$0xff]
    %v2579 = vld [vmem:[#allocation11 + $0x7b0] sm:$0xff]
    %v2580 = vld [vmem:[#allocation11 + $0x7b8] sm:$0xff]
    %v2581 = vld [vmem:[#allocation11 + $0x7c0] sm:$0xff]
    %v2582 = vld [vmem:[#allocation11 + $0x7c8] sm:$0xff]
    %v2583 = vld [vmem:[#allocation11 + $0x7d0] sm:$0xff]
    %v2584 = vld [vmem:[#allocation11 + $0x7d8] sm:$0xff]
    %v2585 = vld [vmem:[#allocation11 + $0x7e0] sm:$0xff]
    %v2586 = vld [vmem:[#allocation11 + $0x7e8] sm:$0xff]
    %v2587 = vld [vmem:[#allocation11 + $0x7f0] sm:$0xff]
    %v2588 = vld [vmem:[#allocation11 + $0x7f8] sm:$0xff]
    %v2589 = vld [vmem:[%s11] sm:$0xf]
    %v2591 = vlaneseq
    %v2592 = vshrl.u32 %v2591, 7
    %v2593 = vsub.s32 0, %v2592
    %v2594 = vrot.slane %v2589, %v2593
    %v2595 = vlaneseq
    %v2596 = vshrl.u32 %v2595, 7
    %v2597 = vsub.s32 1, %v2596
    %v2598 = vrot.slane %v2589, %v2597
    %v2599 = vlaneseq
    %v2600 = vshrl.u32 %v2599, 7
    %v2601 = vsub.s32 2, %v2600
    %v2602 = vrot.slane %v2589, %v2601
    %v2603 = vlaneseq
    %v2604 = vshrl.u32 %v2603, 7
    %v2605 = vsub.s32 3, %v2604
    %v2606 = vrot.slane %v2589, %v2605
    %v2867 = vunpack.c.l.b16 %v2333
    %v2868 = vunpack.c.h.b16 %v2333
    %v2869 = vunpack.c.l.b16 %v2334
    %v2870 = vunpack.c.h.b16 %v2334
    %v2871 = vunpack.c.l.b16 %v2335
    %v2872 = vunpack.c.h.b16 %v2335
    %v2873 = vunpack.c.l.b16 %v2336
    %v2874 = vunpack.c.h.b16 %v2336
    %v2875 = vunpack.c.l.b16 %v2337
    %v2876 = vunpack.c.h.b16 %v2337
    %v2877 = vunpack.c.l.b16 %v2338
    %v2878 = vunpack.c.h.b16 %v2338
    %v2879 = vunpack.c.l.b16 %v2339
    %v2880 = vunpack.c.h.b16 %v2339
    %v2881 = vunpack.c.l.b16 %v2340
    %v2882 = vunpack.c.h.b16 %v2340
    %v2883 = vunpack.c.l.b16 %v2341
    %v2884 = vunpack.c.h.b16 %v2341
    %v2885 = vunpack.c.l.b16 %v2342
    %v2886 = vunpack.c.h.b16 %v2342
    %v2887 = vunpack.c.l.b16 %v2343
    %v2888 = vunpack.c.h.b16 %v2343
    %v2889 = vunpack.c.l.b16 %v2344
    %v2890 = vunpack.c.h.b16 %v2344
    %v2891 = vunpack.c.l.b16 %v2345
    %v2892 = vunpack.c.h.b16 %v2345
    %v2893 = vunpack.c.l.b16 %v2346
    %v2894 = vunpack.c.h.b16 %v2346
    %v2895 = vunpack.c.l.b16 %v2347
    %v2896 = vunpack.c.h.b16 %v2347
    %v2897 = vunpack.c.l.b16 %v2348
    %v2898 = vunpack.c.h.b16 %v2348
    %v2899 = vunpack.c.l.b16 %v2349
    %v2900 = vunpack.c.h.b16 %v2349
    %v2901 = vunpack.c.l.b16 %v2350
    %v2902 = vunpack.c.h.b16 %v2350
    %v2903 = vunpack.c.l.b16 %v2351
    %v2904 = vunpack.c.h.b16 %v2351
    %v2905 = vunpack.c.l.b16 %v2352
    %v2906 = vunpack.c.h.b16 %v2352
    %v2907 = vunpack.c.l.b16 %v2353
    %v2908 = vunpack.c.h.b16 %v2353
    %v2909 = vunpack.c.l.b16 %v2354
    %v2910 = vunpack.c.h.b16 %v2354
    %v2911 = vunpack.c.l.b16 %v2355
    %v2912 = vunpack.c.h.b16 %v2355
    %v2913 = vunpack.c.l.b16 %v2356
    %v2914 = vunpack.c.h.b16 %v2356
    %v2915 = vunpack.c.l.b16 %v2357
    %v2916 = vunpack.c.h.b16 %v2357
    %v2917 = vunpack.c.l.b16 %v2358
    %v2918 = vunpack.c.h.b16 %v2358
    %v2919 = vunpack.c.l.b16 %v2359
    %v2920 = vunpack.c.h.b16 %v2359
    %v2921 = vunpack.c.l.b16 %v2360
    %v2922 = vunpack.c.h.b16 %v2360
    %v2923 = vunpack.c.l.b16 %v2361
    %v2924 = vunpack.c.h.b16 %v2361
    %v2925 = vunpack.c.l.b16 %v2362
    %v2926 = vunpack.c.h.b16 %v2362
    %v2927 = vunpack.c.l.b16 %v2363
    %v2928 = vunpack.c.h.b16 %v2363
    %v2929 = vunpack.c.l.b16 %v2364
    %v2930 = vunpack.c.h.b16 %v2364
    %v2931 = vunpack.c.l.b16 %v2365
    %v2932 = vunpack.c.h.b16 %v2365
    %v2933 = vunpack.c.l.b16 %v2366
    %v2934 = vunpack.c.h.b16 %v2366
    %v2935 = vunpack.c.l.b16 %v2367
    %v2936 = vunpack.c.h.b16 %v2367
    %v2937 = vunpack.c.l.b16 %v2368
    %v2938 = vunpack.c.h.b16 %v2368
    %v2939 = vunpack.c.l.b16 %v2369
    %v2940 = vunpack.c.h.b16 %v2369
    %v2941 = vunpack.c.l.b16 %v2370
    %v2942 = vunpack.c.h.b16 %v2370
    %v2943 = vunpack.c.l.b16 %v2371
    %v2944 = vunpack.c.h.b16 %v2371
    %v2945 = vunpack.c.l.b16 %v2372
    %v2946 = vunpack.c.h.b16 %v2372
    %v2947 = vunpack.c.l.b16 %v2373
    %v2948 = vunpack.c.h.b16 %v2373
    %v2949 = vunpack.c.l.b16 %v2374
    %v2950 = vunpack.c.h.b16 %v2374
    %v2951 = vunpack.c.l.b16 %v2375
    %v2952 = vunpack.c.h.b16 %v2375
    %v2953 = vunpack.c.l.b16 %v2376
    %v2954 = vunpack.c.h.b16 %v2376
    %v2955 = vunpack.c.l.b16 %v2377
    %v2956 = vunpack.c.h.b16 %v2377
    %v2957 = vunpack.c.l.b16 %v2378
    %v2958 = vunpack.c.h.b16 %v2378
    %v2959 = vunpack.c.l.b16 %v2379
    %v2960 = vunpack.c.h.b16 %v2379
    %v2961 = vunpack.c.l.b16 %v2380
    %v2962 = vunpack.c.h.b16 %v2380
    %v2963 = vunpack.c.l.b16 %v2381
    %v2964 = vunpack.c.h.b16 %v2381
    %v2965 = vunpack.c.l.b16 %v2382
    %v2966 = vunpack.c.h.b16 %v2382
    %v2967 = vunpack.c.l.b16 %v2383
    %v2968 = vunpack.c.h.b16 %v2383
    %v2969 = vunpack.c.l.b16 %v2384
    %v2970 = vunpack.c.h.b16 %v2384
    %v2971 = vunpack.c.l.b16 %v2385
    %v2972 = vunpack.c.h.b16 %v2385
    %v2973 = vunpack.c.l.b16 %v2386
    %v2974 = vunpack.c.h.b16 %v2386
    %v2975 = vunpack.c.l.b16 %v2387
    %v2976 = vunpack.c.h.b16 %v2387
    %v2977 = vunpack.c.l.b16 %v2388
    %v2978 = vunpack.c.h.b16 %v2388
    %v2979 = vunpack.c.l.b16 %v2389
    %v2980 = vunpack.c.h.b16 %v2389
    %v2981 = vunpack.c.l.b16 %v2390
    %v2982 = vunpack.c.h.b16 %v2390
    %v2983 = vunpack.c.l.b16 %v2391
    %v2984 = vunpack.c.h.b16 %v2391
    %v2985 = vunpack.c.l.b16 %v2392
    %v2986 = vunpack.c.h.b16 %v2392
    %v2987 = vunpack.c.l.b16 %v2393
    %v2988 = vunpack.c.h.b16 %v2393
    %v2989 = vunpack.c.l.b16 %v2394
    %v2990 = vunpack.c.h.b16 %v2394
    %v2991 = vunpack.c.l.b16 %v2395
    %v2992 = vunpack.c.h.b16 %v2395
    %v2993 = vunpack.c.l.b16 %v2396
    %v2994 = vunpack.c.h.b16 %v2396
    %v2995 = vunpack.c.l.b16 %v2397
    %v2996 = vunpack.c.h.b16 %v2397
    %v2997 = vunpack.c.l.b16 %v2398
    %v2998 = vunpack.c.h.b16 %v2398
    %v2999 = vunpack.c.l.b16 %v2399
    %v3000 = vunpack.c.h.b16 %v2399
    %v3001 = vunpack.c.l.b16 %v2400
    %v3002 = vunpack.c.h.b16 %v2400
    %v3003 = vunpack.c.l.b16 %v2401
    %v3004 = vunpack.c.h.b16 %v2401
    %v3005 = vunpack.c.l.b16 %v2402
    %v3006 = vunpack.c.h.b16 %v2402
    %v3007 = vunpack.c.l.b16 %v2403
    %v3008 = vunpack.c.h.b16 %v2403
    %v3009 = vunpack.c.l.b16 %v2404
    %v3010 = vunpack.c.h.b16 %v2404
    %v3011 = vunpack.c.l.b16 %v2405
    %v3012 = vunpack.c.h.b16 %v2405
    %v3013 = vunpack.c.l.b16 %v2406
    %v3014 = vunpack.c.h.b16 %v2406
    %v3015 = vunpack.c.l.b16 %v2407
    %v3016 = vunpack.c.h.b16 %v2407
    %v3017 = vunpack.c.l.b16 %v2408
    %v3018 = vunpack.c.h.b16 %v2408
    %v3019 = vunpack.c.l.b16 %v2409
    %v3020 = vunpack.c.h.b16 %v2409
    %v3021 = vunpack.c.l.b16 %v2410
    %v3022 = vunpack.c.h.b16 %v2410
    %v3023 = vunpack.c.l.b16 %v2411
    %v3024 = vunpack.c.h.b16 %v2411
    %v3025 = vunpack.c.l.b16 %v2412
    %v3026 = vunpack.c.h.b16 %v2412
    %v3027 = vunpack.c.l.b16 %v2413
    %v3028 = vunpack.c.h.b16 %v2413
    %v3029 = vunpack.c.l.b16 %v2414
    %v3030 = vunpack.c.h.b16 %v2414
    %v3031 = vunpack.c.l.b16 %v2415
    %v3032 = vunpack.c.h.b16 %v2415
    %v3033 = vunpack.c.l.b16 %v2416
    %v3034 = vunpack.c.h.b16 %v2416
    %v3035 = vunpack.c.l.b16 %v2417
    %v3036 = vunpack.c.h.b16 %v2417
    %v3037 = vunpack.c.l.b16 %v2418
    %v3038 = vunpack.c.h.b16 %v2418
    %v3039 = vunpack.c.l.b16 %v2419
    %v3040 = vunpack.c.h.b16 %v2419
    %v3041 = vunpack.c.l.b16 %v2420
    %v3042 = vunpack.c.h.b16 %v2420
    %v3043 = vunpack.c.l.b16 %v2421
    %v3044 = vunpack.c.h.b16 %v2421
    %v3045 = vunpack.c.l.b16 %v2422
    %v3046 = vunpack.c.h.b16 %v2422
    %v3047 = vunpack.c.l.b16 %v2423
    %v3048 = vunpack.c.h.b16 %v2423
    %v3049 = vunpack.c.l.b16 %v2424
    %v3050 = vunpack.c.h.b16 %v2424
    %v3051 = vunpack.c.l.b16 %v2425
    %v3052 = vunpack.c.h.b16 %v2425
    %v3053 = vunpack.c.l.b16 %v2426
    %v3054 = vunpack.c.h.b16 %v2426
    %v3055 = vunpack.c.l.b16 %v2427
    %v3056 = vunpack.c.h.b16 %v2427
    %v3057 = vunpack.c.l.b16 %v2428
    %v3058 = vunpack.c.h.b16 %v2428
    %v3059 = vunpack.c.l.b16 %v2429
    %v3060 = vunpack.c.h.b16 %v2429
    %v3061 = vunpack.c.l.b16 %v2430
    %v3062 = vunpack.c.h.b16 %v2430
    %v3063 = vunpack.c.l.b16 %v2431
    %v3064 = vunpack.c.h.b16 %v2431
    %v3065 = vunpack.c.l.b16 %v2432
    %v3066 = vunpack.c.h.b16 %v2432
    %v3067 = vunpack.c.l.b16 %v2433
    %v3068 = vunpack.c.h.b16 %v2433
    %v3069 = vunpack.c.l.b16 %v2434
    %v3070 = vunpack.c.h.b16 %v2434
    %v3071 = vunpack.c.l.b16 %v2435
    %v3072 = vunpack.c.h.b16 %v2435
    %v3073 = vunpack.c.l.b16 %v2436
    %v3074 = vunpack.c.h.b16 %v2436
    %v3075 = vunpack.c.l.b16 %v2437
    %v3076 = vunpack.c.h.b16 %v2437
    %v3077 = vunpack.c.l.b16 %v2438
    %v3078 = vunpack.c.h.b16 %v2438
    %v3079 = vunpack.c.l.b16 %v2439
    %v3080 = vunpack.c.h.b16 %v2439
    %v3081 = vunpack.c.l.b16 %v2440
    %v3082 = vunpack.c.h.b16 %v2440
    %v3083 = vunpack.c.l.b16 %v2441
    %v3084 = vunpack.c.h.b16 %v2441
    %v3085 = vunpack.c.l.b16 %v2442
    %v3086 = vunpack.c.h.b16 %v2442
    %v3087 = vunpack.c.l.b16 %v2443
    %v3088 = vunpack.c.h.b16 %v2443
    %v3089 = vunpack.c.l.b16 %v2444
    %v3090 = vunpack.c.h.b16 %v2444
    %v3091 = vunpack.c.l.b16 %v2445
    %v3092 = vunpack.c.h.b16 %v2445
    %v3093 = vunpack.c.l.b16 %v2446
    %v3094 = vunpack.c.h.b16 %v2446
    %v3095 = vunpack.c.l.b16 %v2447
    %v3096 = vunpack.c.h.b16 %v2447
    %v3097 = vunpack.c.l.b16 %v2448
    %v3098 = vunpack.c.h.b16 %v2448
    %v3099 = vunpack.c.l.b16 %v2449
    %v3100 = vunpack.c.h.b16 %v2449
    %v3101 = vunpack.c.l.b16 %v2450
    %v3102 = vunpack.c.h.b16 %v2450
    %v3103 = vunpack.c.l.b16 %v2451
    %v3104 = vunpack.c.h.b16 %v2451
    %v3105 = vunpack.c.l.b16 %v2452
    %v3106 = vunpack.c.h.b16 %v2452
    %v3107 = vunpack.c.l.b16 %v2453
    %v3108 = vunpack.c.h.b16 %v2453
    %v3109 = vunpack.c.l.b16 %v2454
    %v3110 = vunpack.c.h.b16 %v2454
    %v3111 = vunpack.c.l.b16 %v2455
    %v3112 = vunpack.c.h.b16 %v2455
    %v3113 = vunpack.c.l.b16 %v2456
    %v3114 = vunpack.c.h.b16 %v2456
    %v3115 = vunpack.c.l.b16 %v2457
    %v3116 = vunpack.c.h.b16 %v2457
    %v3117 = vunpack.c.l.b16 %v2458
    %v3118 = vunpack.c.h.b16 %v2458
    %v3119 = vunpack.c.l.b16 %v2459
    %v3120 = vunpack.c.h.b16 %v2459
    %v3121 = vunpack.c.l.b16 %v2460
    %v3122 = vunpack.c.h.b16 %v2460
    %v3123 = vunpack.c.l.b16 %v2461
    %v3124 = vunpack.c.h.b16 %v2461
    %v3125 = vunpack.c.l.b16 %v2462
    %v3126 = vunpack.c.h.b16 %v2462
    %v3127 = vunpack.c.l.b16 %v2463
    %v3128 = vunpack.c.h.b16 %v2463
    %v3129 = vunpack.c.l.b16 %v2464
    %v3130 = vunpack.c.h.b16 %v2464
    %v3131 = vunpack.c.l.b16 %v2465
    %v3132 = vunpack.c.h.b16 %v2465
    %v3133 = vunpack.c.l.b16 %v2466
    %v3134 = vunpack.c.h.b16 %v2466
    %v3135 = vunpack.c.l.b16 %v2467
    %v3136 = vunpack.c.h.b16 %v2467
    %v3137 = vunpack.c.l.b16 %v2468
    %v3138 = vunpack.c.h.b16 %v2468
    %v3139 = vunpack.c.l.b16 %v2469
    %v3140 = vunpack.c.h.b16 %v2469
    %v3141 = vunpack.c.l.b16 %v2470
    %v3142 = vunpack.c.h.b16 %v2470
    %v3143 = vunpack.c.l.b16 %v2471
    %v3144 = vunpack.c.h.b16 %v2471
    %v3145 = vunpack.c.l.b16 %v2472
    %v3146 = vunpack.c.h.b16 %v2472
    %v3147 = vunpack.c.l.b16 %v2473
    %v3148 = vunpack.c.h.b16 %v2473
    %v3149 = vunpack.c.l.b16 %v2474
    %v3150 = vunpack.c.h.b16 %v2474
    %v3151 = vunpack.c.l.b16 %v2475
    %v3152 = vunpack.c.h.b16 %v2475
    %v3153 = vunpack.c.l.b16 %v2476
    %v3154 = vunpack.c.h.b16 %v2476
    %v3155 = vunpack.c.l.b16 %v2477
    %v3156 = vunpack.c.h.b16 %v2477
    %v3157 = vunpack.c.l.b16 %v2478
    %v3158 = vunpack.c.h.b16 %v2478
    %v3159 = vunpack.c.l.b16 %v2479
    %v3160 = vunpack.c.h.b16 %v2479
    %v3161 = vunpack.c.l.b16 %v2480
    %v3162 = vunpack.c.h.b16 %v2480
    %v3163 = vunpack.c.l.b16 %v2481
    %v3164 = vunpack.c.h.b16 %v2481
    %v3165 = vunpack.c.l.b16 %v2482
    %v3166 = vunpack.c.h.b16 %v2482
    %v3167 = vunpack.c.l.b16 %v2483
    %v3168 = vunpack.c.h.b16 %v2483
    %v3169 = vunpack.c.l.b16 %v2484
    %v3170 = vunpack.c.h.b16 %v2484
    %v3171 = vunpack.c.l.b16 %v2485
    %v3172 = vunpack.c.h.b16 %v2485
    %v3173 = vunpack.c.l.b16 %v2486
    %v3174 = vunpack.c.h.b16 %v2486
    %v3175 = vunpack.c.l.b16 %v2487
    %v3176 = vunpack.c.h.b16 %v2487
    %v3177 = vunpack.c.l.b16 %v2488
    %v3178 = vunpack.c.h.b16 %v2488
    %v3179 = vunpack.c.l.b16 %v2489
    %v3180 = vunpack.c.h.b16 %v2489
    %v3181 = vunpack.c.l.b16 %v2490
    %v3182 = vunpack.c.h.b16 %v2490
    %v3183 = vunpack.c.l.b16 %v2491
    %v3184 = vunpack.c.h.b16 %v2491
    %v3185 = vunpack.c.l.b16 %v2492
    %v3186 = vunpack.c.h.b16 %v2492
    %v3187 = vunpack.c.l.b16 %v2493
    %v3188 = vunpack.c.h.b16 %v2493
    %v3189 = vunpack.c.l.b16 %v2494
    %v3190 = vunpack.c.h.b16 %v2494
    %v3191 = vunpack.c.l.b16 %v2495
    %v3192 = vunpack.c.h.b16 %v2495
    %v3193 = vunpack.c.l.b16 %v2496
    %v3194 = vunpack.c.h.b16 %v2496
    %v3195 = vunpack.c.l.b16 %v2497
    %v3196 = vunpack.c.h.b16 %v2497
    %v3197 = vunpack.c.l.b16 %v2498
    %v3198 = vunpack.c.h.b16 %v2498
    %v3199 = vunpack.c.l.b16 %v2499
    %v3200 = vunpack.c.h.b16 %v2499
    %v3201 = vunpack.c.l.b16 %v2500
    %v3202 = vunpack.c.h.b16 %v2500
    %v3203 = vunpack.c.l.b16 %v2501
    %v3204 = vunpack.c.h.b16 %v2501
    %v3205 = vunpack.c.l.b16 %v2502
    %v3206 = vunpack.c.h.b16 %v2502
    %v3207 = vunpack.c.l.b16 %v2503
    %v3208 = vunpack.c.h.b16 %v2503
    %v3209 = vunpack.c.l.b16 %v2504
    %v3210 = vunpack.c.h.b16 %v2504
    %v3211 = vunpack.c.l.b16 %v2505
    %v3212 = vunpack.c.h.b16 %v2505
    %v3213 = vunpack.c.l.b16 %v2506
    %v3214 = vunpack.c.h.b16 %v2506
    %v3215 = vunpack.c.l.b16 %v2507
    %v3216 = vunpack.c.h.b16 %v2507
    %v3217 = vunpack.c.l.b16 %v2508
    %v3218 = vunpack.c.h.b16 %v2508
    %v3219 = vunpack.c.l.b16 %v2509
    %v3220 = vunpack.c.h.b16 %v2509
    %v3221 = vunpack.c.l.b16 %v2510
    %v3222 = vunpack.c.h.b16 %v2510
    %v3223 = vunpack.c.l.b16 %v2511
    %v3224 = vunpack.c.h.b16 %v2511
    %v3225 = vunpack.c.l.b16 %v2512
    %v3226 = vunpack.c.h.b16 %v2512
    %v3227 = vunpack.c.l.b16 %v2513
    %v3228 = vunpack.c.h.b16 %v2513
    %v3229 = vunpack.c.l.b16 %v2514
    %v3230 = vunpack.c.h.b16 %v2514
    %v3231 = vunpack.c.l.b16 %v2515
    %v3232 = vunpack.c.h.b16 %v2515
    %v3233 = vunpack.c.l.b16 %v2516
    %v3234 = vunpack.c.h.b16 %v2516
    %v3235 = vunpack.c.l.b16 %v2517
    %v3236 = vunpack.c.h.b16 %v2517
    %v3237 = vunpack.c.l.b16 %v2518
    %v3238 = vunpack.c.h.b16 %v2518
    %v3239 = vunpack.c.l.b16 %v2519
    %v3240 = vunpack.c.h.b16 %v2519
    %v3241 = vunpack.c.l.b16 %v2520
    %v3242 = vunpack.c.h.b16 %v2520
    %v3243 = vunpack.c.l.b16 %v2521
    %v3244 = vunpack.c.h.b16 %v2521
    %v3245 = vunpack.c.l.b16 %v2522
    %v3246 = vunpack.c.h.b16 %v2522
    %v3247 = vunpack.c.l.b16 %v2523
    %v3248 = vunpack.c.h.b16 %v2523
    %v3249 = vunpack.c.l.b16 %v2524
    %v3250 = vunpack.c.h.b16 %v2524
    %v3251 = vunpack.c.l.b16 %v2525
    %v3252 = vunpack.c.h.b16 %v2525
    %v3253 = vunpack.c.l.b16 %v2526
    %v3254 = vunpack.c.h.b16 %v2526
    %v3255 = vunpack.c.l.b16 %v2527
    %v3256 = vunpack.c.h.b16 %v2527
    %v3257 = vunpack.c.l.b16 %v2528
    %v3258 = vunpack.c.h.b16 %v2528
    %v3259 = vunpack.c.l.b16 %v2529
    %v3260 = vunpack.c.h.b16 %v2529
    %v3261 = vunpack.c.l.b16 %v2530
    %v3262 = vunpack.c.h.b16 %v2530
    %v3263 = vunpack.c.l.b16 %v2531
    %v3264 = vunpack.c.h.b16 %v2531
    %v3265 = vunpack.c.l.b16 %v2532
    %v3266 = vunpack.c.h.b16 %v2532
    %v3267 = vunpack.c.l.b16 %v2533
    %v3268 = vunpack.c.h.b16 %v2533
    %v3269 = vunpack.c.l.b16 %v2534
    %v3270 = vunpack.c.h.b16 %v2534
    %v3271 = vunpack.c.l.b16 %v2535
    %v3272 = vunpack.c.h.b16 %v2535
    %v3273 = vunpack.c.l.b16 %v2536
    %v3274 = vunpack.c.h.b16 %v2536
    %v3275 = vunpack.c.l.b16 %v2537
    %v3276 = vunpack.c.h.b16 %v2537
    %v3277 = vunpack.c.l.b16 %v2538
    %v3278 = vunpack.c.h.b16 %v2538
    %v3279 = vunpack.c.l.b16 %v2539
    %v3280 = vunpack.c.h.b16 %v2539
    %v3281 = vunpack.c.l.b16 %v2540
    %v3282 = vunpack.c.h.b16 %v2540
    %v3283 = vunpack.c.l.b16 %v2541
    %v3284 = vunpack.c.h.b16 %v2541
    %v3285 = vunpack.c.l.b16 %v2542
    %v3286 = vunpack.c.h.b16 %v2542
    %v3287 = vunpack.c.l.b16 %v2543
    %v3288 = vunpack.c.h.b16 %v2543
    %v3289 = vunpack.c.l.b16 %v2544
    %v3290 = vunpack.c.h.b16 %v2544
    %v3291 = vunpack.c.l.b16 %v2545
    %v3292 = vunpack.c.h.b16 %v2545
    %v3293 = vunpack.c.l.b16 %v2546
    %v3294 = vunpack.c.h.b16 %v2546
    %v3295 = vunpack.c.l.b16 %v2547
    %v3296 = vunpack.c.h.b16 %v2547
    %v3297 = vunpack.c.l.b16 %v2548
    %v3298 = vunpack.c.h.b16 %v2548
    %v3299 = vunpack.c.l.b16 %v2549
    %v3300 = vunpack.c.h.b16 %v2549
    %v3301 = vunpack.c.l.b16 %v2550
    %v3302 = vunpack.c.h.b16 %v2550
    %v3303 = vunpack.c.l.b16 %v2551
    %v3304 = vunpack.c.h.b16 %v2551
    %v3305 = vunpack.c.l.b16 %v2552
    %v3306 = vunpack.c.h.b16 %v2552
    %v3307 = vunpack.c.l.b16 %v2553
    %v3308 = vunpack.c.h.b16 %v2553
    %v3309 = vunpack.c.l.b16 %v2554
    %v3310 = vunpack.c.h.b16 %v2554
    %v3311 = vunpack.c.l.b16 %v2555
    %v3312 = vunpack.c.h.b16 %v2555
    %v3313 = vunpack.c.l.b16 %v2556
    %v3314 = vunpack.c.h.b16 %v2556
    %v3315 = vunpack.c.l.b16 %v2557
    %v3316 = vunpack.c.h.b16 %v2557
    %v3317 = vunpack.c.l.b16 %v2558
    %v3318 = vunpack.c.h.b16 %v2558
    %v3319 = vunpack.c.l.b16 %v2559
    %v3320 = vunpack.c.h.b16 %v2559
    %v3321 = vunpack.c.l.b16 %v2560
    %v3322 = vunpack.c.h.b16 %v2560
    %v3323 = vunpack.c.l.b16 %v2561
    %v3324 = vunpack.c.h.b16 %v2561
    %v3325 = vunpack.c.l.b16 %v2562
    %v3326 = vunpack.c.h.b16 %v2562
    %v3327 = vunpack.c.l.b16 %v2563
    %v3328 = vunpack.c.h.b16 %v2563
    %v3329 = vunpack.c.l.b16 %v2564
    %v3330 = vunpack.c.h.b16 %v2564
    %v3331 = vunpack.c.l.b16 %v2565
    %v3332 = vunpack.c.h.b16 %v2565
    %v3333 = vunpack.c.l.b16 %v2566
    %v3334 = vunpack.c.h.b16 %v2566
    %v3335 = vunpack.c.l.b16 %v2567
    %v3336 = vunpack.c.h.b16 %v2567
    %v3337 = vunpack.c.l.b16 %v2568
    %v3338 = vunpack.c.h.b16 %v2568
    %v3339 = vunpack.c.l.b16 %v2569
    %v3340 = vunpack.c.h.b16 %v2569
    %v3341 = vunpack.c.l.b16 %v2570
    %v3342 = vunpack.c.h.b16 %v2570
    %v3343 = vunpack.c.l.b16 %v2571
    %v3344 = vunpack.c.h.b16 %v2571
    %v3345 = vunpack.c.l.b16 %v2572
    %v3346 = vunpack.c.h.b16 %v2572
    %v3347 = vunpack.c.l.b16 %v2573
    %v3348 = vunpack.c.h.b16 %v2573
    %v3349 = vunpack.c.l.b16 %v2574
    %v3350 = vunpack.c.h.b16 %v2574
    %v3351 = vunpack.c.l.b16 %v2575
    %v3352 = vunpack.c.h.b16 %v2575
    %v3353 = vunpack.c.l.b16 %v2576
    %v3354 = vunpack.c.h.b16 %v2576
    %v3355 = vunpack.c.l.b16 %v2577
    %v3356 = vunpack.c.h.b16 %v2577
    %v3357 = vunpack.c.l.b16 %v2578
    %v3358 = vunpack.c.h.b16 %v2578
    %v3359 = vunpack.c.l.b16 %v2579
    %v3360 = vunpack.c.h.b16 %v2579
    %v3361 = vunpack.c.l.b16 %v2580
    %v3362 = vunpack.c.h.b16 %v2580
    %v3363 = vunpack.c.l.b16 %v2581
    %v3364 = vunpack.c.h.b16 %v2581
    %v3365 = vunpack.c.l.b16 %v2582
    %v3366 = vunpack.c.h.b16 %v2582
    %v3367 = vunpack.c.l.b16 %v2583
    %v3368 = vunpack.c.h.b16 %v2583
    %v3369 = vunpack.c.l.b16 %v2584
    %v3370 = vunpack.c.h.b16 %v2584
    %v3371 = vunpack.c.l.b16 %v2585
    %v3372 = vunpack.c.h.b16 %v2585
    %v3373 = vunpack.c.l.b16 %v2586
    %v3374 = vunpack.c.h.b16 %v2586
    %v3375 = vunpack.c.l.b16 %v2587
    %v3376 = vunpack.c.h.b16 %v2587
    %v3377 = vunpack.c.l.b16 %v2588
    %v3378 = vunpack.c.h.b16 %v2588
    %v3379 = vpack.c.b16 %v2871, %v2867
    %v3380 = vpack.c.b16 %v2872, %v2868
    %v3381 = vpack.c.b16 %v2873, %v2869
    %v3382 = vpack.c.b16 %v2874, %v2870
    %v3383 = vpack.c.b16 %v2879, %v2875
    %v3384 = vpack.c.b16 %v2880, %v2876
    %v3385 = vpack.c.b16 %v2881, %v2877
    %v3386 = vpack.c.b16 %v2882, %v2878
    %v3387 = vpack.c.b16 %v2887, %v2883
    %v3388 = vpack.c.b16 %v2888, %v2884
    %v3389 = vpack.c.b16 %v2889, %v2885
    %v3390 = vpack.c.b16 %v2890, %v2886
    %v3391 = vpack.c.b16 %v2895, %v2891
    %v3392 = vpack.c.b16 %v2896, %v2892
    %v3393 = vpack.c.b16 %v2897, %v2893
    %v3394 = vpack.c.b16 %v2898, %v2894
    %v3395 = vpack.c.b16 %v2903, %v2899
    %v3396 = vpack.c.b16 %v2904, %v2900
    %v3397 = vpack.c.b16 %v2905, %v2901
    %v3398 = vpack.c.b16 %v2906, %v2902
    %v3399 = vpack.c.b16 %v2911, %v2907
    %v3400 = vpack.c.b16 %v2912, %v2908
    %v3401 = vpack.c.b16 %v2913, %v2909
    %v3402 = vpack.c.b16 %v2914, %v2910
    %v3403 = vpack.c.b16 %v2919, %v2915
    %v3404 = vpack.c.b16 %v2920, %v2916
    %v3405 = vpack.c.b16 %v2921, %v2917
    %v3406 = vpack.c.b16 %v2922, %v2918
    %v3407 = vpack.c.b16 %v2927, %v2923
    %v3408 = vpack.c.b16 %v2928, %v2924
    %v3409 = vpack.c.b16 %v2929, %v2925
    %v3410 = vpack.c.b16 %v2930, %v2926
    %v3411 = vpack.c.b16 %v2935, %v2931
    %v3412 = vpack.c.b16 %v2936, %v2932
    %v3413 = vpack.c.b16 %v2937, %v2933
    %v3414 = vpack.c.b16 %v2938, %v2934
    %v3415 = vpack.c.b16 %v2943, %v2939
    %v3416 = vpack.c.b16 %v2944, %v2940
    %v3417 = vpack.c.b16 %v2945, %v2941
    %v3418 = vpack.c.b16 %v2946, %v2942
    %v3419 = vpack.c.b16 %v2951, %v2947
    %v3420 = vpack.c.b16 %v2952, %v2948
    %v3421 = vpack.c.b16 %v2953, %v2949
    %v3422 = vpack.c.b16 %v2954, %v2950
    %v3423 = vpack.c.b16 %v2959, %v2955
    %v3424 = vpack.c.b16 %v2960, %v2956
    %v3425 = vpack.c.b16 %v2961, %v2957
    %v3426 = vpack.c.b16 %v2962, %v2958
    %v3427 = vpack.c.b16 %v2967, %v2963
    %v3428 = vpack.c.b16 %v2968, %v2964
    %v3429 = vpack.c.b16 %v2969, %v2965
    %v3430 = vpack.c.b16 %v2970, %v2966
    %v3431 = vpack.c.b16 %v2975, %v2971
    %v3432 = vpack.c.b16 %v2976, %v2972
    %v3433 = vpack.c.b16 %v2977, %v2973
    %v3434 = vpack.c.b16 %v2978, %v2974
    %v3435 = vpack.c.b16 %v2983, %v2979
    %v3436 = vpack.c.b16 %v2984, %v2980
    %v3437 = vpack.c.b16 %v2985, %v2981
    %v3438 = vpack.c.b16 %v2986, %v2982
    %v3439 = vpack.c.b16 %v2991, %v2987
    %v3440 = vpack.c.b16 %v2992, %v2988
    %v3441 = vpack.c.b16 %v2993, %v2989
    %v3442 = vpack.c.b16 %v2994, %v2990
    %v3443 = vpack.c.b16 %v2999, %v2995
    %v3444 = vpack.c.b16 %v3000, %v2996
    %v3445 = vpack.c.b16 %v3001, %v2997
    %v3446 = vpack.c.b16 %v3002, %v2998
    %v3447 = vpack.c.b16 %v3007, %v3003
    %v3448 = vpack.c.b16 %v3008, %v3004
    %v3449 = vpack.c.b16 %v3009, %v3005
    %v3450 = vpack.c.b16 %v3010, %v3006
    %v3451 = vpack.c.b16 %v3015, %v3011
    %v3452 = vpack.c.b16 %v3016, %v3012
    %v3453 = vpack.c.b16 %v3017, %v3013
    %v3454 = vpack.c.b16 %v3018, %v3014
    %v3455 = vpack.c.b16 %v3023, %v3019
    %v3456 = vpack.c.b16 %v3024, %v3020
    %v3457 = vpack.c.b16 %v3025, %v3021
    %v3458 = vpack.c.b16 %v3026, %v3022
    %v3459 = vpack.c.b16 %v3031, %v3027
    %v3460 = vpack.c.b16 %v3032, %v3028
    %v3461 = vpack.c.b16 %v3033, %v3029
    %v3462 = vpack.c.b16 %v3034, %v3030
    %v3463 = vpack.c.b16 %v3039, %v3035
    %v3464 = vpack.c.b16 %v3040, %v3036
    %v3465 = vpack.c.b16 %v3041, %v3037
    %v3466 = vpack.c.b16 %v3042, %v3038
    %v3467 = vpack.c.b16 %v3047, %v3043
    %v3468 = vpack.c.b16 %v3048, %v3044
    %v3469 = vpack.c.b16 %v3049, %v3045
    %v3470 = vpack.c.b16 %v3050, %v3046
    %v3471 = vpack.c.b16 %v3055, %v3051
    %v3472 = vpack.c.b16 %v3056, %v3052
    %v3473 = vpack.c.b16 %v3057, %v3053
    %v3474 = vpack.c.b16 %v3058, %v3054
    %v3475 = vpack.c.b16 %v3063, %v3059
    %v3476 = vpack.c.b16 %v3064, %v3060
    %v3477 = vpack.c.b16 %v3065, %v3061
    %v3478 = vpack.c.b16 %v3066, %v3062
    %v3479 = vpack.c.b16 %v3071, %v3067
    %v3480 = vpack.c.b16 %v3072, %v3068
    %v3481 = vpack.c.b16 %v3073, %v3069
    %v3482 = vpack.c.b16 %v3074, %v3070
    %v3483 = vpack.c.b16 %v3079, %v3075
    %v3484 = vpack.c.b16 %v3080, %v3076
    %v3485 = vpack.c.b16 %v3081, %v3077
    %v3486 = vpack.c.b16 %v3082, %v3078
    %v3487 = vpack.c.b16 %v3087, %v3083
    %v3488 = vpack.c.b16 %v3088, %v3084
    %v3489 = vpack.c.b16 %v3089, %v3085
    %v3490 = vpack.c.b16 %v3090, %v3086
    %v3491 = vpack.c.b16 %v3095, %v3091
    %v3492 = vpack.c.b16 %v3096, %v3092
    %v3493 = vpack.c.b16 %v3097, %v3093
    %v3494 = vpack.c.b16 %v3098, %v3094
    %v3495 = vpack.c.b16 %v3103, %v3099
    %v3496 = vpack.c.b16 %v3104, %v3100
    %v3497 = vpack.c.b16 %v3105, %v3101
    %v3498 = vpack.c.b16 %v3106, %v3102
    %v3499 = vpack.c.b16 %v3111, %v3107
    %v3500 = vpack.c.b16 %v3112, %v3108
    %v3501 = vpack.c.b16 %v3113, %v3109
    %v3502 = vpack.c.b16 %v3114, %v3110
    %v3503 = vpack.c.b16 %v3119, %v3115
    %v3504 = vpack.c.b16 %v3120, %v3116
    %v3505 = vpack.c.b16 %v3121, %v3117
    %v3506 = vpack.c.b16 %v3122, %v3118
    %v3507 = vpack.c.b16 %v3127, %v3123
    %v3508 = vpack.c.b16 %v3128, %v3124
    %v3509 = vpack.c.b16 %v3129, %v3125
    %v3510 = vpack.c.b16 %v3130, %v3126
    %v3511 = vpack.c.b16 %v3135, %v3131
    %v3512 = vpack.c.b16 %v3136, %v3132
    %v3513 = vpack.c.b16 %v3137, %v3133
    %v3514 = vpack.c.b16 %v3138, %v3134
    %v3515 = vpack.c.b16 %v3143, %v3139
    %v3516 = vpack.c.b16 %v3144, %v3140
    %v3517 = vpack.c.b16 %v3145, %v3141
    %v3518 = vpack.c.b16 %v3146, %v3142
    %v3519 = vpack.c.b16 %v3151, %v3147
    %v3520 = vpack.c.b16 %v3152, %v3148
    %v3521 = vpack.c.b16 %v3153, %v3149
    %v3522 = vpack.c.b16 %v3154, %v3150
    %v3523 = vpack.c.b16 %v3159, %v3155
    %v3524 = vpack.c.b16 %v3160, %v3156
    %v3525 = vpack.c.b16 %v3161, %v3157
    %v3526 = vpack.c.b16 %v3162, %v3158
    %v3527 = vpack.c.b16 %v3167, %v3163
    %v3528 = vpack.c.b16 %v3168, %v3164
    %v3529 = vpack.c.b16 %v3169, %v3165
    %v3530 = vpack.c.b16 %v3170, %v3166
    %v3531 = vpack.c.b16 %v3175, %v3171
    %v3532 = vpack.c.b16 %v3176, %v3172
    %v3533 = vpack.c.b16 %v3177, %v3173
    %v3534 = vpack.c.b16 %v3178, %v3174
    %v3535 = vpack.c.b16 %v3183, %v3179
    %v3536 = vpack.c.b16 %v3184, %v3180
    %v3537 = vpack.c.b16 %v3185, %v3181
    %v3538 = vpack.c.b16 %v3186, %v3182
    %v3539 = vpack.c.b16 %v3191, %v3187
    %v3540 = vpack.c.b16 %v3192, %v3188
    %v3541 = vpack.c.b16 %v3193, %v3189
    %v3542 = vpack.c.b16 %v3194, %v3190
    %v3543 = vpack.c.b16 %v3199, %v3195
    %v3544 = vpack.c.b16 %v3200, %v3196
    %v3545 = vpack.c.b16 %v3201, %v3197
    %v3546 = vpack.c.b16 %v3202, %v3198
    %v3547 = vpack.c.b16 %v3207, %v3203
    %v3548 = vpack.c.b16 %v3208, %v3204
    %v3549 = vpack.c.b16 %v3209, %v3205
    %v3550 = vpack.c.b16 %v3210, %v3206
    %v3551 = vpack.c.b16 %v3215, %v3211
    %v3552 = vpack.c.b16 %v3216, %v3212
    %v3553 = vpack.c.b16 %v3217, %v3213
    %v3554 = vpack.c.b16 %v3218, %v3214
    %v3555 = vpack.c.b16 %v3223, %v3219
    %v3556 = vpack.c.b16 %v3224, %v3220
    %v3557 = vpack.c.b16 %v3225, %v3221
    %v3558 = vpack.c.b16 %v3226, %v3222
    %v3559 = vpack.c.b16 %v3231, %v3227
    %v3560 = vpack.c.b16 %v3232, %v3228
    %v3561 = vpack.c.b16 %v3233, %v3229
    %v3562 = vpack.c.b16 %v3234, %v3230
    %v3563 = vpack.c.b16 %v3239, %v3235
    %v3564 = vpack.c.b16 %v3240, %v3236
    %v3565 = vpack.c.b16 %v3241, %v3237
    %v3566 = vpack.c.b16 %v3242, %v3238
    %v3567 = vpack.c.b16 %v3247, %v3243
    %v3568 = vpack.c.b16 %v3248, %v3244
    %v3569 = vpack.c.b16 %v3249, %v3245
    %v3570 = vpack.c.b16 %v3250, %v3246
    %v3571 = vpack.c.b16 %v3255, %v3251
    %v3572 = vpack.c.b16 %v3256, %v3252
    %v3573 = vpack.c.b16 %v3257, %v3253
    %v3574 = vpack.c.b16 %v3258, %v3254
    %v3575 = vpack.c.b16 %v3263, %v3259
    %v3576 = vpack.c.b16 %v3264, %v3260
    %v3577 = vpack.c.b16 %v3265, %v3261
    %v3578 = vpack.c.b16 %v3266, %v3262
    %v3579 = vpack.c.b16 %v3271, %v3267
    %v3580 = vpack.c.b16 %v3272, %v3268
    %v3581 = vpack.c.b16 %v3273, %v3269
    %v3582 = vpack.c.b16 %v3274, %v3270
    %v3583 = vpack.c.b16 %v3279, %v3275
    %v3584 = vpack.c.b16 %v3280, %v3276
    %v3585 = vpack.c.b16 %v3281, %v3277
    %v3586 = vpack.c.b16 %v3282, %v3278
    %v3587 = vpack.c.b16 %v3287, %v3283
    %v3588 = vpack.c.b16 %v3288, %v3284
    %v3589 = vpack.c.b16 %v3289, %v3285
    %v3590 = vpack.c.b16 %v3290, %v3286
    %v3591 = vpack.c.b16 %v3295, %v3291
    %v3592 = vpack.c.b16 %v3296, %v3292
    %v3593 = vpack.c.b16 %v3297, %v3293
    %v3594 = vpack.c.b16 %v3298, %v3294
    %v3595 = vpack.c.b16 %v3303, %v3299
    %v3596 = vpack.c.b16 %v3304, %v3300
    %v3597 = vpack.c.b16 %v3305, %v3301
    %v3598 = vpack.c.b16 %v3306, %v3302
    %v3599 = vpack.c.b16 %v3311, %v3307
    %v3600 = vpack.c.b16 %v3312, %v3308
    %v3601 = vpack.c.b16 %v3313, %v3309
    %v3602 = vpack.c.b16 %v3314, %v3310
    %v3603 = vpack.c.b16 %v3319, %v3315
    %v3604 = vpack.c.b16 %v3320, %v3316
    %v3605 = vpack.c.b16 %v3321, %v3317
    %v3606 = vpack.c.b16 %v3322, %v3318
    %v3607 = vpack.c.b16 %v3327, %v3323
    %v3608 = vpack.c.b16 %v3328, %v3324
    %v3609 = vpack.c.b16 %v3329, %v3325
    %v3610 = vpack.c.b16 %v3330, %v3326
    %v3611 = vpack.c.b16 %v3335, %v3331
    %v3612 = vpack.c.b16 %v3336, %v3332
    %v3613 = vpack.c.b16 %v3337, %v3333
    %v3614 = vpack.c.b16 %v3338, %v3334
    %v3615 = vpack.c.b16 %v3343, %v3339
    %v3616 = vpack.c.b16 %v3344, %v3340
    %v3617 = vpack.c.b16 %v3345, %v3341
    %v3618 = vpack.c.b16 %v3346, %v3342
    %v3619 = vpack.c.b16 %v3351, %v3347
    %v3620 = vpack.c.b16 %v3352, %v3348
    %v3621 = vpack.c.b16 %v3353, %v3349
    %v3622 = vpack.c.b16 %v3354, %v3350
    %v3623 = vpack.c.b16 %v3359, %v3355
    %v3624 = vpack.c.b16 %v3360, %v3356
    %v3625 = vpack.c.b16 %v3361, %v3357
    %v3626 = vpack.c.b16 %v3362, %v3358
    %v3627 = vpack.c.b16 %v3367, %v3363
    %v3628 = vpack.c.b16 %v3368, %v3364
    %v3629 = vpack.c.b16 %v3369, %v3365
    %v3630 = vpack.c.b16 %v3370, %v3366
    %v3631 = vpack.c.b16 %v3375, %v3371
    %v3632 = vpack.c.b16 %v3376, %v3372
    %v3633 = vpack.c.b16 %v3377, %v3373
    %v3634 = vpack.c.b16 %v3378, %v3374
    %3891 = vmatprep.subr.bf16.mxu0 %v3380
    %3892 = vmatpush1.bf16.msra.mxu0 %v3379
    %3893 = vmatprep.subr.bf16.mxu0 %v3384
    %3894 = vmatpush1.bf16.msra.mxu0 %v3383
    %3895 = vmatprep.subr.bf16.mxu0 %v3388
    %3896 = vmatpush1.bf16.msra.mxu0 %v3387
    %3897 = vmatprep.subr.bf16.mxu0 %v3392
    %3898 = vmatpush1.bf16.msra.mxu0 %v3391
    %3899 = vmatprep.subr.bf16.mxu0 %v3396
    %3900 = vmatpush1.bf16.msra.mxu0 %v3395
    %3901 = vmatprep.subr.bf16.mxu0 %v3400
    %3902 = vmatpush1.bf16.msra.mxu0 %v3399
    %3903 = vmatprep.subr.bf16.mxu0 %v3404
    %3904 = vmatpush1.bf16.msra.mxu0 %v3403
    %3905 = vmatprep.subr.bf16.mxu0 %v3408
    %3906 = vmatpush1.bf16.msra.mxu0 %v3407
    %3907 = vmatprep.subr.bf16.mxu0 %v3412
    %3908 = vmatpush1.bf16.msra.mxu0 %v3411
    %3909 = vmatprep.subr.bf16.mxu0 %v3416
    %3910 = vmatpush1.bf16.msra.mxu0 %v3415
    %3911 = vmatprep.subr.bf16.mxu0 %v3420
    %3912 = vmatpush1.bf16.msra.mxu0 %v3419
    %3913 = vmatprep.subr.bf16.mxu0 %v3424
    %3914 = vmatpush1.bf16.msra.mxu0 %v3423
    %3915 = vmatprep.subr.bf16.mxu0 %v3428
    %3916 = vmatpush1.bf16.msra.mxu0 %v3427
    %3917 = vmatprep.subr.bf16.mxu0 %v3432
    %3918 = vmatpush1.bf16.msra.mxu0 %v3431
    %3919 = vmatprep.subr.bf16.mxu0 %v3436
    %3920 = vmatpush1.bf16.msra.mxu0 %v3435
    %3921 = vmatprep.subr.bf16.mxu0 %v3440
    %3922 = vmatpush1.bf16.msra.mxu0 %v3439
    %3923 = vmatprep.mubr.bf16.mxu0 %v2326
    %3924 = vmatmul.mubr.bf16.gmra.mrb[0].mxu0 %v2325
    %v3925 = vpop.f32.mrb[0].mxu0
    %v3926 = vadd.f32 %v2594, %v3925
    %v3927 = vpop.f32.mrb[0].mxu0
    %v3928 = vadd.f32 %v2598, %v3927
    %v3929 = vpop.f32.mrb[0].mxu0
    %v3930 = vpop.f32.mrb[0].mxu0
    %3931 = vdwg.mxu0
    %3932 = vmatprep.subr.bf16.mxu0 %v3444
    %3933 = vmatpush1.bf16.msra.mxu0 %v3443
    %3934 = vmatprep.subr.bf16.mxu0 %v3448
    %3935 = vmatpush1.bf16.msra.mxu0 %v3447
    %3936 = vmatprep.subr.bf16.mxu0 %v3452
    %3937 = vmatpush1.bf16.msra.mxu0 %v3451
    %3938 = vmatprep.subr.bf16.mxu0 %v3456
    %3939 = vmatpush1.bf16.msra.mxu0 %v3455
    %3940 = vmatprep.subr.bf16.mxu0 %v3460
    %3941 = vmatpush1.bf16.msra.mxu0 %v3459
    %3942 = vmatprep.subr.bf16.mxu0 %v3464
    %3943 = vmatpush1.bf16.msra.mxu0 %v3463
    %3944 = vmatprep.subr.bf16.mxu0 %v3468
    %3945 = vmatpush1.bf16.msra.mxu0 %v3467
    %3946 = vmatprep.subr.bf16.mxu0 %v3472
    %3947 = vmatpush1.bf16.msra.mxu0 %v3471
    %3948 = vmatprep.subr.bf16.mxu0 %v3476
    %3949 = vmatpush1.bf16.msra.mxu0 %v3475
    %3950 = vmatprep.subr.bf16.mxu0 %v3480
    %3951 = vmatpush1.bf16.msra.mxu0 %v3479
    %3952 = vmatprep.subr.bf16.mxu0 %v3484
    %3953 = vmatpush1.bf16.msra.mxu0 %v3483
    %3954 = vmatprep.subr.bf16.mxu0 %v3488
    %3955 = vmatpush1.bf16.msra.mxu0 %v3487
    %3956 = vmatprep.subr.bf16.mxu0 %v3492
    %3957 = vmatpush1.bf16.msra.mxu0 %v3491
    %3958 = vmatprep.subr.bf16.mxu0 %v3496
    %3959 = vmatpush1.bf16.msra.mxu0 %v3495
    %3960 = vmatprep.subr.bf16.mxu0 %v3500
    %3961 = vmatpush1.bf16.msra.mxu0 %v3499
    %3962 = vmatprep.subr.bf16.mxu0 %v3504
    %3963 = vmatpush1.bf16.msra.mxu0 %v3503
    %3964 = vmatprep.mubr.bf16.mxu0 %v2328
    %3965 = vmatmul.mubr.bf16.gmra.mrb[0].mxu0 %v2327
    %v3966 = vpop.f32.mrb[0].mxu0
    %v3967 = vadd.f32 %v3926, %v3966
    %v3968 = vpop.f32.mrb[0].mxu0
    %v3969 = vadd.f32 %v3928, %v3968
    %v3970 = vpop.f32.mrb[0].mxu0
    %v3971 = vpop.f32.mrb[0].mxu0
    %3972 = vdwg.mxu0
    %3973 = vmatprep.subr.bf16.mxu0 %v3508
    %3974 = vmatpush1.bf16.msra.mxu0 %v3507
    %3975 = vmatprep.subr.bf16.mxu0 %v3512
    %3976 = vmatpush1.bf16.msra.mxu0 %v3511
    %3977 = vmatprep.subr.bf16.mxu0 %v3516
    %3978 = vmatpush1.bf16.msra.mxu0 %v3515
    %3979 = vmatprep.subr.bf16.mxu0 %v3520
    %3980 = vmatpush1.bf16.msra.mxu0 %v3519
    %3981 = vmatprep.subr.bf16.mxu0 %v3524
    %3982 = vmatpush1.bf16.msra.mxu0 %v3523
    %3983 = vmatprep.subr.bf16.mxu0 %v3528
    %3984 = vmatpush1.bf16.msra.mxu0 %v3527
    %3985 = vmatprep.subr.bf16.mxu0 %v3532
    %3986 = vmatpush1.bf16.msra.mxu0 %v3531
    %3987 = vmatprep.subr.bf16.mxu0 %v3536
    %3988 = vmatpush1.bf16.msra.mxu0 %v3535
    %3989 = vmatprep.subr.bf16.mxu0 %v3540
    %3990 = vmatpush1.bf16.msra.mxu0 %v3539
    %3991 = vmatprep.subr.bf16.mxu0 %v3544
    %3992 = vmatpush1.bf16.msra.mxu0 %v3543
    %3993 = vmatprep.subr.bf16.mxu0 %v3548
    %3994 = vmatpush1.bf16.msra.mxu0 %v3547
    %3995 = vmatprep.subr.bf16.mxu0 %v3552
    %3996 = vmatpush1.bf16.msra.mxu0 %v3551
    %3997 = vmatprep.subr.bf16.mxu0 %v3556
    %3998 = vmatpush1.bf16.msra.mxu0 %v3555
    %3999 = vmatprep.subr.bf16.mxu0 %v3560
    %4000 = vmatpush1.bf16.msra.mxu0 %v3559
    %4001 = vmatprep.subr.bf16.mxu0 %v3564
    %4002 = vmatpush1.bf16.msra.mxu0 %v3563
    %4003 = vmatprep.subr.bf16.mxu0 %v3568
    %4004 = vmatpush1.bf16.msra.mxu0 %v3567
    %4005 = vmatprep.mubr.bf16.mxu0 %v2330
    %4006 = vmatmul.mubr.bf16.gmra.mrb[0].mxu0 %v2329
    %v4007 = vpop.f32.mrb[0].mxu0
    %v4008 = vadd.f32 %v3967, %v4007
    %v4009 = vpop.f32.mrb[0].mxu0
    %v4010 = vadd.f32 %v3969, %v4009
    %v4011 = vpop.f32.mrb[0].mxu0
    %v4012 = vpop.f32.mrb[0].mxu0
    %4013 = vdwg.mxu0
    %4014 = vmatprep.subr.bf16.mxu0 %v3572
    %4015 = vmatpush1.bf16.msra.mxu0 %v3571
    %4016 = vmatprep.subr.bf16.mxu0 %v3576
    %4017 = vmatpush1.bf16.msra.mxu0 %v3575
    %4018 = vmatprep.subr.bf16.mxu0 %v3580
    %4019 = vmatpush1.bf16.msra.mxu0 %v3579
    %4020 = vmatprep.subr.bf16.mxu0 %v3584
    %4021 = vmatpush1.bf16.msra.mxu0 %v3583
    %4022 = vmatprep.subr.bf16.mxu0 %v3588
    %4023 = vmatpush1.bf16.msra.mxu0 %v3587
    %4024 = vmatprep.subr.bf16.mxu0 %v3592
    %4025 = vmatpush1.bf16.msra.mxu0 %v3591
    %4026 = vmatprep.subr.bf16.mxu0 %v3596
    %4027 = vmatpush1.bf16.msra.mxu0 %v3595
    %4028 = vmatprep.subr.bf16.mxu0 %v3600
    %4029 = vmatpush1.bf16.msra.mxu0 %v3599
    %4030 = vmatprep.subr.bf16.mxu0 %v3604
    %4031 = vmatpush1.bf16.msra.mxu0 %v3603
    %4032 = vmatprep.subr.bf16.mxu0 %v3608
    %4033 = vmatpush1.bf16.msra.mxu0 %v3607
    %4034 = vmatprep.subr.bf16.mxu0 %v3612
    %4035 = vmatpush1.bf16.msra.mxu0 %v3611
    %4036 = vmatprep.subr.bf16.mxu0 %v3616
    %4037 = vmatpush1.bf16.msra.mxu0 %v3615
    %4038 = vmatprep.subr.bf16.mxu0 %v3620
    %4039 = vmatpush1.bf16.msra.mxu0 %v3619
    %4040 = vmatprep.subr.bf16.mxu0 %v3624
    %4041 = vmatpush1.bf16.msra.mxu0 %v3623
    %4042 = vmatprep.subr.bf16.mxu0 %v3628
    %4043 = vmatpush1.bf16.msra.mxu0 %v3627
    %4044 = vmatprep.subr.bf16.mxu0 %v3632
    %4045 = vmatpush1.bf16.msra.mxu0 %v3631
    %4046 = vmatprep.mubr.bf16.mxu0 %v2332
    %4047 = vmatmul.mubr.bf16.gmra.mrb[0].mxu0 %v2331
    %v4048 = vpop.f32.mrb[0].mxu0
    %v4049 = vadd.f32 %v4008, %v4048
    %v4050 = vpop.f32.mrb[0].mxu0
    %v4051 = vadd.f32 %v4010, %v4050
    %v4052 = vpop.f32.mrb[0].mxu0
    %v4053 = vpop.f32.mrb[0].mxu0
    %4054 = vdwg.mxu0
    %4055 = vmatprep.subr.bf16.mxu0 %v3382
    %4056 = vmatpush1.bf16.msra.mxu0 %v3381
    %4057 = vmatprep.subr.bf16.mxu0 %v3386
    %4058 = vmatpush1.bf16.msra.mxu0 %v3385
    %4059 = vmatprep.subr.bf16.mxu0 %v3390
    %4060 = vmatpush1.bf16.msra.mxu0 %v3389
    %4061 = vmatprep.subr.bf16.mxu0 %v3394
    %4062 = vmatpush1.bf16.msra.mxu0 %v3393
    %4063 = vmatprep.subr.bf16.mxu0 %v3398
    %4064 = vmatpush1.bf16.msra.mxu0 %v3397
    %4065 = vmatprep.subr.bf16.mxu0 %v3402
    %4066 = vmatpush1.bf16.msra.mxu0 %v3401
    %4067 = vmatprep.subr.bf16.mxu0 %v3406
    %4068 = vmatpush1.bf16.msra.mxu0 %v3405
    %4069 = vmatprep.subr.bf16.mxu0 %v3410
    %4070 = vmatpush1.bf16.msra.mxu0 %v3409
    %4071 = vmatprep.subr.bf16.mxu0 %v3414
    %4072 = vmatpush1.bf16.msra.mxu0 %v3413
    %4073 = vmatprep.subr.bf16.mxu0 %v3418
    %4074 = vmatpush1.bf16.msra.mxu0 %v3417
    %4075 = vmatprep.subr.bf16.mxu0 %v3422
    %4076 = vmatpush1.bf16.msra.mxu0 %v3421
    %4077 = vmatprep.subr.bf16.mxu0 %v3426
    %4078 = vmatpush1.bf16.msra.mxu0 %v3425
    %4079 = vmatprep.subr.bf16.mxu0 %v3430
    %4080 = vmatpush1.bf16.msra.mxu0 %v3429
    %4081 = vmatprep.subr.bf16.mxu0 %v3434
    %4082 = vmatpush1.bf16.msra.mxu0 %v3433
    %4083 = vmatprep.subr.bf16.mxu0 %v3438
    %4084 = vmatpush1.bf16.msra.mxu0 %v3437
    %4085 = vmatprep.subr.bf16.mxu0 %v3442
    %4086 = vmatpush1.bf16.msra.mxu0 %v3441
    %4087 = vmatprep.mubr.bf16.mxu0 %v2326
    %4088 = vmatmul.mubr.bf16.gmra.mrb[0].mxu0 %v2325
    %v4089 = vpop.f32.mrb[0].mxu0
    %v4090 = vadd.f32 %v2602, %v4089
    %v4091 = vpop.f32.mrb[0].mxu0
    %v4092 = vadd.f32 %v2606, %v4091
    %v4093 = vpop.f32.mrb[0].mxu0
    %v4094 = vpop.f32.mrb[0].mxu0
    %4095 = vdwg.mxu0
    %4096 = vmatprep.subr.bf16.mxu0 %v3446
    %4097 = vmatpush1.bf16.msra.mxu0 %v3445
    %4098 = vmatprep.subr.bf16.mxu0 %v3450
    %4099 = vmatpush1.bf16.msra.mxu0 %v3449
    %4100 = vmatprep.subr.bf16.mxu0 %v3454
    %4101 = vmatpush1.bf16.msra.mxu0 %v3453
    %4102 = vmatprep.subr.bf16.mxu0 %v3458
    %4103 = vmatpush1.bf16.msra.mxu0 %v3457
    %4104 = vmatprep.subr.bf16.mxu0 %v3462
    %4105 = vmatpush1.bf16.msra.mxu0 %v3461
    %4106 = vmatprep.subr.bf16.mxu0 %v3466
    %4107 = vmatpush1.bf16.msra.mxu0 %v3465
    %4108 = vmatprep.subr.bf16.mxu0 %v3470
    %4109 = vmatpush1.bf16.msra.mxu0 %v3469
    %4110 = vmatprep.subr.bf16.mxu0 %v3474
    %4111 = vmatpush1.bf16.msra.mxu0 %v3473
    %4112 = vmatprep.subr.bf16.mxu0 %v3478
    %4113 = vmatpush1.bf16.msra.mxu0 %v3477
    %4114 = vmatprep.subr.bf16.mxu0 %v3482
    %4115 = vmatpush1.bf16.msra.mxu0 %v3481
    %4116 = vmatprep.subr.bf16.mxu0 %v3486
    %4117 = vmatpush1.bf16.msra.mxu0 %v3485
    %4118 = vmatprep.subr.bf16.mxu0 %v3490
    %4119 = vmatpush1.bf16.msra.mxu0 %v3489
    %4120 = vmatprep.subr.bf16.mxu0 %v3494
    %4121 = vmatpush1.bf16.msra.mxu0 %v3493
    %4122 = vmatprep.subr.bf16.mxu0 %v3498
    %4123 = vmatpush1.bf16.msra.mxu0 %v3497
    %4124 = vmatprep.subr.bf16.mxu0 %v3502
    %4125 = vmatpush1.bf16.msra.mxu0 %v3501
    %4126 = vmatprep.subr.bf16.mxu0 %v3506
    %4127 = vmatpush1.bf16.msra.mxu0 %v3505
    %4128 = vmatprep.mubr.bf16.mxu0 %v2328
    %4129 = vmatmul.mubr.bf16.gmra.mrb[0].mxu0 %v2327
    %v4130 = vpop.f32.mrb[0].mxu0
    %v4131 = vadd.f32 %v4090, %v4130
    %v4132 = vpop.f32.mrb[0].mxu0
    %v4133 = vadd.f32 %v4092, %v4132
    %v4134 = vpop.f32.mrb[0].mxu0
    %v4135 = vpop.f32.mrb[0].mxu0
    %4136 = vdwg.mxu0
    %4137 = vmatprep.subr.bf16.mxu0 %v3510
    %4138 = vmatpush1.bf16.msra.mxu0 %v3509
    %4139 = vmatprep.subr.bf16.mxu0 %v3514
    %4140 = vmatpush1.bf16.msra.mxu0 %v3513
    %4141 = vmatprep.subr.bf16.mxu0 %v3518
    %4142 = vmatpush1.bf16.msra.mxu0 %v3517
    %4143 = vmatprep.subr.bf16.mxu0 %v3522
    %4144 = vmatpush1.bf16.msra.mxu0 %v3521
    %4145 = vmatprep.subr.bf16.mxu0 %v3526
    %4146 = vmatpush1.bf16.msra.mxu0 %v3525
    %4147 = vmatprep.subr.bf16.mxu0 %v3530
    %4148 = vmatpush1.bf16.msra.mxu0 %v3529
    %4149 = vmatprep.subr.bf16.mxu0 %v3534
    %4150 = vmatpush1.bf16.msra.mxu0 %v3533
    %4151 = vmatprep.subr.bf16.mxu0 %v3538
    %4152 = vmatpush1.bf16.msra.mxu0 %v3537
    %4153 = vmatprep.subr.bf16.mxu0 %v3542
    %4154 = vmatpush1.bf16.msra.mxu0 %v3541
    %4155 = vmatprep.subr.bf16.mxu0 %v3546
    %4156 = vmatpush1.bf16.msra.mxu0 %v3545
    %4157 = vmatprep.subr.bf16.mxu0 %v3550
    %4158 = vmatpush1.bf16.msra.mxu0 %v3549
    %4159 = vmatprep.subr.bf16.mxu0 %v3554
    %4160 = vmatpush1.bf16.msra.mxu0 %v3553
    %4161 = vmatprep.subr.bf16.mxu0 %v3558
    %4162 = vmatpush1.bf16.msra.mxu0 %v3557
    %4163 = vmatprep.subr.bf16.mxu0 %v3562
    %4164 = vmatpush1.bf16.msra.mxu0 %v3561
    %4165 = vmatprep.subr.bf16.mxu0 %v3566
    %4166 = vmatpush1.bf16.msra.mxu0 %v3565
    %4167 = vmatprep.subr.bf16.mxu0 %v3570
    %4168 = vmatpush1.bf16.msra.mxu0 %v3569
    %4169 = vmatprep.mubr.bf16.mxu0 %v2330
    %4170 = vmatmul.mubr.bf16.gmra.mrb[0].mxu0 %v2329
    %v4171 = vpop.f32.mrb[0].mxu0
    %v4172 = vadd.f32 %v4131, %v4171
    %v4173 = vpop.f32.mrb[0].mxu0
    %v4174 = vadd.f32 %v4133, %v4173
    %v4175 = vpop.f32.mrb[0].mxu0
    %v4176 = vpop.f32.mrb[0].mxu0
    %4177 = vdwg.mxu0
    %4178 = vmatprep.subr.bf16.mxu0 %v3574
    %4179 = vmatpush1.bf16.msra.mxu0 %v3573
    %4180 = vmatprep.subr.bf16.mxu0 %v3578
    %4181 = vmatpush1.bf16.msra.mxu0 %v3577
    %4182 = vmatprep.subr.bf16.mxu0 %v3582
    %4183 = vmatpush1.bf16.msra.mxu0 %v3581
    %4184 = vmatprep.subr.bf16.mxu0 %v3586
    %4185 = vmatpush1.bf16.msra.mxu0 %v3585
    %4186 = vmatprep.subr.bf16.mxu0 %v3590
    %4187 = vmatpush1.bf16.msra.mxu0 %v3589
    %4188 = vmatprep.subr.bf16.mxu0 %v3594
    %4189 = vmatpush1.bf16.msra.mxu0 %v3593
    %4190 = vmatprep.subr.bf16.mxu0 %v3598
    %4191 = vmatpush1.bf16.msra.mxu0 %v3597
    %4192 = vmatprep.subr.bf16.mxu0 %v3602
    %4193 = vmatpush1.bf16.msra.mxu0 %v3601
    %4194 = vmatprep.subr.bf16.mxu0 %v3606
    %4195 = vmatpush1.bf16.msra.mxu0 %v3605
    %4196 = vmatprep.subr.bf16.mxu0 %v3610
    %4197 = vmatpush1.bf16.msra.mxu0 %v3609
    %4198 = vmatprep.subr.bf16.mxu0 %v3614
    %4199 = vmatpush1.bf16.msra.mxu0 %v3613
    %4200 = vmatprep.subr.bf16.mxu0 %v3618
    %4201 = vmatpush1.bf16.msra.mxu0 %v3617
    %4202 = vmatprep.subr.bf16.mxu0 %v3622
    %4203 = vmatpush1.bf16.msra.mxu0 %v3621
    %4204 = vmatprep.subr.bf16.mxu0 %v3626
    %4205 = vmatpush1.bf16.msra.mxu0 %v3625
    %4206 = vmatprep.subr.bf16.mxu0 %v3630
    %4207 = vmatpush1.bf16.msra.mxu0 %v3629
    %4208 = vmatprep.subr.bf16.mxu0 %v3634
    %4209 = vmatpush1.bf16.msra.mxu0 %v3633
    %4210 = vmatprep.mubr.bf16.mxu0 %v2332
    %4211 = vmatmul.mubr.bf16.gmra.mrb[0].mxu0 %v2331
    %v4212 = vpop.f32.mrb[0].mxu0
    %v4213 = vadd.f32 %v4172, %v4212
    %v4214 = vpop.f32.mrb[0].mxu0
    %v4215 = vadd.f32 %v4174, %v4214
    %v4216 = vpop.f32.mrb[0].mxu0
    %v4217 = vpop.f32.mrb[0].mxu0
    %4218 = vdwg.mxu0
    %v4219 = vmul.f32 %v4049, %v4049
    %v4220 = vmul.f32 %v4051, %v4051
    %v4221 = vmul.f32 %v4213, %v4213
    %v4222 = vmul.f32 %v4215, %v4215
    %v4223 = vmul.f32 %v4049, %v4219
    %v4224 = vmul.f32 %v4051, %v4220
    %v4225 = vmul.f32 %v4213, %v4221
    %v4226 = vmul.f32 %v4215, %v4222
    %v4227 = vmul.f32 %v4223, 0.044715
    %v4228 = vmul.f32 %v4224, 0.044715
    %v4229 = vmul.f32 %v4225, 0.044715
    %v4230 = vmul.f32 %v4226, 0.044715
    %v4231 = vadd.f32 %v4049, %v4227
    %v4232 = vadd.f32 %v4051, %v4228
    %v4233 = vadd.f32 %v4213, %v4229
    %v4234 = vadd.f32 %v4215, %v4230
    %v4235 = vmul.f32 %v4231, 0.7978846
    %v4236 = vmul.f32 %v4232, 0.7978846
    %v4237 = vmul.f32 %v4233, 0.7978846
    %v4238 = vmul.f32 %v4234, 0.7978846
    %v4239 = vtanh.pop %v4235
    %v4240 = vtanh.pop %v4236
    %v4241 = vtanh.pop %v4237
    %v4242 = vtanh.pop %v4238
    %v4243 = vadd.f32 %v4239, 1.0
    %v4244 = vadd.f32 %v4240, 1.0
    %v4245 = vadd.f32 %v4241, 1.0
    %v4246 = vadd.f32 %v4242, 1.0
    %v4247 = vmul.f32 %v4243, 0.5
    %v4248 = vmul.f32 %v4244, 0.5
    %v4249 = vmul.f32 %v4245, 0.5
    %v4250 = vmul.f32 %v4246, 0.5
    %v4251 = vmul.f32 %v4049, %v4247
    %v4252 = vmul.f32 %v4051, %v4248
    %v4253 = vmul.f32 %v4213, %v4249
    %v4254 = vmul.f32 %v4215, %v4250
    %v4255 = vpack.c.bf16 %v2301, %v2301
    %v4256 = vpack.c.bf16 %v2302, %v2302
    %v4257 = vpack.c.bf16 %v2303, %v2303
    %v4258 = vpack.c.bf16 %v2304, %v2304
    %v4259 = vld [vmem:[#allocation12] sm:$0xff]
    %v4260 = vld [vmem:[#allocation12 + $0x8] sm:$0xff]
    %v4261 = vld [vmem:[#allocation12 + $0x10] sm:$0xff]
    %v4262 = vld [vmem:[#allocation12 + $0x18] sm:$0xff]
    %v4263 = vld [vmem:[#allocation12 + $0x20] sm:$0xff]
    %v4264 = vld [vmem:[#allocation12 + $0x28] sm:$0xff]
    %v4265 = vld [vmem:[#allocation12 + $0x30] sm:$0xff]
    %v4266 = vld [vmem:[#allocation12 + $0x38] sm:$0xff]
    %v4267 = vld [vmem:[#allocation12 + $0x40] sm:$0xff]
    %v4268 = vld [vmem:[#allocation12 + $0x48] sm:$0xff]
    %v4269 = vld [vmem:[#allocation12 + $0x50] sm:$0xff]
    %v4270 = vld [vmem:[#allocation12 + $0x58] sm:$0xff]
    %v4271 = vld [vmem:[#allocation12 + $0x60] sm:$0xff]
    %v4272 = vld [vmem:[#allocation12 + $0x68] sm:$0xff]
    %v4273 = vld [vmem:[#allocation12 + $0x70] sm:$0xff]
    %v4274 = vld [vmem:[#allocation12 + $0x78] sm:$0xff]
    %v4275 = vld [vmem:[#allocation12 + $0x80] sm:$0xff]
    %v4276 = vld [vmem:[#allocation12 + $0x88] sm:$0xff]
    %v4277 = vld [vmem:[#allocation12 + $0x90] sm:$0xff]
    %v4278 = vld [vmem:[#allocation12 + $0x98] sm:$0xff]
    %v4279 = vld [vmem:[#allocation12 + $0xa0] sm:$0xff]
    %v4280 = vld [vmem:[#allocation12 + $0xa8] sm:$0xff]
    %v4281 = vld [vmem:[#allocation12 + $0xb0] sm:$0xff]
    %v4282 = vld [vmem:[#allocation12 + $0xb8] sm:$0xff]
    %v4283 = vld [vmem:[#allocation12 + $0xc0] sm:$0xff]
    %v4284 = vld [vmem:[#allocation12 + $0xc8] sm:$0xff]
    %v4285 = vld [vmem:[#allocation12 + $0xd0] sm:$0xff]
    %v4286 = vld [vmem:[#allocation12 + $0xd8] sm:$0xff]
    %v4287 = vld [vmem:[#allocation12 + $0xe0] sm:$0xff]
    %v4288 = vld [vmem:[#allocation12 + $0xe8] sm:$0xff]
    %v4289 = vld [vmem:[#allocation12 + $0xf0] sm:$0xff]
    %v4290 = vld [vmem:[#allocation12 + $0xf8] sm:$0xff]
    %v4291 = vld [vmem:[#allocation12 + $0x100] sm:$0xff]
    %v4292 = vld [vmem:[#allocation12 + $0x108] sm:$0xff]
    %v4293 = vld [vmem:[#allocation12 + $0x110] sm:$0xff]
    %v4294 = vld [vmem:[#allocation12 + $0x118] sm:$0xff]
    %v4295 = vld [vmem:[#allocation12 + $0x120] sm:$0xff]
    %v4296 = vld [vmem:[#allocation12 + $0x128] sm:$0xff]
    %v4297 = vld [vmem:[#allocation12 + $0x130] sm:$0xff]
    %v4298 = vld [vmem:[#allocation12 + $0x138] sm:$0xff]
    %v4299 = vld [vmem:[#allocation12 + $0x140] sm:$0xff]
    %v4300 = vld [vmem:[#allocation12 + $0x148] sm:$0xff]
    %v4301 = vld [vmem:[#allocation12 + $0x150] sm:$0xff]
    %v4302 = vld [vmem:[#allocation12 + $0x158] sm:$0xff]
    %v4303 = vld [vmem:[#allocation12 + $0x160] sm:$0xff]
    %v4304 = vld [vmem:[#allocation12 + $0x168] sm:$0xff]
    %v4305 = vld [vmem:[#allocation12 + $0x170] sm:$0xff]
    %v4306 = vld [vmem:[#allocation12 + $0x178] sm:$0xff]
    %v4307 = vld [vmem:[#allocation12 + $0x180] sm:$0xff]
    %v4308 = vld [vmem:[#allocation12 + $0x188] sm:$0xff]
    %v4309 = vld [vmem:[#allocation12 + $0x190] sm:$0xff]
    %v4310 = vld [vmem:[#allocation12 + $0x198] sm:$0xff]
    %v4311 = vld [vmem:[#allocation12 + $0x1a0] sm:$0xff]
    %v4312 = vld [vmem:[#allocation12 + $0x1a8] sm:$0xff]
    %v4313 = vld [vmem:[#allocation12 + $0x1b0] sm:$0xff]
    %v4314 = vld [vmem:[#allocation12 + $0x1b8] sm:$0xff]
    %v4315 = vld [vmem:[#allocation12 + $0x1c0] sm:$0xff]
    %v4316 = vld [vmem:[#allocation12 + $0x1c8] sm:$0xff]
    %v4317 = vld [vmem:[#allocation12 + $0x1d0] sm:$0xff]
    %v4318 = vld [vmem:[#allocation12 + $0x1d8] sm:$0xff]
    %v4319 = vld [vmem:[#allocation12 + $0x1e0] sm:$0xff]
    %v4320 = vld [vmem:[#allocation12 + $0x1e8] sm:$0xff]
    %v4321 = vld [vmem:[#allocation12 + $0x1f0] sm:$0xff]
    %v4322 = vld [vmem:[#allocation12 + $0x1f8] sm:$0xff]
    %v4323 = vld [vmem:[%s13] sm:$0x3]
    %v4325 = vlaneseq
    %v4326 = vshrl.u32 %v4325, 7
    %v4327 = vsub.s32 0, %v4326
    %v4328 = vrot.slane %v4323, %v4327
    %v4329 = vlaneseq
    %v4330 = vshrl.u32 %v4329, 7
    %v4331 = vsub.s32 1, %v4330
    %v4332 = vrot.slane %v4323, %v4331
    %v4399 = vunpack.c.l.b16 %v4259
    %v4400 = vunpack.c.h.b16 %v4259
    %v4401 = vunpack.c.l.b16 %v4260
    %v4402 = vunpack.c.h.b16 %v4260
    %v4403 = vunpack.c.l.b16 %v4261
    %v4404 = vunpack.c.h.b16 %v4261
    %v4405 = vunpack.c.l.b16 %v4262
    %v4406 = vunpack.c.h.b16 %v4262
    %v4407 = vunpack.c.l.b16 %v4263
    %v4408 = vunpack.c.h.b16 %v4263
    %v4409 = vunpack.c.l.b16 %v4264
    %v4410 = vunpack.c.h.b16 %v4264
    %v4411 = vunpack.c.l.b16 %v4265
    %v4412 = vunpack.c.h.b16 %v4265
    %v4413 = vunpack.c.l.b16 %v4266
    %v4414 = vunpack.c.h.b16 %v4266
    %v4415 = vunpack.c.l.b16 %v4267
    %v4416 = vunpack.c.h.b16 %v4267
    %v4417 = vunpack.c.l.b16 %v4268
    %v4418 = vunpack.c.h.b16 %v4268
    %v4419 = vunpack.c.l.b16 %v4269
    %v4420 = vunpack.c.h.b16 %v4269
    %v4421 = vunpack.c.l.b16 %v4270
    %v4422 = vunpack.c.h.b16 %v4270
    %v4423 = vunpack.c.l.b16 %v4271
    %v4424 = vunpack.c.h.b16 %v4271
    %v4425 = vunpack.c.l.b16 %v4272
    %v4426 = vunpack.c.h.b16 %v4272
    %v4427 = vunpack.c.l.b16 %v4273
    %v4428 = vunpack.c.h.b16 %v4273
    %v4429 = vunpack.c.l.b16 %v4274
    %v4430 = vunpack.c.h.b16 %v4274
    %v4431 = vunpack.c.l.b16 %v4275
    %v4432 = vunpack.c.h.b16 %v4275
    %v4433 = vunpack.c.l.b16 %v4276
    %v4434 = vunpack.c.h.b16 %v4276
    %v4435 = vunpack.c.l.b16 %v4277
    %v4436 = vunpack.c.h.b16 %v4277
    %v4437 = vunpack.c.l.b16 %v4278
    %v4438 = vunpack.c.h.b16 %v4278
    %v4439 = vunpack.c.l.b16 %v4279
    %v4440 = vunpack.c.h.b16 %v4279
    %v4441 = vunpack.c.l.b16 %v4280
    %v4442 = vunpack.c.h.b16 %v4280
    %v4443 = vunpack.c.l.b16 %v4281
    %v4444 = vunpack.c.h.b16 %v4281
    %v4445 = vunpack.c.l.b16 %v4282
    %v4446 = vunpack.c.h.b16 %v4282
    %v4447 = vunpack.c.l.b16 %v4283
    %v4448 = vunpack.c.h.b16 %v4283
    %v4449 = vunpack.c.l.b16 %v4284
    %v4450 = vunpack.c.h.b16 %v4284
    %v4451 = vunpack.c.l.b16 %v4285
    %v4452 = vunpack.c.h.b16 %v4285
    %v4453 = vunpack.c.l.b16 %v4286
    %v4454 = vunpack.c.h.b16 %v4286
    %v4455 = vunpack.c.l.b16 %v4287
    %v4456 = vunpack.c.h.b16 %v4287
    %v4457 = vunpack.c.l.b16 %v4288
    %v4458 = vunpack.c.h.b16 %v4288
    %v4459 = vunpack.c.l.b16 %v4289
    %v4460 = vunpack.c.h.b16 %v4289
    %v4461 = vunpack.c.l.b16 %v4290
    %v4462 = vunpack.c.h.b16 %v4290
    %v4463 = vunpack.c.l.b16 %v4291
    %v4464 = vunpack.c.h.b16 %v4291
    %v4465 = vunpack.c.l.b16 %v4292
    %v4466 = vunpack.c.h.b16 %v4292
    %v4467 = vunpack.c.l.b16 %v4293
    %v4468 = vunpack.c.h.b16 %v4293
    %v4469 = vunpack.c.l.b16 %v4294
    %v4470 = vunpack.c.h.b16 %v4294
    %v4471 = vunpack.c.l.b16 %v4295
    %v4472 = vunpack.c.h.b16 %v4295
    %v4473 = vunpack.c.l.b16 %v4296
    %v4474 = vunpack.c.h.b16 %v4296
    %v4475 = vunpack.c.l.b16 %v4297
    %v4476 = vunpack.c.h.b16 %v4297
    %v4477 = vunpack.c.l.b16 %v4298
    %v4478 = vunpack.c.h.b16 %v4298
    %v4479 = vunpack.c.l.b16 %v4299
    %v4480 = vunpack.c.h.b16 %v4299
    %v4481 = vunpack.c.l.b16 %v4300
    %v4482 = vunpack.c.h.b16 %v4300
    %v4483 = vunpack.c.l.b16 %v4301
    %v4484 = vunpack.c.h.b16 %v4301
    %v4485 = vunpack.c.l.b16 %v4302
    %v4486 = vunpack.c.h.b16 %v4302
    %v4487 = vunpack.c.l.b16 %v4303
    %v4488 = vunpack.c.h.b16 %v4303
    %v4489 = vunpack.c.l.b16 %v4304
    %v4490 = vunpack.c.h.b16 %v4304
    %v4491 = vunpack.c.l.b16 %v4305
    %v4492 = vunpack.c.h.b16 %v4305
    %v4493 = vunpack.c.l.b16 %v4306
    %v4494 = vunpack.c.h.b16 %v4306
    %v4495 = vunpack.c.l.b16 %v4307
    %v4496 = vunpack.c.h.b16 %v4307
    %v4497 = vunpack.c.l.b16 %v4308
    %v4498 = vunpack.c.h.b16 %v4308
    %v4499 = vunpack.c.l.b16 %v4309
    %v4500 = vunpack.c.h.b16 %v4309
    %v4501 = vunpack.c.l.b16 %v4310
    %v4502 = vunpack.c.h.b16 %v4310
    %v4503 = vunpack.c.l.b16 %v4311
    %v4504 = vunpack.c.h.b16 %v4311
    %v4505 = vunpack.c.l.b16 %v4312
    %v4506 = vunpack.c.h.b16 %v4312
    %v4507 = vunpack.c.l.b16 %v4313
    %v4508 = vunpack.c.h.b16 %v4313
    %v4509 = vunpack.c.l.b16 %v4314
    %v4510 = vunpack.c.h.b16 %v4314
    %v4511 = vunpack.c.l.b16 %v4315
    %v4512 = vunpack.c.h.b16 %v4315
    %v4513 = vunpack.c.l.b16 %v4316
    %v4514 = vunpack.c.h.b16 %v4316
    %v4515 = vunpack.c.l.b16 %v4317
    %v4516 = vunpack.c.h.b16 %v4317
    %v4517 = vunpack.c.l.b16 %v4318
    %v4518 = vunpack.c.h.b16 %v4318
    %v4519 = vunpack.c.l.b16 %v4319
    %v4520 = vunpack.c.h.b16 %v4319
    %v4521 = vunpack.c.l.b16 %v4320
    %v4522 = vunpack.c.h.b16 %v4320
    %v4523 = vunpack.c.l.b16 %v4321
    %v4524 = vunpack.c.h.b16 %v4321
    %v4525 = vunpack.c.l.b16 %v4322
    %v4526 = vunpack.c.h.b16 %v4322
    %v4527 = vpack.c.b16 %v4401, %v4399
    %v4528 = vpack.c.b16 %v4402, %v4400
    %v4529 = vpack.c.b16 %v4405, %v4403
    %v4530 = vpack.c.b16 %v4406, %v4404
    %v4531 = vpack.c.b16 %v4409, %v4407
    %v4532 = vpack.c.b16 %v4410, %v4408
    %v4533 = vpack.c.b16 %v4413, %v4411
    %v4534 = vpack.c.b16 %v4414, %v4412
    %v4535 = vpack.c.b16 %v4417, %v4415
    %v4536 = vpack.c.b16 %v4418, %v4416
    %v4537 = vpack.c.b16 %v4421, %v4419
    %v4538 = vpack.c.b16 %v4422, %v4420
    %v4539 = vpack.c.b16 %v4425, %v4423
    %v4540 = vpack.c.b16 %v4426, %v4424
    %v4541 = vpack.c.b16 %v4429, %v4427
    %v4542 = vpack.c.b16 %v4430, %v4428
    %v4543 = vpack.c.b16 %v4433, %v4431
    %v4544 = vpack.c.b16 %v4434, %v4432
    %v4545 = vpack.c.b16 %v4437, %v4435
    %v4546 = vpack.c.b16 %v4438, %v4436
    %v4547 = vpack.c.b16 %v4441, %v4439
    %v4548 = vpack.c.b16 %v4442, %v4440
    %v4549 = vpack.c.b16 %v4445, %v4443
    %v4550 = vpack.c.b16 %v4446, %v4444
    %v4551 = vpack.c.b16 %v4449, %v4447
    %v4552 = vpack.c.b16 %v4450, %v4448
    %v4553 = vpack.c.b16 %v4453, %v4451
    %v4554 = vpack.c.b16 %v4454, %v4452
    %v4555 = vpack.c.b16 %v4457, %v4455
    %v4556 = vpack.c.b16 %v4458, %v4456
    %v4557 = vpack.c.b16 %v4461, %v4459
    %v4558 = vpack.c.b16 %v4462, %v4460
    %v4559 = vpack.c.b16 %v4465, %v4463
    %v4560 = vpack.c.b16 %v4466, %v4464
    %v4561 = vpack.c.b16 %v4469, %v4467
    %v4562 = vpack.c.b16 %v4470, %v4468
    %v4563 = vpack.c.b16 %v4473, %v4471
    %v4564 = vpack.c.b16 %v4474, %v4472
    %v4565 = vpack.c.b16 %v4477, %v4475
    %v4566 = vpack.c.b16 %v4478, %v4476
    %v4567 = vpack.c.b16 %v4481, %v4479
    %v4568 = vpack.c.b16 %v4482, %v4480
    %v4569 = vpack.c.b16 %v4485, %v4483
    %v4570 = vpack.c.b16 %v4486, %v4484
    %v4571 = vpack.c.b16 %v4489, %v4487
    %v4572 = vpack.c.b16 %v4490, %v4488
    %v4573 = vpack.c.b16 %v4493, %v4491
    %v4574 = vpack.c.b16 %v4494, %v4492
    %v4575 = vpack.c.b16 %v4497, %v4495
    %v4576 = vpack.c.b16 %v4498, %v4496
    %v4577 = vpack.c.b16 %v4501, %v4499
    %v4578 = vpack.c.b16 %v4502, %v4500
    %v4579 = vpack.c.b16 %v4505, %v4503
    %v4580 = vpack.c.b16 %v4506, %v4504
    %v4581 = vpack.c.b16 %v4509, %v4507
    %v4582 = vpack.c.b16 %v4510, %v4508
    %v4583 = vpack.c.b16 %v4513, %v4511
    %v4584 = vpack.c.b16 %v4514, %v4512
    %v4585 = vpack.c.b16 %v4517, %v4515
    %v4586 = vpack.c.b16 %v4518, %v4516
    %v4587 = vpack.c.b16 %v4521, %v4519
    %v4588 = vpack.c.b16 %v4522, %v4520
    %v4589 = vpack.c.b16 %v4525, %v4523
    %v4590 = vpack.c.b16 %v4526, %v4524
    %4655 = vmatprep.subr.bf16.mxu0 %v4528
    %4656 = vmatpush1.bf16.msra.mxu0 %v4527
    %4657 = vmatprep.subr.bf16.mxu0 %v4530
    %4658 = vmatpush1.bf16.msra.mxu0 %v4529
    %4659 = vmatprep.subr.bf16.mxu0 %v4532
    %4660 = vmatpush1.bf16.msra.mxu0 %v4531
    %4661 = vmatprep.subr.bf16.mxu0 %v4534
    %4662 = vmatpush1.bf16.msra.mxu0 %v4533
    %4663 = vmatprep.subr.bf16.mxu0 %v4536
    %4664 = vmatpush1.bf16.msra.mxu0 %v4535
    %4665 = vmatprep.subr.bf16.mxu0 %v4538
    %4666 = vmatpush1.bf16.msra.mxu0 %v4537
    %4667 = vmatprep.subr.bf16.mxu0 %v4540
    %4668 = vmatpush1.bf16.msra.mxu0 %v4539
    %4669 = vmatprep.subr.bf16.mxu0 %v4542
    %4670 = vmatpush1.bf16.msra.mxu0 %v4541
    %4671 = vmatprep.subr.bf16.mxu0 %v4544
    %4672 = vmatpush1.bf16.msra.mxu0 %v4543
    %4673 = vmatprep.subr.bf16.mxu0 %v4546
    %4674 = vmatpush1.bf16.msra.mxu0 %v4545
    %4675 = vmatprep.subr.bf16.mxu0 %v4548
    %4676 = vmatpush1.bf16.msra.mxu0 %v4547
    %4677 = vmatprep.subr.bf16.mxu0 %v4550
    %4678 = vmatpush1.bf16.msra.mxu0 %v4549
    %4679 = vmatprep.subr.bf16.mxu0 %v4552
    %4680 = vmatpush1.bf16.msra.mxu0 %v4551
    %4681 = vmatprep.subr.bf16.mxu0 %v4554
    %4682 = vmatpush1.bf16.msra.mxu0 %v4553
    %4683 = vmatprep.subr.bf16.mxu0 %v4556
    %4684 = vmatpush1.bf16.msra.mxu0 %v4555
    %4685 = vmatprep.subr.bf16.mxu0 %v4558
    %4686 = vmatpush1.bf16.msra.mxu0 %v4557
    %4687 = vmatprep.mubr.bf16.mxu0 %v4256
    %4688 = vmatmul.mubr.bf16.gmra.mrb[0].mxu0 %v4255
    %v4689 = vpop.f32.mrb[0].mxu0
    %v4690 = vadd.f32 %v4328, %v4689
    %v4691 = vpop.f32.mrb[0].mxu0
    %v4692 = vadd.f32 %v4332, %v4691
    %v4693 = vpop.f32.mrb[0].mxu0
    %v4694 = vpop.f32.mrb[0].mxu0
    %4695 = vdwg.mxu0
    %4696 = vmatprep.subr.bf16.mxu0 %v4560
    %4697 = vmatpush1.bf16.msra.mxu0 %v4559
    %4698 = vmatprep.subr.bf16.mxu0 %v4562
    %4699 = vmatpush1.bf16.msra.mxu0 %v4561
    %4700 = vmatprep.subr.bf16.mxu0 %v4564
    %4701 = vmatpush1.bf16.msra.mxu0 %v4563
    %4702 = vmatprep.subr.bf16.mxu0 %v4566
    %4703 = vmatpush1.bf16.msra.mxu0 %v4565
    %4704 = vmatprep.subr.bf16.mxu0 %v4568
    %4705 = vmatpush1.bf16.msra.mxu0 %v4567
    %4706 = vmatprep.subr.bf16.mxu0 %v4570
    %4707 = vmatpush1.bf16.msra.mxu0 %v4569
    %4708 = vmatprep.subr.bf16.mxu0 %v4572
    %4709 = vmatpush1.bf16.msra.mxu0 %v4571
    %4710 = vmatprep.subr.bf16.mxu0 %v4574
    %4711 = vmatpush1.bf16.msra.mxu0 %v4573
    %4712 = vmatprep.subr.bf16.mxu0 %v4576
    %4713 = vmatpush1.bf16.msra.mxu0 %v4575
    %4714 = vmatprep.subr.bf16.mxu0 %v4578
    %4715 = vmatpush1.bf16.msra.mxu0 %v4577
    %4716 = vmatprep.subr.bf16.mxu0 %v4580
    %4717 = vmatpush1.bf16.msra.mxu0 %v4579
    %4718 = vmatprep.subr.bf16.mxu0 %v4582
    %4719 = vmatpush1.bf16.msra.mxu0 %v4581
    %4720 = vmatprep.subr.bf16.mxu0 %v4584
    %4721 = vmatpush1.bf16.msra.mxu0 %v4583
    %4722 = vmatprep.subr.bf16.mxu0 %v4586
    %4723 = vmatpush1.bf16.msra.mxu0 %v4585
    %4724 = vmatprep.subr.bf16.mxu0 %v4588
    %4725 = vmatpush1.bf16.msra.mxu0 %v4587
    %4726 = vmatprep.subr.bf16.mxu0 %v4590
    %4727 = vmatpush1.bf16.msra.mxu0 %v4589
    %4728 = vmatprep.mubr.bf16.mxu0 %v4258
    %4729 = vmatmul.mubr.bf16.gmra.mrb[0].mxu0 %v4257
    %v4730 = vpop.f32.mrb[0].mxu0
    %v4731 = vadd.f32 %v4690, %v4730
    %v4732 = vpop.f32.mrb[0].mxu0
    %v4733 = vadd.f32 %v4692, %v4732
    %v4734 = vpop.f32.mrb[0].mxu0
    %v4735 = vpop.f32.mrb[0].mxu0
    %4736 = vdwg.mxu0
    %v4737 = vmul.f32 %v4731, %v4731
    %v4738 = vmul.f32 %v4733, %v4733
    %v4739 = vmul.f32 %v4731, %v4737
    %v4740 = vmul.f32 %v4733, %v4738
    %v4741 = vmul.f32 %v4739, 0.044715
    %v4742 = vmul.f32 %v4740, 0.044715
    %v4743 = vadd.f32 %v4731, %v4741
    %v4744 = vadd.f32 %v4733, %v4742
    %v4745 = vmul.f32 %v4743, 0.7978846
    %v4746 = vmul.f32 %v4744, 0.7978846
    %v4747 = vtanh.pop %v4745
    %v4748 = vtanh.pop %v4746
    %v4749 = vadd.f32 %v4747, 1.0
    %v4750 = vadd.f32 %v4748, 1.0
    %v4751 = vmul.f32 %v4749, 0.5
    %v4752 = vmul.f32 %v4750, 0.5
    %v4753 = vmul.f32 %v4731, %v4751
    %v4754 = vmul.f32 %v4733, %v4752
    %v4755 = vpack.c.bf16 %v2323, %v2323
    %v4756 = vpack.c.bf16 %v2324, %v2324
    %v4757 = vld [vmem:[%s14] sm:$0xf]
    %v4758 = vld [vmem:[%s14 + $0x4] sm:$0xf]
    %v4759 = vld [vmem:[%s14 + $0x8] sm:$0xf]
    %v4760 = vld [vmem:[%s14 + $0xc] sm:$0xf]
    %v4761 = vld [vmem:[%s14 + $0x10] sm:$0xf]
    %v4762 = vld [vmem:[%s14 + $0x14] sm:$0xf]
    %v4763 = vld [vmem:[%s14 + $0x18] sm:$0xf]
    %v4764 = vld [vmem:[%s14 + $0x1c] sm:$0xf]
    %v4765 = vld [vmem:[%s14 + $0x20] sm:$0xf]
    %v4766 = vld [vmem:[%s14 + $0x24] sm:$0xf]
    %v4767 = vld [vmem:[%s14 + $0x28] sm:$0xf]
    %v4768 = vld [vmem:[%s14 + $0x2c] sm:$0xf]
    %v4769 = vld [vmem:[%s14 + $0x30] sm:$0xf]
    %v4770 = vld [vmem:[%s14 + $0x34] sm:$0xf]
    %v4771 = vld [vmem:[%s14 + $0x38] sm:$0xf]
    %v4772 = vld [vmem:[%s14 + $0x3c] sm:$0xf]
    %v4773 = vld [vmem:[%s14 + $0x40] sm:$0xf]
    %v4774 = vld [vmem:[%s14 + $0x44] sm:$0xf]
    %v4775 = vld [vmem:[%s14 + $0x48] sm:$0xf]
    %v4776 = vld [vmem:[%s14 + $0x4c] sm:$0xf]
    %v4777 = vld [vmem:[%s14 + $0x50] sm:$0xf]
    %v4778 = vld [vmem:[%s14 + $0x54] sm:$0xf]
    %v4779 = vld [vmem:[%s14 + $0x58] sm:$0xf]
    %v4780 = vld [vmem:[%s14 + $0x5c] sm:$0xf]
    %v4781 = vld [vmem:[%s14 + $0x60] sm:$0xf]
    %v4782 = vld [vmem:[%s14 + $0x64] sm:$0xf]
    %v4783 = vld [vmem:[%s14 + $0x68] sm:$0xf]
    %v4784 = vld [vmem:[%s14 + $0x6c] sm:$0xf]
    %v4785 = vld [vmem:[%s14 + $0x70] sm:$0xf]
    %v4786 = vld [vmem:[%s14 + $0x74] sm:$0xf]
    %v4787 = vld [vmem:[%s14 + $0x78] sm:$0xf]
    %v4788 = vld [vmem:[%s14 + $0x7c] sm:$0xf]
    %v4789 = vld [vmem:[%s15] sm:$0x1]
    %v4791 = vlaneseq
    %v4792 = vshrl.u32 %v4791, 7
    %v4793 = vsub.s32 0, %v4792
    %v4794 = vrot.slane %v4789, %v4793
    %v4828 = vunpack.c.l.b16 %v4757
    %v4829 = vunpack.c.l.b16 %v4758
    %v4830 = vunpack.c.l.b16 %v4759
    %v4831 = vunpack.c.l.b16 %v4760
    %v4832 = vunpack.c.l.b16 %v4761
    %v4833 = vunpack.c.l.b16 %v4762
    %v4834 = vunpack.c.l.b16 %v4763
    %v4835 = vunpack.c.l.b16 %v4764
    %v4836 = vunpack.c.l.b16 %v4765
    %v4837 = vunpack.c.l.b16 %v4766
    %v4838 = vunpack.c.l.b16 %v4767
    %v4839 = vunpack.c.l.b16 %v4768
    %v4840 = vunpack.c.l.b16 %v4769
    %v4841 = vunpack.c.l.b16 %v4770
    %v4842 = vunpack.c.l.b16 %v4771
    %v4843 = vunpack.c.l.b16 %v4772
    %v4844 = vunpack.c.l.b16 %v4773
    %v4845 = vunpack.c.l.b16 %v4774
    %v4846 = vunpack.c.l.b16 %v4775
    %v4847 = vunpack.c.l.b16 %v4776
    %v4848 = vunpack.c.l.b16 %v4777
    %v4849 = vunpack.c.l.b16 %v4778
    %v4850 = vunpack.c.l.b16 %v4779
    %v4851 = vunpack.c.l.b16 %v4780
    %v4852 = vunpack.c.l.b16 %v4781
    %v4853 = vunpack.c.l.b16 %v4782
    %v4854 = vunpack.c.l.b16 %v4783
    %v4855 = vunpack.c.l.b16 %v4784
    %v4856 = vunpack.c.l.b16 %v4785
    %v4857 = vunpack.c.l.b16 %v4786
    %v4858 = vunpack.c.l.b16 %v4787
    %v4859 = vunpack.c.l.b16 %v4788
    %v4860 = vpack.c.b16 %v4829, %v4828
    %v4861 = vpack.c.b16 %v4831, %v4830
    %v4862 = vpack.c.b16 %v4833, %v4832
    %v4863 = vpack.c.b16 %v4835, %v4834
    %v4864 = vpack.c.b16 %v4837, %v4836
    %v4865 = vpack.c.b16 %v4839, %v4838
    %v4866 = vpack.c.b16 %v4841, %v4840
    %v4867 = vpack.c.b16 %v4843, %v4842
    %v4868 = vpack.c.b16 %v4845, %v4844
    %v4869 = vpack.c.b16 %v4847, %v4846
    %v4870 = vpack.c.b16 %v4849, %v4848
    %v4871 = vpack.c.b16 %v4851, %v4850
    %v4872 = vpack.c.b16 %v4853, %v4852
    %v4873 = vpack.c.b16 %v4855, %v4854
    %v4874 = vpack.c.b16 %v4857, %v4856
    %v4875 = vpack.c.b16 %v4859, %v4858
    %4892 = vmatprep.subr.bf16.mxu0 0
    %4893 = vmatpush1.bf16.msra.mxu0 %v4860
    %4894 = vmatprep.subr.bf16.mxu0 0
    %4895 = vmatpush1.bf16.msra.mxu0 %v4861
    %4896 = vmatprep.subr.bf16.mxu0 0
    %4897 = vmatpush1.bf16.msra.mxu0 %v4862
    %4898 = vmatprep.subr.bf16.mxu0 0
    %4899 = vmatpush1.bf16.msra.mxu0 %v4863
    %4900 = vmatprep.subr.bf16.mxu0 0
    %4901 = vmatpush1.bf16.msra.mxu0 %v4864
    %4902 = vmatprep.subr.bf16.mxu0 0
    %4903 = vmatpush1.bf16.msra.mxu0 %v4865
    %4904 = vmatprep.subr.bf16.mxu0 0
    %4905 = vmatpush1.bf16.msra.mxu0 %v4866
    %4906 = vmatprep.subr.bf16.mxu0 0
    %4907 = vmatpush1.bf16.msra.mxu0 %v4867
    %4908 = vmatprep.subr.bf16.mxu0 0
    %4909 = vmatpush1.bf16.msra.mxu0 %v4868
    %4910 = vmatprep.subr.bf16.mxu0 0
    %4911 = vmatpush1.bf16.msra.mxu0 %v4869
    %4912 = vmatprep.subr.bf16.mxu0 0
    %4913 = vmatpush1.bf16.msra.mxu0 %v4870
    %4914 = vmatprep.subr.bf16.mxu0 0
    %4915 = vmatpush1.bf16.msra.mxu0 %v4871
    %4916 = vmatprep.subr.bf16.mxu0 0
    %4917 = vmatpush1.bf16.msra.mxu0 %v4872
    %4918 = vmatprep.subr.bf16.mxu0 0
    %4919 = vmatpush1.bf16.msra.mxu0 %v4873
    %4920 = vmatprep.subr.bf16.mxu0 0
    %4921 = vmatpush1.bf16.msra.mxu0 %v4874
    %4922 = vmatprep.subr.bf16.mxu0 0
    %4923 = vmatpush1.bf16.msra.mxu0 %v4875
    %4924 = vmatprep.mubr.bf16.mxu0 %v4756
    %4925 = vmatmul.mubr.bf16.gmra.mrb[0].mxu0 %v4755
    %v4926 = vpop.f32.mrb[0].mxu0
    %v4927 = vadd.f32 %v4794, %v4926
    %v4928 = vpop.f32.mrb[0].mxu0
    %v4929 = vpop.f32.mrb[0].mxu0
    %v4930 = vpop.f32.mrb[0].mxu0
    %4931 = vdwg.mxu0
    %v4932 = vmax.f32 %v4927, 0.0
    %v4933 = vpack.c.bf16 %v4251, %v4251
    %v4934 = vpack.c.bf16 %v4252, %v4252
    %v4935 = vpack.c.bf16 %v4253, %v4253
    %v4936 = vpack.c.bf16 %v4254, %v4254
    %v4937 = vpack.c.bf16 %v4753, %v4753
    %v4938 = vpack.c.bf16 %v4754, %v4754
    %v4939 = vpack.c.bf16 %v2321, %v2321
    %v4940 = vpack.c.bf16 %v2322, %v2322
    %v4941 = vpack.c.bf16 %v4932, %v4932
    %v4942 = vld [vmem:[#allocation14] sm:$0xf]
    %v4943 = vld [vmem:[#allocation14 + $0x4] sm:$0xf]
    %v4944 = vld [vmem:[#allocation14 + $0x8] sm:$0xf]
    %v4945 = vld [vmem:[#allocation14 + $0xc] sm:$0xf]
    %v4946 = vld [vmem:[#allocation14 + $0x10] sm:$0xf]
    %v4947 = vld [vmem:[#allocation14 + $0x14] sm:$0xf]
    %v4948 = vld [vmem:[#allocation14 + $0x18] sm:$0xf]
    %v4949 = vld [vmem:[#allocation14 + $0x1c] sm:$0xf]
    %v4950 = vld [vmem:[#allocation14 + $0x20] sm:$0xf]
    %v4951 = vld [vmem:[#allocation14 + $0x24] sm:$0xf]
    %v4952 = vld [vmem:[#allocation14 + $0x28] sm:$0xf]
    %v4953 = vld [vmem:[#allocation14 + $0x2c] sm:$0xf]
    %v4954 = vld [vmem:[#allocation14 + $0x30] sm:$0xf]
    %v4955 = vld [vmem:[#allocation14 + $0x34] sm:$0xf]
    %v4956 = vld [vmem:[#allocation14 + $0x38] sm:$0xf]
    %v4957 = vld [vmem:[#allocation14 + $0x3c] sm:$0xf]
    %v4958 = vld [vmem:[#allocation14 + $0x40] sm:$0xf]
    %v4959 = vld [vmem:[#allocation14 + $0x44] sm:$0xf]
    %v4960 = vld [vmem:[#allocation14 + $0x48] sm:$0xf]
    %v4961 = vld [vmem:[#allocation14 + $0x4c] sm:$0xf]
    %v4962 = vld [vmem:[#allocation14 + $0x50] sm:$0xf]
    %v4963 = vld [vmem:[#allocation14 + $0x54] sm:$0xf]
    %v4964 = vld [vmem:[#allocation14 + $0x58] sm:$0xf]
    %v4965 = vld [vmem:[#allocation14 + $0x5c] sm:$0xf]
    %v4966 = vld [vmem:[#allocation14 + $0x60] sm:$0xf]
    %v4967 = vld [vmem:[#allocation14 + $0x64] sm:$0xf]
    %v4968 = vld [vmem:[#allocation14 + $0x68] sm:$0xf]
    %v4969 = vld [vmem:[#allocation14 + $0x6c] sm:$0xf]
    %v4970 = vld [vmem:[#allocation14 + $0x70] sm:$0xf]
    %v4971 = vld [vmem:[#allocation14 + $0x74] sm:$0xf]
    %v4972 = vld [vmem:[#allocation14 + $0x78] sm:$0xf]
    %v4973 = vld [vmem:[#allocation14 + $0x7c] sm:$0xf]
    %v4974 = vld [vmem:[#allocation14 + $0x80] sm:$0xf]
    %v4975 = vld [vmem:[#allocation14 + $0x84] sm:$0xf]
    %v4976 = vld [vmem:[#allocation14 + $0x88] sm:$0xf]
    %v4977 = vld [vmem:[#allocation14 + $0x8c] sm:$0xf]
    %v4978 = vld [vmem:[#allocation14 + $0x90] sm:$0xf]
    %v4979 = vld [vmem:[#allocation14 + $0x94] sm:$0xf]
    %v4980 = vld [vmem:[#allocation14 + $0x98] sm:$0xf]
    %v4981 = vld [vmem:[#allocation14 + $0x9c] sm:$0xf]
    %v4982 = vld [vmem:[#allocation14 + $0xa0] sm:$0xf]
    %v4983 = vld [vmem:[#allocation14 + $0xa4] sm:$0xf]
    %v4984 = vld [vmem:[#allocation14 + $0xa8] sm:$0xf]
    %v4985 = vld [vmem:[#allocation14 + $0xac] sm:$0xf]
    %v4986 = vld [vmem:[#allocation14 + $0xb0] sm:$0xf]
    %v4987 = vld [vmem:[#allocation14 + $0xb4] sm:$0xf]
    %v4988 = vld [vmem:[#allocation14 + $0xb8] sm:$0xf]
    %v4989 = vld [vmem:[#allocation14 + $0xbc] sm:$0xf]
    %v4990 = vld [vmem:[#allocation14 + $0xc0] sm:$0xf]
    %v4991 = vld [vmem:[#allocation14 + $0xc4] sm:$0xf]
    %v4992 = vld [vmem:[#allocation14 + $0xc8] sm:$0xf]
    %v4993 = vld [vmem:[#allocation14 + $0xcc] sm:$0xf]
    %v4994 = vld [vmem:[#allocation14 + $0xd0] sm:$0xf]
    %v4995 = vld [vmem:[#allocation14 + $0xd4] sm:$0xf]
    %v4996 = vld [vmem:[#allocation14 + $0xd8] sm:$0xf]
    %v4997 = vld [vmem:[#allocation14 + $0xdc] sm:$0xf]
    %v4998 = vld [vmem:[#allocation14 + $0xe0] sm:$0xf]
    %v4999 = vld [vmem:[#allocation14 + $0xe4] sm:$0xf]
    %v5000 = vld [vmem:[#allocation14 + $0xe8] sm:$0xf]
    %v5001 = vld [vmem:[#allocation14 + $0xec] sm:$0xf]
    %v5002 = vld [vmem:[#allocation14 + $0xf0] sm:$0xf]
    %v5003 = vld [vmem:[#allocation14 + $0xf4] sm:$0xf]
    %v5004 = vld [vmem:[#allocation14 + $0xf8] sm:$0xf]
    %v5005 = vld [vmem:[#allocation14 + $0xfc] sm:$0xf]
    %v5006 = vld [vmem:[#allocation14 + $0x100] sm:$0xf]
    %v5007 = vld [vmem:[#allocation14 + $0x104] sm:$0xf]
    %v5008 = vld [vmem:[#allocation14 + $0x108] sm:$0xf]
    %v5009 = vld [vmem:[#allocation14 + $0x10c] sm:$0xf]
    %v5010 = vld [vmem:[#allocation14 + $0x110] sm:$0xf]
    %v5011 = vld [vmem:[#allocation14 + $0x114] sm:$0xf]
    %v5012 = vld [vmem:[#allocation14 + $0x118] sm:$0xf]
    %v5013 = vld [vmem:[#allocation14 + $0x11c] sm:$0xf]
    %v5014 = vld [vmem:[#allocation14 + $0x120] sm:$0xf]
    %v5015 = vld [vmem:[#allocation14 + $0x124] sm:$0xf]
    %v5016 = vld [vmem:[#allocation14 + $0x128] sm:$0xf]
    %v5017 = vld [vmem:[#allocation14 + $0x12c] sm:$0xf]
    %v5018 = vld [vmem:[#allocation14 + $0x130] sm:$0xf]
    %v5019 = vld [vmem:[#allocation14 + $0x134] sm:$0xf]
    %v5020 = vld [vmem:[#allocation14 + $0x138] sm:$0xf]
    %v5021 = vld [vmem:[#allocation14 + $0x13c] sm:$0xf]
    %v5022 = vld [vmem:[#allocation14 + $0x140] sm:$0xf]
    %v5023 = vld [vmem:[#allocation14 + $0x144] sm:$0xf]
    %v5024 = vld [vmem:[#allocation14 + $0x148] sm:$0xf]
    %v5025 = vld [vmem:[#allocation14 + $0x14c] sm:$0xf]
    %v5026 = vld [vmem:[#allocation14 + $0x150] sm:$0xf]
    %v5027 = vld [vmem:[#allocation14 + $0x154] sm:$0xf]
    %v5028 = vld [vmem:[#allocation14 + $0x158] sm:$0xf]
    %v5029 = vld [vmem:[#allocation14 + $0x15c] sm:$0xf]
    %v5030 = vld [vmem:[#allocation14 + $0x160] sm:$0xf]
    %v5031 = vld [vmem:[#allocation14 + $0x164] sm:$0xf]
    %v5032 = vld [vmem:[#allocation14 + $0x168] sm:$0xf]
    %v5033 = vld [vmem:[#allocation14 + $0x16c] sm:$0xf]
    %v5034 = vld [vmem:[#allocation14 + $0x170] sm:$0xf]
    %v5035 = vld [vmem:[#allocation14 + $0x174] sm:$0xf]
    %v5036 = vld [vmem:[#allocation14 + $0x178] sm:$0xf]
    %v5037 = vld [vmem:[#allocation14 + $0x17c] sm:$0xf]
    %v5038 = vld [vmem:[#allocation14 + $0x180] sm:$0xf]
    %v5039 = vld [vmem:[#allocation14 + $0x184] sm:$0xf]
    %v5040 = vld [vmem:[#allocation14 + $0x188] sm:$0xf]
    %v5041 = vld [vmem:[#allocation14 + $0x18c] sm:$0xf]
    %v5042 = vld [vmem:[#allocation14 + $0x190] sm:$0xf]
    %v5043 = vld [vmem:[#allocation14 + $0x194] sm:$0xf]
    %v5044 = vld [vmem:[#allocation14 + $0x198] sm:$0xf]
    %v5045 = vld [vmem:[#allocation14 + $0x19c] sm:$0xf]
    %v5046 = vld [vmem:[#allocation14 + $0x1a0] sm:$0xf]
    %v5047 = vld [vmem:[#allocation14 + $0x1a4] sm:$0xf]
    %v5048 = vld [vmem:[#allocation14 + $0x1a8] sm:$0xf]
    %v5049 = vld [vmem:[#allocation14 + $0x1ac] sm:$0xf]
    %v5050 = vld [vmem:[#allocation14 + $0x1b0] sm:$0xf]
    %v5051 = vld [vmem:[#allocation14 + $0x1b4] sm:$0xf]
    %v5052 = vld [vmem:[#allocation14 + $0x1b8] sm:$0xf]
    %v5053 = vld [vmem:[#allocation14 + $0x1bc] sm:$0xf]
    %v5054 = vld [vmem:[#allocation14 + $0x1c0] sm:$0xf]
    %v5055 = vld [vmem:[#allocation14 + $0x1c4] sm:$0xf]
    %v5056 = vld [vmem:[#allocation14 + $0x1c8] sm:$0xf]
    %v5057 = vld [vmem:[#allocation14 + $0x1cc] sm:$0xf]
    %v5058 = vld [vmem:[#allocation14 + $0x1d0] sm:$0xf]
    %v5059 = vld [vmem:[#allocation14 + $0x1d4] sm:$0xf]
    %v5060 = vld [vmem:[#allocation14 + $0x1d8] sm:$0xf]
    %v5061 = vld [vmem:[#allocation14 + $0x1dc] sm:$0xf]
    %v5062 = vld [vmem:[#allocation14 + $0x1e0] sm:$0xf]
    %v5063 = vld [vmem:[#allocation14 + $0x1e4] sm:$0xf]
    %v5064 = vld [vmem:[#allocation14 + $0x1e8] sm:$0xf]
    %v5065 = vld [vmem:[#allocation14 + $0x1ec] sm:$0xf]
    %v5066 = vld [vmem:[#allocation14 + $0x1f0] sm:$0xf]
    %v5067 = vld [vmem:[#allocation14 + $0x1f4] sm:$0xf]
    %v5068 = vld [vmem:[#allocation14 + $0x1f8] sm:$0xf]
    %v5069 = vld [vmem:[#allocation14 + $0x1fc] sm:$0xf]
    %v5070 = vld [vmem:[#allocation14 + $0x200] sm:$0xf]
    %v5071 = vld [vmem:[#allocation14 + $0x204] sm:$0xf]
    %v5072 = vld [vmem:[#allocation14 + $0x208] sm:$0xf]
    %v5073 = vld [vmem:[#allocation14 + $0x20c] sm:$0xf]
    %v5074 = vld [vmem:[#allocation14 + $0x210] sm:$0xf]
    %v5075 = vld [vmem:[#allocation14 + $0x214] sm:$0xf]
    %v5076 = vld [vmem:[#allocation14 + $0x218] sm:$0xf]
    %v5077 = vld [vmem:[#allocation14 + $0x21c] sm:$0xf]
    %v5078 = vld [vmem:[#allocation14 + $0x220] sm:$0xf]
    %v5079 = vld [vmem:[#allocation14 + $0x224] sm:$0xf]
    %v5080 = vld [vmem:[#allocation14 + $0x228] sm:$0xf]
    %v5081 = vld [vmem:[#allocation14 + $0x22c] sm:$0xf]
    %v5082 = vld [vmem:[#allocation14 + $0x230] sm:$0xf]
    %v5083 = vld [vmem:[#allocation14 + $0x234] sm:$0xf]
    %v5084 = vld [vmem:[#allocation14 + $0x238] sm:$0xf]
    %v5085 = vld [vmem:[#allocation14 + $0x23c] sm:$0xf]
    %v5086 = vld [vmem:[%s17] sm:$0x1]
    %v5088 = vlaneseq
    %v5089 = vshrl.u32 %v5088, 7
    %v5090 = vsub.s32 0, %v5089
    %v5091 = vrot.slane %v5086, %v5090
    %v5237 = vunpack.c.l.b16 %v4942
    %v5238 = vunpack.c.l.b16 %v4943
    %v5239 = vunpack.c.l.b16 %v4944
    %v5240 = vunpack.c.l.b16 %v4945
    %v5241 = vunpack.c.l.b16 %v4946
    %v5242 = vunpack.c.l.b16 %v4947
    %v5243 = vunpack.c.l.b16 %v4948
    %v5244 = vunpack.c.l.b16 %v4949
    %v5245 = vunpack.c.l.b16 %v4950
    %v5246 = vunpack.c.l.b16 %v4951
    %v5247 = vunpack.c.l.b16 %v4952
    %v5248 = vunpack.c.l.b16 %v4953
    %v5249 = vunpack.c.l.b16 %v4954
    %v5250 = vunpack.c.l.b16 %v4955
    %v5251 = vunpack.c.l.b16 %v4956
    %v5252 = vunpack.c.l.b16 %v4957
    %v5253 = vunpack.c.l.b16 %v4958
    %v5254 = vunpack.c.l.b16 %v4959
    %v5255 = vunpack.c.l.b16 %v4960
    %v5256 = vunpack.c.l.b16 %v4961
    %v5257 = vunpack.c.l.b16 %v4962
    %v5258 = vunpack.c.l.b16 %v4963
    %v5259 = vunpack.c.l.b16 %v4964
    %v5260 = vunpack.c.l.b16 %v4965
    %v5261 = vunpack.c.l.b16 %v4966
    %v5262 = vunpack.c.l.b16 %v4967
    %v5263 = vunpack.c.l.b16 %v4968
    %v5264 = vunpack.c.l.b16 %v4969
    %v5265 = vunpack.c.l.b16 %v4970
    %v5266 = vunpack.c.l.b16 %v4971
    %v5267 = vunpack.c.l.b16 %v4972
    %v5268 = vunpack.c.l.b16 %v4973
    %v5269 = vunpack.c.l.b16 %v4974
    %v5270 = vunpack.c.l.b16 %v4975
    %v5271 = vunpack.c.l.b16 %v4976
    %v5272 = vunpack.c.l.b16 %v4977
    %v5273 = vunpack.c.l.b16 %v4978
    %v5274 = vunpack.c.l.b16 %v4979
    %v5275 = vunpack.c.l.b16 %v4980
    %v5276 = vunpack.c.l.b16 %v4981
    %v5277 = vunpack.c.l.b16 %v4982
    %v5278 = vunpack.c.l.b16 %v4983
    %v5279 = vunpack.c.l.b16 %v4984
    %v5280 = vunpack.c.l.b16 %v4985
    %v5281 = vunpack.c.l.b16 %v4986
    %v5282 = vunpack.c.l.b16 %v4987
    %v5283 = vunpack.c.l.b16 %v4988
    %v5284 = vunpack.c.l.b16 %v4989
    %v5285 = vunpack.c.l.b16 %v4990
    %v5286 = vunpack.c.l.b16 %v4991
    %v5287 = vunpack.c.l.b16 %v4992
    %v5288 = vunpack.c.l.b16 %v4993
    %v5289 = vunpack.c.l.b16 %v4994
    %v5290 = vunpack.c.l.b16 %v4995
    %v5291 = vunpack.c.l.b16 %v4996
    %v5292 = vunpack.c.l.b16 %v4997
    %v5293 = vunpack.c.l.b16 %v4998
    %v5294 = vunpack.c.l.b16 %v4999
    %v5295 = vunpack.c.l.b16 %v5000
    %v5296 = vunpack.c.l.b16 %v5001
    %v5297 = vunpack.c.l.b16 %v5002
    %v5298 = vunpack.c.l.b16 %v5003
    %v5299 = vunpack.c.l.b16 %v5004
    %v5300 = vunpack.c.l.b16 %v5005
    %v5301 = vunpack.c.l.b16 %v5006
    %v5302 = vunpack.c.l.b16 %v5007
    %v5303 = vunpack.c.l.b16 %v5008
    %v5304 = vunpack.c.l.b16 %v5009
    %v5305 = vunpack.c.l.b16 %v5010
    %v5306 = vunpack.c.l.b16 %v5011
    %v5307 = vunpack.c.l.b16 %v5012
    %v5308 = vunpack.c.l.b16 %v5013
    %v5309 = vunpack.c.l.b16 %v5014
    %v5310 = vunpack.c.l.b16 %v5015
    %v5311 = vunpack.c.l.b16 %v5016
    %v5312 = vunpack.c.l.b16 %v5017
    %v5313 = vunpack.c.l.b16 %v5018
    %v5314 = vunpack.c.l.b16 %v5019
    %v5315 = vunpack.c.l.b16 %v5020
    %v5316 = vunpack.c.l.b16 %v5021
    %v5317 = vunpack.c.l.b16 %v5022
    %v5318 = vunpack.c.l.b16 %v5023
    %v5319 = vunpack.c.l.b16 %v5024
    %v5320 = vunpack.c.l.b16 %v5025
    %v5321 = vunpack.c.l.b16 %v5026
    %v5322 = vunpack.c.l.b16 %v5027
    %v5323 = vunpack.c.l.b16 %v5028
    %v5324 = vunpack.c.l.b16 %v5029
    %v5325 = vunpack.c.l.b16 %v5030
    %v5326 = vunpack.c.l.b16 %v5031
    %v5327 = vunpack.c.l.b16 %v5032
    %v5328 = vunpack.c.l.b16 %v5033
    %v5329 = vunpack.c.l.b16 %v5034
    %v5330 = vunpack.c.l.b16 %v5035
    %v5331 = vunpack.c.l.b16 %v5036
    %v5332 = vunpack.c.l.b16 %v5037
    %v5333 = vunpack.c.l.b16 %v5038
    %v5334 = vunpack.c.l.b16 %v5039
    %v5335 = vunpack.c.l.b16 %v5040
    %v5336 = vunpack.c.l.b16 %v5041
    %v5337 = vunpack.c.l.b16 %v5042
    %v5338 = vunpack.c.l.b16 %v5043
    %v5339 = vunpack.c.l.b16 %v5044
    %v5340 = vunpack.c.l.b16 %v5045
    %v5341 = vunpack.c.l.b16 %v5046
    %v5342 = vunpack.c.l.b16 %v5047
    %v5343 = vunpack.c.l.b16 %v5048
    %v5344 = vunpack.c.l.b16 %v5049
    %v5345 = vunpack.c.l.b16 %v5050
    %v5346 = vunpack.c.l.b16 %v5051
    %v5347 = vunpack.c.l.b16 %v5052
    %v5348 = vunpack.c.l.b16 %v5053
    %v5349 = vunpack.c.l.b16 %v5054
    %v5350 = vunpack.c.l.b16 %v5055
    %v5351 = vunpack.c.l.b16 %v5056
    %v5352 = vunpack.c.l.b16 %v5057
    %v5353 = vunpack.c.l.b16 %v5058
    %v5354 = vunpack.c.l.b16 %v5059
    %v5355 = vunpack.c.l.b16 %v5060
    %v5356 = vunpack.c.l.b16 %v5061
    %v5357 = vunpack.c.l.b16 %v5062
    %v5358 = vunpack.c.l.b16 %v5063
    %v5359 = vunpack.c.l.b16 %v5064
    %v5360 = vunpack.c.l.b16 %v5065
    %v5361 = vunpack.c.l.b16 %v5066
    %v5362 = vunpack.c.l.b16 %v5067
    %v5363 = vunpack.c.l.b16 %v5068
    %v5364 = vunpack.c.l.b16 %v5069
    %v5365 = vunpack.c.l.b16 %v5070
    %v5366 = vunpack.c.l.b16 %v5071
    %v5367 = vunpack.c.l.b16 %v5072
    %v5368 = vunpack.c.l.b16 %v5073
    %v5369 = vunpack.c.l.b16 %v5074
    %v5370 = vunpack.c.l.b16 %v5075
    %v5371 = vunpack.c.l.b16 %v5076
    %v5372 = vunpack.c.l.b16 %v5077
    %v5373 = vunpack.c.l.b16 %v5078
    %v5374 = vunpack.c.l.b16 %v5079
    %v5375 = vunpack.c.l.b16 %v5080
    %v5376 = vunpack.c.l.b16 %v5081
    %v5377 = vunpack.c.l.b16 %v5082
    %v5378 = vunpack.c.l.b16 %v5083
    %v5379 = vunpack.c.l.b16 %v5084
    %v5380 = vunpack.c.l.b16 %v5085
    %v5381 = vpack.c.b16 %v5238, %v5237
    %v5382 = vpack.c.b16 %v5240, %v5239
    %v5383 = vpack.c.b16 %v5242, %v5241
    %v5384 = vpack.c.b16 %v5244, %v5243
    %v5385 = vpack.c.b16 %v5246, %v5245
    %v5386 = vpack.c.b16 %v5248, %v5247
    %v5387 = vpack.c.b16 %v5250, %v5249
    %v5388 = vpack.c.b16 %v5252, %v5251
    %v5389 = vpack.c.b16 %v5254, %v5253
    %v5390 = vpack.c.b16 %v5256, %v5255
    %v5391 = vpack.c.b16 %v5258, %v5257
    %v5392 = vpack.c.b16 %v5260, %v5259
    %v5393 = vpack.c.b16 %v5262, %v5261
    %v5394 = vpack.c.b16 %v5264, %v5263
    %v5395 = vpack.c.b16 %v5266, %v5265
    %v5396 = vpack.c.b16 %v5268, %v5267
    %v5397 = vpack.c.b16 %v5270, %v5269
    %v5398 = vpack.c.b16 %v5272, %v5271
    %v5399 = vpack.c.b16 %v5274, %v5273
    %v5400 = vpack.c.b16 %v5276, %v5275
    %v5401 = vpack.c.b16 %v5278, %v5277
    %v5402 = vpack.c.b16 %v5280, %v5279
    %v5403 = vpack.c.b16 %v5282, %v5281
    %v5404 = vpack.c.b16 %v5284, %v5283
    %v5405 = vpack.c.b16 %v5286, %v5285
    %v5406 = vpack.c.b16 %v5288, %v5287
    %v5407 = vpack.c.b16 %v5290, %v5289
    %v5408 = vpack.c.b16 %v5292, %v5291
    %v5409 = vpack.c.b16 %v5294, %v5293
    %v5410 = vpack.c.b16 %v5296, %v5295
    %v5411 = vpack.c.b16 %v5298, %v5297
    %v5412 = vpack.c.b16 %v5300, %v5299
    %v5413 = vpack.c.b16 %v5302, %v5301
    %v5414 = vpack.c.b16 %v5304, %v5303
    %v5415 = vpack.c.b16 %v5306, %v5305
    %v5416 = vpack.c.b16 %v5308, %v5307
    %v5417 = vpack.c.b16 %v5310, %v5309
    %v5418 = vpack.c.b16 %v5312, %v5311
    %v5419 = vpack.c.b16 %v5314, %v5313
    %v5420 = vpack.c.b16 %v5316, %v5315
    %v5421 = vpack.c.b16 %v5318, %v5317
    %v5422 = vpack.c.b16 %v5320, %v5319
    %v5423 = vpack.c.b16 %v5322, %v5321
    %v5424 = vpack.c.b16 %v5324, %v5323
    %v5425 = vpack.c.b16 %v5326, %v5325
    %v5426 = vpack.c.b16 %v5328, %v5327
    %v5427 = vpack.c.b16 %v5330, %v5329
    %v5428 = vpack.c.b16 %v5332, %v5331
    %v5429 = vpack.c.b16 %v5334, %v5333
    %v5430 = vpack.c.b16 %v5336, %v5335
    %v5431 = vpack.c.b16 %v5338, %v5337
    %v5432 = vpack.c.b16 %v5340, %v5339
    %v5433 = vpack.c.b16 %v5342, %v5341
    %v5434 = vpack.c.b16 %v5344, %v5343
    %v5435 = vpack.c.b16 %v5346, %v5345
    %v5436 = vpack.c.b16 %v5348, %v5347
    %v5437 = vpack.c.b16 %v5350, %v5349
    %v5438 = vpack.c.b16 %v5352, %v5351
    %v5439 = vpack.c.b16 %v5354, %v5353
    %v5440 = vpack.c.b16 %v5356, %v5355
    %v5441 = vpack.c.b16 %v5358, %v5357
    %v5442 = vpack.c.b16 %v5360, %v5359
    %v5443 = vpack.c.b16 %v5362, %v5361
    %v5444 = vpack.c.b16 %v5364, %v5363
    %v5445 = vpack.c.b16 %v5366, %v5365
    %v5446 = vpack.c.b16 %v5368, %v5367
    %v5447 = vpack.c.b16 %v5370, %v5369
    %v5448 = vpack.c.b16 %v5372, %v5371
    %v5449 = vpack.c.b16 %v5374, %v5373
    %v5450 = vpack.c.b16 %v5376, %v5375
    %v5451 = vpack.c.b16 %v5378, %v5377
    %v5452 = vpack.c.b16 %v5380, %v5379
    %5525 = vmatprep.subr.bf16.mxu0 0
    %5526 = vmatpush1.bf16.msra.mxu0 %v5381
    %5527 = vmatprep.subr.bf16.mxu0 0
    %5528 = vmatpush1.bf16.msra.mxu0 %v5382
    %5529 = vmatprep.subr.bf16.mxu0 0
    %5530 = vmatpush1.bf16.msra.mxu0 %v5383
    %5531 = vmatprep.subr.bf16.mxu0 0
    %5532 = vmatpush1.bf16.msra.mxu0 %v5384
    %5533 = vmatprep.subr.bf16.mxu0 0
    %5534 = vmatpush1.bf16.msra.mxu0 %v5385
    %5535 = vmatprep.subr.bf16.mxu0 0
    %5536 = vmatpush1.bf16.msra.mxu0 %v5386
    %5537 = vmatprep.subr.bf16.mxu0 0
    %5538 = vmatpush1.bf16.msra.mxu0 %v5387
    %5539 = vmatprep.subr.bf16.mxu0 0
    %5540 = vmatpush1.bf16.msra.mxu0 %v5388
    %5541 = vmatprep.subr.bf16.mxu0 0
    %5542 = vmatpush1.bf16.msra.mxu0 %v5389
    %5543 = vmatprep.subr.bf16.mxu0 0
    %5544 = vmatpush1.bf16.msra.mxu0 %v5390
    %5545 = vmatprep.subr.bf16.mxu0 0
    %5546 = vmatpush1.bf16.msra.mxu0 %v5391
    %5547 = vmatprep.subr.bf16.mxu0 0
    %5548 = vmatpush1.bf16.msra.mxu0 %v5392
    %5549 = vmatprep.subr.bf16.mxu0 0
    %5550 = vmatpush1.bf16.msra.mxu0 %v5393
    %5551 = vmatprep.subr.bf16.mxu0 0
    %5552 = vmatpush1.bf16.msra.mxu0 %v5394
    %5553 = vmatprep.subr.bf16.mxu0 0
    %5554 = vmatpush1.bf16.msra.mxu0 %v5395
    %5555 = vmatprep.subr.bf16.mxu0 0
    %5556 = vmatpush1.bf16.msra.mxu0 %v5396
    %5557 = vmatprep.mubr.bf16.mxu0 %v4934
    %5558 = vmatmul.mubr.bf16.gmra.mrb[0].mxu0 %v4933
    %v5559 = vpop.f32.mrb[0].mxu0
    %v5560 = vadd.f32 %v5091, %v5559
    %v5561 = vpop.f32.mrb[0].mxu0
    %v5562 = vpop.f32.mrb[0].mxu0
    %v5563 = vpop.f32.mrb[0].mxu0
    %5564 = vdwg.mxu0
    %5565 = vmatprep.subr.bf16.mxu0 0
    %5566 = vmatpush1.bf16.msra.mxu0 %v5397
    %5567 = vmatprep.subr.bf16.mxu0 0
    %5568 = vmatpush1.bf16.msra.mxu0 %v5398
    %5569 = vmatprep.subr.bf16.mxu0 0
    %5570 = vmatpush1.bf16.msra.mxu0 %v5399
    %5571 = vmatprep.subr.bf16.mxu0 0
    %5572 = vmatpush1.bf16.msra.mxu0 %v5400
    %5573 = vmatprep.subr.bf16.mxu0 0
    %5574 = vmatpush1.bf16.msra.mxu0 %v5401
    %5575 = vmatprep.subr.bf16.mxu0 0
    %5576 = vmatpush1.bf16.msra.mxu0 %v5402
    %5577 = vmatprep.subr.bf16.mxu0 0
    %5578 = vmatpush1.bf16.msra.mxu0 %v5403
    %5579 = vmatprep.subr.bf16.mxu0 0
    %5580 = vmatpush1.bf16.msra.mxu0 %v5404
    %5581 = vmatprep.subr.bf16.mxu0 0
    %5582 = vmatpush1.bf16.msra.mxu0 %v5405
    %5583 = vmatprep.subr.bf16.mxu0 0
    %5584 = vmatpush1.bf16.msra.mxu0 %v5406
    %5585 = vmatprep.subr.bf16.mxu0 0
    %5586 = vmatpush1.bf16.msra.mxu0 %v5407
    %5587 = vmatprep.subr.bf16.mxu0 0
    %5588 = vmatpush1.bf16.msra.mxu0 %v5408
    %5589 = vmatprep.subr.bf16.mxu0 0
    %5590 = vmatpush1.bf16.msra.mxu0 %v5409
    %5591 = vmatprep.subr.bf16.mxu0 0
    %5592 = vmatpush1.bf16.msra.mxu0 %v5410
    %5593 = vmatprep.subr.bf16.mxu0 0
    %5594 = vmatpush1.bf16.msra.mxu0 %v5411
    %5595 = vmatprep.subr.bf16.mxu0 0
    %5596 = vmatpush1.bf16.msra.mxu0 %v5412
    %5597 = vmatprep.mubr.bf16.mxu0 %v4936
    %5598 = vmatmul.mubr.bf16.gmra.mrb[0].mxu0 %v4935
    %v5599 = vpop.f32.mrb[0].mxu0
    %v5600 = vadd.f32 %v5560, %v5599
    %v5601 = vpop.f32.mrb[0].mxu0
    %v5602 = vpop.f32.mrb[0].mxu0
    %v5603 = vpop.f32.mrb[0].mxu0
    %5604 = vdwg.mxu0
    %5605 = vmatprep.subr.bf16.mxu0 0
    %5606 = vmatpush1.bf16.msra.mxu0 %v5413
    %5607 = vmatprep.subr.bf16.mxu0 0
    %5608 = vmatpush1.bf16.msra.mxu0 %v5414
    %5609 = vmatprep.subr.bf16.mxu0 0
    %5610 = vmatpush1.bf16.msra.mxu0 %v5415
    %5611 = vmatprep.subr.bf16.mxu0 0
    %5612 = vmatpush1.bf16.msra.mxu0 %v5416
    %5613 = vmatprep.subr.bf16.mxu0 0
    %5614 = vmatpush1.bf16.msra.mxu0 %v5417
    %5615 = vmatprep.subr.bf16.mxu0 0
    %5616 = vmatpush1.bf16.msra.mxu0 %v5418
    %5617 = vmatprep.subr.bf16.mxu0 0
    %5618 = vmatpush1.bf16.msra.mxu0 %v5419
    %5619 = vmatprep.subr.bf16.mxu0 0
    %5620 = vmatpush1.bf16.msra.mxu0 %v5420
    %5621 = vmatprep.subr.bf16.mxu0 0
    %5622 = vmatpush1.bf16.msra.mxu0 %v5421
    %5623 = vmatprep.subr.bf16.mxu0 0
    %5624 = vmatpush1.bf16.msra.mxu0 %v5422
    %5625 = vmatprep.subr.bf16.mxu0 0
    %5626 = vmatpush1.bf16.msra.mxu0 %v5423
    %5627 = vmatprep.subr.bf16.mxu0 0
    %5628 = vmatpush1.bf16.msra.mxu0 %v5424
    %5629 = vmatprep.subr.bf16.mxu0 0
    %5630 = vmatpush1.bf16.msra.mxu0 %v5425
    %5631 = vmatprep.subr.bf16.mxu0 0
    %5632 = vmatpush1.bf16.msra.mxu0 %v5426
    %5633 = vmatprep.subr.bf16.mxu0 0
    %5634 = vmatpush1.bf16.msra.mxu0 %v5427
    %5635 = vmatprep.subr.bf16.mxu0 0
    %5636 = vmatpush1.bf16.msra.mxu0 %v5428
    %5637 = vmatprep.mubr.bf16.mxu0 %v4938
    %5638 = vmatmul.mubr.bf16.gmra.mrb[0].mxu0 %v4937
    %v5639 = vpop.f32.mrb[0].mxu0
    %v5640 = vadd.f32 %v5600, %v5639
    %v5641 = vpop.f32.mrb[0].mxu0
    %v5642 = vpop.f32.mrb[0].mxu0
    %v5643 = vpop.f32.mrb[0].mxu0
    %5644 = vdwg.mxu0
    %5645 = vmatprep.subr.bf16.mxu0 0
    %5646 = vmatpush1.bf16.msra.mxu0 %v5429
    %5647 = vmatprep.subr.bf16.mxu0 0
    %5648 = vmatpush1.bf16.msra.mxu0 %v5430
    %5649 = vmatprep.subr.bf16.mxu0 0
    %5650 = vmatpush1.bf16.msra.mxu0 %v5431
    %5651 = vmatprep.subr.bf16.mxu0 0
    %5652 = vmatpush1.bf16.msra.mxu0 %v5432
    %5653 = vmatprep.subr.bf16.mxu0 0
    %5654 = vmatpush1.bf16.msra.mxu0 %v5433
    %5655 = vmatprep.subr.bf16.mxu0 0
    %5656 = vmatpush1.bf16.msra.mxu0 %v5434
    %5657 = vmatprep.subr.bf16.mxu0 0
    %5658 = vmatpush1.bf16.msra.mxu0 %v5435
    %5659 = vmatprep.subr.bf16.mxu0 0
    %5660 = vmatpush1.bf16.msra.mxu0 %v5436
    %5661 = vmatprep.subr.bf16.mxu0 0
    %5662 = vmatpush1.bf16.msra.mxu0 %v5437
    %5663 = vmatprep.subr.bf16.mxu0 0
    %5664 = vmatpush1.bf16.msra.mxu0 %v5438
    %5665 = vmatprep.subr.bf16.mxu0 0
    %5666 = vmatpush1.bf16.msra.mxu0 %v5439
    %5667 = vmatprep.subr.bf16.mxu0 0
    %5668 = vmatpush1.bf16.msra.mxu0 %v5440
    %5669 = vmatprep.subr.bf16.mxu0 0
    %5670 = vmatpush1.bf16.msra.mxu0 %v5441
    %5671 = vmatprep.subr.bf16.mxu0 0
    %5672 = vmatpush1.bf16.msra.mxu0 %v5442
    %5673 = vmatprep.subr.bf16.mxu0 0
    %5674 = vmatpush1.bf16.msra.mxu0 %v5443
    %5675 = vmatprep.subr.bf16.mxu0 0
    %5676 = vmatpush1.bf16.msra.mxu0 %v5444
    %5677 = vmatprep.mubr.bf16.mxu0 %v4940
    %5678 = vmatmul.mubr.bf16.gmra.mrb[0].mxu0 %v4939
    %v5679 = vpop.f32.mrb[0].mxu0
    %v5680 = vadd.f32 %v5640, %v5679
    %v5681 = vpop.f32.mrb[0].mxu0
    %v5682 = vpop.f32.mrb[0].mxu0
    %v5683 = vpop.f32.mrb[0].mxu0
    %5684 = vdwg.mxu0
    %5685 = vmatprep.subr.bf16.mxu0 0
    %5686 = vmatpush1.bf16.msra.mxu0 %v5445
    %5687 = vmatprep.subr.bf16.mxu0 0
    %5688 = vmatpush1.bf16.msra.mxu0 %v5446
    %5689 = vmatprep.subr.bf16.mxu0 0
    %5690 = vmatpush1.bf16.msra.mxu0 %v5447
    %5691 = vmatprep.subr.bf16.mxu0 0
    %5692 = vmatpush1.bf16.msra.mxu0 %v5448
    %5693 = vmatprep.subr.bf16.mxu0 0
    %5694 = vmatpush1.bf16.msra.mxu0 %v5449
    %5695 = vmatprep.subr.bf16.mxu0 0
    %5696 = vmatpush1.bf16.msra.mxu0 %v5450
    %5697 = vmatprep.subr.bf16.mxu0 0
    %5698 = vmatpush1.bf16.msra.mxu0 %v5451
    %5699 = vmatprep.subr.bf16.mxu0 0
    %5700 = vmatpush1.bf16.msra.mxu0 %v5452
    %5701 = vmatprep.subr.bf16.mxu0 0
    %5702 = vmatpush1.bf16.msra.mxu0 0
    %5703 = vmatprep.subr.bf16.mxu0 0
    %5704 = vmatpush1.bf16.msra.mxu0 0
    %5705 = vmatprep.subr.bf16.mxu0 0
    %5706 = vmatpush1.bf16.msra.mxu0 0
    %5707 = vmatprep.subr.bf16.mxu0 0
    %5708 = vmatpush1.bf16.msra.mxu0 0
    %5709 = vmatprep.subr.bf16.mxu0 0
    %5710 = vmatpush1.bf16.msra.mxu0 0
    %5711 = vmatprep.subr.bf16.mxu0 0
    %5712 = vmatpush1.bf16.msra.mxu0 0
    %5713 = vmatprep.subr.bf16.mxu0 0
    %5714 = vmatpush1.bf16.msra.mxu0 0
    %5715 = vmatprep.subr.bf16.mxu0 0
    %5716 = vmatpush1.bf16.msra.mxu0 0
    %5717 = vmatprep.mubr.bf16.mxu0 0
    %5718 = vmatmul.mubr.bf16.gmra.mrb[0].mxu0 %v4941
    %v5719 = vpop.f32.mrb[0].mxu0
    %v5720 = vadd.f32 %v5680, %v5719
    %v5721 = vpop.f32.mrb[0].mxu0
    %v5722 = vpop.f32.mrb[0].mxu0
    %v5723 = vpop.f32.mrb[0].mxu0
    %5724 = vdwg.mxu0
    %5725 = vst [vmem:[#allocation15] sm:$0x3] %v5720
    // Predicated region
    $region102: #{tpu_custom_call.1} parent=1 // pred_check
      _
    $region103: #{tpu_custom_call.1} parent=1 // pred_check_branch
      %5727 = sbr.rel (0) target = $region105
    $region104: #{tpu_custom_call.1} parent=1 // pred_region
      %s5729 = ssub.s32 32, 32
      %5730 = vsyncadd [#allocation5], %s5729
      %s5732 = sshll.u32 [#allocation15], 4
      %s5733 = int_to_ptr.vmem [resolvable:$true] %s5732
      %5735 = dma.vmem_to_hbm [thread:$0]  %s5733, 32, %s18, [#allocation5]
    $region105: #{tpu_custom_call.1} parent=1 // pred_fallthru
      _
    // Predicated region
    $region106: #{tpu_custom_call.1} parent=1 // pred_check
      _
    $region107: #{tpu_custom_call.1} parent=1 // pred_check_branch
      %5737 = sbr.rel (0) target = $region109
    $region108: #{tpu_custom_call.1} parent=1 // pred_region
      %s5739 = ssub.s32 32, 32
      %5740 = vsyncadd [#allocation17], %s5739
      %s5742 = sshll.u32 [#allocation16], 4
      %s5743 = int_to_ptr.vmem [resolvable:$true] %s5742
      %5745 = dma.vmem_to_hbm [thread:$0]  %s5743, 32, %s19, [#allocation17]
    $region109: #{tpu_custom_call.1} parent=1 // pred_fallthru
      _
    // Predicated region
    $region110: #{tpu_custom_call.1} parent=1 // pred_check
      _
    $region111: #{tpu_custom_call.1} parent=1 // pred_check_branch
      %5747 = sbr.rel (0) target = $region113
    $region112: #{tpu_custom_call.1} parent=1 // pred_region
      %s5749 = ssub.s32 1024, 1024
      %5750 = vsyncadd [#allocation17], %s5749
      %s5751 = sshll.u32 [#allocation18], 4
      %s5752 = int_to_ptr.vmem [resolvable:$true] %s5751
      %5757 = dma.vmem_to_hbm [thread:$0]  %s5752, 1024, %s20, [#allocation17], 64, 64, 4
    $region113: #{tpu_custom_call.1} parent=1 // pred_fallthru
      _
    // Predicated region
    $region114: #{tpu_custom_call.1} parent=1 // pred_check
      _
    $region115: #{tpu_custom_call.1} parent=1 // pred_check_branch
      %5759 = sbr.rel (0) target = $region117
    $region116: #{tpu_custom_call.1} parent=1 // pred_region
      %5760 = dma.done [#allocation5], 32
    $region117: #{tpu_custom_call.1} parent=1 // pred_fallthru
      _
    // Predicated region
    $region118: #{tpu_custom_call.1} parent=1 // pred_check
      _
    $region119: #{tpu_custom_call.1} parent=1 // pred_check_branch
      %5762 = sbr.rel (0) target = $region121
    $region120: #{tpu_custom_call.1} parent=1 // pred_region
      %5763 = dma.done [#allocation17], 32
    $region121: #{tpu_custom_call.1} parent=1 // pred_fallthru
      _
    // Predicated region
    $region122: #{tpu_custom_call.1} parent=1 // pred_check
      _
    $region123: #{tpu_custom_call.1} parent=1 // pred_check_branch
      %5765 = sbr.rel (0) target = $region125
    $region124: #{tpu_custom_call.1} parent=1 // pred_region
      %5766 = dma.done [#allocation17], 1024
    $region125: #{tpu_custom_call.1} parent=1 // pred_fallthru
      _
    %5767 = vsyncpa [#allocation4], 1
    %5768 = vsyncpa [#allocation7], 1
    %5769 = vsyncpa [#allocation10], 1
    %5770 = vsyncpa [#allocation13], 1
    %5771 = vsyncpa [#allocation5], 1
    %5772 = vsyncpa [#allocation17], 1

</llo_original>
